<compile_context>
chip_gen: v7x
topology: tpu7x:2x2x1
jax: 0.10.0
libtpu: 0.0.40
codegen_flags: <defaults>
</compile_context>

<pallas_src>
from functools import partial

import jax
import jax.numpy as jnp
from jax.experimental import pallas as pl
from jax.experimental.pallas import tpu as pltpu

COMPUTE_DTYPE = jnp.bfloat16
LANES = 128


def _round_up(x, m):
    return (x + m - 1) // m * m


# --------------------------------------------------------------------------
# Pallas kernel: slab-copy im2col into VMEM scratch + one MXU matmul
#                (BN scale folded into weights) + shift (+ residual) (+ ReLU)
# --------------------------------------------------------------------------
def _conv_bn_kernel(x_ref, w_ref, shift_ref, *rest, kh, kw, ho, wo, relu,
                    add_residual):
    if add_residual:
        res_ref, o_ref, p_ref = rest
    else:
        o_ref, p_ref = rest

    cin = x_ref.shape[3]
    m = ho * wo
    k_dim = kh * kw * cin

    # im2col fill: at most kh*kw (=9) slab copies, each (ho, wo, cin).
    for ki in range(kh):
        for kj in range(kw):
            c0 = (ki * kw + kj) * cin
            p_ref[:, :, c0:c0 + cin] = x_ref[0, ki:ki + ho, kj:kj + wo, :]

    # Single matmul over K = kh*kw*cin (BN scale already folded into weights);
    # f32 accumulation on the MXU.  Leading-dim merge keeps the lane dim.
    patches = p_ref[...].reshape(m, k_dim)
    acc = jnp.dot(patches, w_ref[...], preferred_element_type=jnp.float32)
    y = acc + shift_ref[...]                               # BN shift (1, cout_pad)

    if add_residual:
        r = res_ref[0].astype(jnp.float32)                 # (m, c_res)
        c_res = r.shape[-1]
        cout_pad = y.shape[-1]
        if c_res == cout_pad:
            y = y + r
            if relu:
                y = jnp.maximum(y, 0.0)
            o_ref[0] = y.astype(o_ref.dtype)
        else:
            # Unpadded residual (no HBM pad pass): full store of the conv-only
            # value (pad lanes are zero and sliced off outside), then overwrite
            # the first c_res lanes with the residual-added result.
            y_pad = jnp.maximum(y, 0.0) if relu else y
            o_ref[0] = y_pad.astype(o_ref.dtype)
            y_lo = y[:, :c_res] + r
            if relu:
                y_lo = jnp.maximum(y_lo, 0.0)
            o_ref[0, :, :c_res] = y_lo.astype(o_ref.dtype)
    else:
        if relu:
            y = jnp.maximum(y, 0.0)
        o_ref[0] = y.astype(o_ref.dtype)


def _conv_bn_pallas(xe, wmat, shift, residual, *, kh, kw, ho, wo, relu,
                    out_dtype):
    n, he, we, cin = xe.shape
    k_dim, cout_pad = wmat.shape
    assert k_dim == kh * kw * cin
    assert he == ho + kh - 1 and we == wo + kw - 1
    m = ho * wo

    in_specs = [
        pl.BlockSpec((1, he, we, cin), lambda i: (i, 0, 0, 0)),
        # Constant block index -> folded weight / shift fetched once and kept
        # VMEM-resident across the whole batch grid.
        pl.BlockSpec((k_dim, cout_pad), lambda i: (0, 0)),
        pl.BlockSpec((1, cout_pad), lambda i: (0, 0)),
    ]
    args = [xe, wmat, shift]

    out_bytes = n * m * cout_pad * jnp.dtype(out_dtype).itemsize
    bytes_accessed = (xe.size * xe.dtype.itemsize
                      + wmat.size * wmat.dtype.itemsize
                      + shift.size * shift.dtype.itemsize
                      + out_bytes)
    if residual is not None:
        c_res = residual.shape[-1]
        in_specs.append(pl.BlockSpec((1, m, c_res), lambda i: (i, 0, 0)))
        args.append(residual)
        bytes_accessed += residual.size * residual.dtype.itemsize

    # Per-step VMEM footprint (double-buffered blocks + resident weights +
    # scratch); the limit is derived from it and capped at 64 MiB (v7x-safe).
    itm_x = jnp.dtype(xe.dtype).itemsize
    vmem_need = (2 * he * we * cin * itm_x
                 + 2 * k_dim * cout_pad * jnp.dtype(wmat.dtype).itemsize
                 + 2 * cout_pad * 4
                 + 2 * m * cout_pad * jnp.dtype(out_dtype).itemsize
                 + m * k_dim * itm_x)
    if residual is not None:
        vmem_need += 2 * m * residual.shape[-1] * residual.dtype.itemsize
    vmem_limit = int(min(64 * 1024 * 1024,
                         max(2 * vmem_need + (4 << 20), 32 * 1024 * 1024)))

    kernel = partial(_conv_bn_kernel, kh=kh, kw=kw, ho=ho, wo=wo, relu=relu,
                     add_residual=residual is not None)
    return pl.pallas_call(
        kernel,
        out_shape=jax.ShapeDtypeStruct((n, m, cout_pad), out_dtype),
        grid=(n,),
        in_specs=in_specs,
        out_specs=pl.BlockSpec((1, m, cout_pad), lambda i: (i, 0, 0)),
        scratch_shapes=[pltpu.VMEM((ho, wo, k_dim), xe.dtype)],
        compiler_params=pltpu.CompilerParams(
            dimension_semantics=("parallel",),
            vmem_limit_bytes=vmem_limit,
        ),
        cost_estimate=pl.CostEstimate(
            flops=2 * n * m * k_dim * cout_pad,
            transcendentals=0,
            bytes_accessed=int(bytes_accessed),
        ),
    )(*args)


# --------------------------------------------------------------------------
# Parameter folding / input layout transforms (plain JAX glue)
# --------------------------------------------------------------------------
def _prepare_conv_bn(w_hwio, scale, shift, *, stride, padding, cin_store,
                     cdtype=COMPUTE_DTYPE):
    """Fold BN scale into the conv weight, remap for space-to-depth stride
    handling, pad cout to a multiple of 128 and reshape to (K, cout_pad)."""
    kh, kw, cin, cout = w_hwio.shape
    if cin_store > cin:  # the stored input tensor carries zero-padded channels
        w_hwio = jnp.pad(w_hwio, ((0, 0), (0, 0), (0, cin_store - cin), (0, 0)))
        cin = cin_store
    s = stride
    kh_e, kw_e = -(-kh // s), -(-kw // s)
    if s == 1:
        w_eff = w_hwio
        cin_e = cin
    else:
        cin_e = s * s * cin
        w_eff = jnp.zeros((kh_e, kw_e, cin_e, cout), w_hwio.dtype)
        for ki in range(kh):
            a, p = divmod(ki, s)
            for kj in range(kw):
                b, q = divmod(kj, s)
                c0 = (p * s + q) * cin
                w_eff = w_eff.at[a, b, c0:c0 + cin, :].set(w_hwio[ki, kj])
    w_eff = w_eff * scale[None, None, None, :]            # fold BN scale
    cout_pad = _round_up(cout, LANES)
    wmat = w_eff.reshape(kh_e * kw_e * cin_e, cout)
    wmat = jnp.pad(wmat, ((0, 0), (0, cout_pad - cout))).astype(cdtype)
    shift_pad = jnp.pad(shift, (0, cout_pad - cout)).reshape(1, cout_pad)
    return dict(wmat=wmat, shift=shift_pad.astype(jnp.float32),
                kh=kh, kw=kw, stride=s, padding=padding,
                kh_e=kh_e, kw_e=kw_e, cin_e=cin_e, cout=cout,
                cout_pad=cout_pad, cdtype=cdtype)


def _space_to_depth_input(x, *, stride, padding, kh_e, kw_e, ho, wo, cdtype):
    """Spatially pad and (for stride>1) space-to-depth the NHWC input so the
    kernel always sees a stride-1 conv with dense static slices."""
    n, h, w_, c = x.shape
    s = stride
    he, we = ho + kh_e - 1, wo + kw_e - 1
    need_h, need_w = s * he, s * we
    pad_h_hi = max(0, need_h - h - padding)
    pad_w_hi = max(0, need_w - w_ - padding)
    xp = jnp.pad(x, ((0, 0), (padding, pad_h_hi), (padding, pad_w_hi), (0, 0)))
    xp = xp[:, :need_h, :need_w, :]
    if s > 1:
        xp = xp.reshape(n, he, s, we, s, c)
        xp = xp.transpose(0, 1, 3, 2, 4, 5).reshape(n, he, we, s * s * c)
    return xp.astype(cdtype)


def conv2d_bn(x_nhwc, prep, *, relu, residual=None, out_dtype=None):
    """x: (N,H,W,Cin_store) NHWC.  Returns flat (N, Ho*Wo, cout_pad) plus
    (Ho, Wo); the channel axis is zero-padded to a multiple of 128."""
    n, h, w_, _ = x_nhwc.shape
    kh, kw, s, pad = prep["kh"], prep["kw"], prep["stride"], prep["padding"]
    ho = (h + 2 * pad - kh) // s + 1
    wo = (w_ + 2 * pad - kw) // s + 1
    xe = _space_to_depth_input(x_nhwc, stride=s, padding=pad,
                               kh_e=prep["kh_e"], kw_e=prep["kw_e"],
                               ho=ho, wo=wo, cdtype=prep["cdtype"])
    out_dtype = prep["cdtype"] if out_dtype is None else out_dtype
    out_flat = _conv_bn_pallas(xe, prep["wmat"], prep["shift"], residual,
                               kh=prep["kh_e"], kw=prep["kw_e"], ho=ho, wo=wo,
                               relu=relu, out_dtype=out_dtype)
    return out_flat, (ho, wo)


# --------------------------------------------------------------------------
# BasicBlock with deterministic synthetic parameters
# --------------------------------------------------------------------------
class BasicBlockPallas:
    expansion = 1
    eps = 1e-5

    def __init__(self, in_channels, out_channels, stride=1, key=None,
                 compute_dtype=COMPUTE_DTYPE):
        if key is None:
            key = jax.random.PRNGKey(0)
        ks = jax.random.split(key, 12)
        self.stride = stride
        self.in_channels = in_channels
        self.out_channels = out_channels
        self.cdtype = compute_dtype
        self.cout_pad = _round_up(out_channels, LANES)

        def bn_params(k0, k1, k2, k3, c):
            gamma = 1.0 + 0.1 * jax.random.normal(k0, (c,), jnp.float32)
            beta = 0.1 * jax.random.normal(k1, (c,), jnp.float32)
            mean = 0.1 * jax.random.normal(k2, (c,), jnp.float32)
            var = jnp.abs(jax.random.normal(k3, (c,), jnp.float32)) + 0.5
            scale = gamma / jnp.sqrt(var + self.eps)
            shift = beta - mean * scale
            return scale, shift

        # raw f32 parameters (HWIO conv weights), also used by the reference
        self.w1 = 0.1 * jax.random.normal(ks[0], (3, 3, in_channels, out_channels), jnp.float32)
        self.bn1_scale, self.bn1_shift = bn_params(ks[1], ks[2], ks[3], ks[4], out_channels)
        self.w2 = 0.1 * jax.random.normal(ks[5], (3, 3, out_channels, out_channels), jnp.float32)
        self.bn2_scale, self.bn2_shift = bn_params(ks[6], ks[7], ks[8], ks[9], out_channels)

        self.has_downsample = (stride != 1) or (in_channels != out_channels)
        if self.has_downsample:
            self.wd = 0.1 * jax.random.normal(ks[10], (1, 1, in_channels, out_channels), jnp.float32)
            kd = jax.random.split(ks[11], 4)
            self.bnd_scale, self.bnd_shift = bn_params(kd[0], kd[1], kd[2], kd[3], out_channels)

        # prepacked (BN-folded, stride-remapped, cout-padded, bf16) kernel params
        self.p1 = _prepare_conv_bn(self.w1, self.bn1_scale, self.bn1_shift,
                                   stride=stride, padding=1,
                                   cin_store=in_channels, cdtype=compute_dtype)
        self.p2 = _prepare_conv_bn(self.w2, self.bn2_scale, self.bn2_shift,
                                   stride=1, padding=1,
                                   cin_store=self.cout_pad, cdtype=compute_dtype)
        if self.has_downsample:
            self.pd = _prepare_conv_bn(self.wd, self.bnd_scale, self.bnd_shift,
                                       stride=stride, padding=0,
                                       cin_store=in_channels, cdtype=compute_dtype)

    def __call__(self, x_nchw):
        x = jnp.transpose(x_nchw, (0, 2, 3, 1))            # NCHW -> NHWC
        n = x.shape[0]

        out1_flat, (ho, wo) = conv2d_bn(x, self.p1, relu=True)   # (N, m, cout_pad) bf16
        out1 = out1_flat.reshape(n, ho, wo, self.cout_pad)

        if self.has_downsample:
            # flat bf16 kernel output feeds conv2's residual input directly
            residual, _ = conv2d_bn(x, self.pd, relu=False)
        else:
            # unpadded identity (original dtype); added in-kernel to the first
            # C_real output lanes (no HBM pad / cast pass)
            residual = x.reshape(n, ho * wo, self.out_channels)

        out2_flat, _ = conv2d_bn(out1, self.p2, relu=True, residual=residual)
        out = out2_flat.reshape(n, ho, wo, self.cout_pad)[..., :self.out_channels]
        out = out.astype(x_nchw.dtype)                     # fuses with transpose below
        return jnp.transpose(out, (0, 3, 1, 2))            # NHWC -> NCHW


# --------------------------------------------------------------------------
# Pure-JAX reference (for correctness check)
# --------------------------------------------------------------------------
def _ref_conv(x_nhwc, w_hwio, stride, padding):
    return jax.lax.conv_general_dilated(
        x_nhwc, w_hwio, window_strides=(stride, stride),
        padding=((padding, padding), (padding, padding)),
        dimension_numbers=("NHWC", "HWIO", "NHWC"),
        precision=jax.lax.Precision.HIGHEST)


def _reference_forward(block, x_nchw):
    x = jnp.transpose(x_nchw, (0, 2, 3, 1))
    if block.has_downsample:
        identity = _ref_conv(x, block.wd, block.stride, 0) * block.bnd_scale + block.bnd_shift
    else:
        identity = x
    out = _ref_conv(x, block.w1, block.stride, 1) * block.bn1_scale + block.bn1_shift
    out = jnp.maximum(out, 0.0)
    out = _ref_conv(out, block.w2, 1, 1) * block.bn2_scale + block.bn2_shift
    out = jnp.maximum(out + identity, 0.0)
    return jnp.transpose(out, (0, 3, 1, 2))


if __name__ == "__main__":
    key = jax.random.PRNGKey(0)
    k_x, k_p, k_p2 = jax.random.split(key, 3)

    # Test 1: downsample path (batch=2, 4 -> 8 channels, spatial=16, stride=2)
    x1 = jax.random.normal(k_x, (2, 4, 16, 16), jnp.float32)
    block1 = BasicBlockPallas(in_channels=4, out_channels=8, stride=2, key=k_p)
    y1 = jax.block_until_ready(jax.jit(block1)(x1))
    assert y1.shape == (2, 8, 8, 8), y1.shape
    y1_ref = jax.block_until_ready(_reference_forward(block1, x1))
    err1 = float(jnp.max(jnp.abs(y1 - y1_ref)))
    assert jnp.allclose(y1, y1_ref, atol=3e-2, rtol=3e-2), err1

    # Test 2: identity path (stride=1, same channels) — exercises the
    # unpadded-residual in-kernel add.
    x2 = jax.random.normal(k_x, (2, 8, 16, 16), jnp.float32)
    block2 = BasicBlockPallas(in_channels=8, out_channels=8, stride=1, key=k_p2)
    y2 = jax.block_until_ready(jax.jit(block2)(x2))
    assert y2.shape == (2, 8, 16, 16), y2.shape
    y2_ref = jax.block_until_ready(_reference_forward(block2, x2))
    err2 = float(jnp.max(jnp.abs(y2 - y2_ref)))
    assert jnp.allclose(y2, y2_ref, atol=3e-2, rtol=3e-2), err2

    print("KERNEL_OK")
</pallas_src>

<mosaic_0001>
module attributes {stable_mosaic.version = 11 : i64} {
  func.func @_conv_bn_kernel(%arg0: i32, %arg1: memref<1x8x8x16xbf16, #tpu.memory_space<vmem>>, %arg2: memref<16x128xbf16, #tpu.memory_space<vmem>>, %arg3: memref<1x128xf32, #tpu.memory_space<vmem>>, %arg4: memref<1x64x128xbf16, #tpu.memory_space<vmem>>, %arg5: memref<8x8x16xbf16, #tpu.memory_space<vmem>>) attributes {dimension_semantics = [#tpu.dimension_semantics<parallel>], iteration_bounds = array<i64: 2>, scalar_prefetch = 0 : i64, scratch_operands = 1 : i64, tpu.core_type = #tpu.core_type<tc>, window_params = [{transform_indices = @transform_0, window_bounds = array<i64: 1, 8, 8, 16>}, {pipeline_mode = #tpu.pipeline_mode<synchronous>, transform_indices = @transform_1, window_bounds = array<i64: 16, 128>}, {pipeline_mode = #tpu.pipeline_mode<synchronous>, transform_indices = @transform_2, window_bounds = array<i64: 1, 128>}, {transform_indices = @transform_3, window_bounds = array<i64: 1, 64, 128>}]} {
    %c0 = arith.constant 0 : index
    %c0_0 = arith.constant 0 : index
    %c0_1 = arith.constant 0 : index
    %c0_2 = arith.constant 0 : index
    %0 = vector.load %arg1[%c0, %c0_0, %c0_1, %c0_2] : memref<1x8x8x16xbf16, #tpu.memory_space<vmem>>, vector<1x8x8x16xbf16>
    %1 = vector.shape_cast %0 : vector<1x8x8x16xbf16> to vector<8x8x16xbf16>
    %c0_3 = arith.constant 0 : index
    %c0_4 = arith.constant 0 : index
    %c0_5 = arith.constant 0 : index
    %2 = vector.load %arg5[%c0_3, %c0_4, %c0_5] : memref<8x8x16xbf16, #tpu.memory_space<vmem>>, vector<8x8x16xbf16>
    tpu.vector_store %arg5[%c0_3, %c0_4, %c0_5], %1 {strides = array<i32>} : memref<8x8x16xbf16, #tpu.memory_space<vmem>>, vector<8x8x16xbf16>,
    %c0_6 = arith.constant 0 : index
    %c0_7 = arith.constant 0 : index
    %c0_8 = arith.constant 0 : index
    %3 = vector.load %arg5[%c0_6, %c0_7, %c0_8] : memref<8x8x16xbf16, #tpu.memory_space<vmem>>, vector<8x8x16xbf16>
    %4 = vector.shape_cast %3 : vector<8x8x16xbf16> to vector<64x16xbf16>
    %c0_9 = arith.constant 0 : index
    %c0_10 = arith.constant 0 : index
    %5 = vector.load %arg2[%c0_9, %c0_10] : memref<16x128xbf16, #tpu.memory_space<vmem>>, vector<16x128xbf16>
    %cst = arith.constant dense<0.000000e+00> : vector<64x128xf32>
    %6 = tpu.matmul %4, %5, %cst {dimension_numbers = #tpu.dot_dimension_numbers<[1], [0], [0], [1], [0, 0, 1, 1], [], []>} : vector<64x16xbf16>, vector<16x128xbf16>, vector<64x128xf32> -> vector<64x128xf32>
    %c0_11 = arith.constant 0 : index
    %c0_12 = arith.constant 0 : index
    %7 = vector.load %arg3[%c0_11, %c0_12] : memref<1x128xf32, #tpu.memory_space<vmem>>, vector<1x128xf32>
    %8 = vector.broadcast %7 : vector<1x128xf32> to vector<64x128xf32>
    %9 = arith.addf %6, %8 : vector<64x128xf32>
    %10 = arith.truncf %9 : vector<64x128xf32> to vector<64x128xbf16>
    %c0_13 = arith.constant 0 : index
    %c0_14 = arith.constant 0 : index
    %c0_15 = arith.constant 0 : index
    %11 = vector.load %arg4[%c0_13, %c0_14, %c0_15] : memref<1x64x128xbf16, #tpu.memory_space<vmem>>, vector<1x64x128xbf16>
    %12 = vector.shape_cast %11 : vector<1x64x128xbf16> to vector<64x128xbf16>
    %13 = vector.shape_cast %10 : vector<64x128xbf16> to vector<1x64x128xbf16>
    tpu.vector_store %arg4[%c0_13, %c0_14, %c0_15], %13 {strides = array<i32>} : memref<1x64x128xbf16, #tpu.memory_space<vmem>>, vector<1x64x128xbf16>,
    return
  }
  func.func @transform_0(%arg0: i32) -> (i32, i32, i32, i32) {
    %c0_i32 = arith.constant 0 : i32
    %c0_i32_0 = arith.constant 0 : i32
    %c0_i32_1 = arith.constant 0 : i32
    %c0_i32_2 = arith.constant 0 : i32
    return %arg0, %c0_i32, %c0_i32_0, %c0_i32_1 : i32, i32, i32, i32
  }
  func.func @transform_1(%arg0: i32) -> (i32, i32) {
    %c0_i32 = arith.constant 0 : i32
    %c0_i32_0 = arith.constant 0 : i32
    %c0_i32_1 = arith.constant 0 : i32
    return %c0_i32, %c0_i32_0 : i32, i32
  }
  func.func @transform_2(%arg0: i32) -> (i32, i32) {
    %c0_i32 = arith.constant 0 : i32
    %c0_i32_0 = arith.constant 0 : i32
    %c0_i32_1 = arith.constant 0 : i32
    return %c0_i32, %c0_i32_0 : i32, i32
  }
  func.func @transform_3(%arg0: i32) -> (i32, i32, i32) {
    %c0_i32 = arith.constant 0 : i32
    %c0_i32_0 = arith.constant 0 : i32
    %c0_i32_1 = arith.constant 0 : i32
    return %arg0, %c0_i32, %c0_i32_0 : i32, i32, i32
  }
}

module attributes {stable_mosaic.version = 11 : i64} {
  func.func @_conv_bn_kernel(%arg0: i32, %arg1: memref<1x9x9x16xbf16, #tpu.memory_space<vmem>>, %arg2: memref<64x128xbf16, #tpu.memory_space<vmem>>, %arg3: memref<1x128xf32, #tpu.memory_space<vmem>>, %arg4: memref<1x64x128xbf16, #tpu.memory_space<vmem>>, %arg5: memref<8x8x64xbf16, #tpu.memory_space<vmem>>) attributes {dimension_semantics = [#tpu.dimension_semantics<parallel>], iteration_bounds = array<i64: 2>, scalar_prefetch = 0 : i64, scratch_operands = 1 : i64, tpu.core_type = #tpu.core_type<tc>, window_params = [{transform_indices = @transform_0, window_bounds = array<i64: 1, 9, 9, 16>}, {pipeline_mode = #tpu.pipeline_mode<synchronous>, transform_indices = @transform_1, window_bounds = array<i64: 64, 128>}, {pipeline_mode = #tpu.pipeline_mode<synchronous>, transform_indices = @transform_2, window_bounds = array<i64: 1, 128>}, {transform_indices = @transform_3, window_bounds = array<i64: 1, 64, 128>}]} {
    %c0 = arith.constant 0 : index
    %c0_0 = arith.constant 0 : index
    %c0_1 = arith.constant 0 : index
    %c0_2 = arith.constant 0 : index
    %0 = vector.load %arg1[%c0, %c0_0, %c0_1, %c0_2] : memref<1x9x9x16xbf16, #tpu.memory_space<vmem>>, vector<1x8x8x16xbf16>
    %1 = vector.shape_cast %0 : vector<1x8x8x16xbf16> to vector<8x8x16xbf16>
    %c0_3 = arith.constant 0 : index
    %c0_4 = arith.constant 0 : index
    %c0_5 = arith.constant 0 : index
    %2 = vector.load %arg5[%c0_3, %c0_4, %c0_5] : memref<8x8x64xbf16, #tpu.memory_space<vmem>>, vector<8x8x16xbf16>
    tpu.vector_store %arg5[%c0_3, %c0_4, %c0_5], %1 {strides = array<i32>} : memref<8x8x64xbf16, #tpu.memory_space<vmem>>, vector<8x8x16xbf16>,
    %c0_6 = arith.constant 0 : index
    %c0_7 = arith.constant 0 : index
    %c1 = arith.constant 1 : index
    %c0_8 = arith.constant 0 : index
    %3 = vector.load %arg1[%c0_6, %c0_7, %c1, %c0_8] : memref<1x9x9x16xbf16, #tpu.memory_space<vmem>>, vector<1x8x8x16xbf16>
    %4 = vector.shape_cast %3 : vector<1x8x8x16xbf16> to vector<8x8x16xbf16>
    %c0_9 = arith.constant 0 : index
    %c0_10 = arith.constant 0 : index
    %c16 = arith.constant 16 : index
    %5 = vector.load %arg5[%c0_9, %c0_10, %c16] : memref<8x8x64xbf16, #tpu.memory_space<vmem>>, vector<8x8x16xbf16>
    tpu.vector_store %arg5[%c0_9, %c0_10, %c16], %4 {strides = array<i32>} : memref<8x8x64xbf16, #tpu.memory_space<vmem>>, vector<8x8x16xbf16>,
    %c0_11 = arith.constant 0 : index
    %c1_12 = arith.constant 1 : index
    %c0_13 = arith.constant 0 : index
    %c0_14 = arith.constant 0 : index
    %6 = vector.load %arg1[%c0_11, %c1_12, %c0_13, %c0_14] : memref<1x9x9x16xbf16, #tpu.memory_space<vmem>>, vector<1x8x8x16xbf16>
    %7 = vector.shape_cast %6 : vector<1x8x8x16xbf16> to vector<8x8x16xbf16>
    %c0_15 = arith.constant 0 : index
    %c0_16 = arith.constant 0 : index
    %c32 = arith.constant 32 : index
    %8 = vector.load %arg5[%c0_15, %c0_16, %c32] : memref<8x8x64xbf16, #tpu.memory_space<vmem>>, vector<8x8x16xbf16>
    tpu.vector_store %arg5[%c0_15, %c0_16, %c32], %7 {strides = array<i32>} : memref<8x8x64xbf16, #tpu.memory_space<vmem>>, vector<8x8x16xbf16>,
    %c0_17 = arith.constant 0 : index
    %c1_18 = arith.constant 1 : index
    %c1_19 = arith.constant 1 : index
    %c0_20 = arith.constant 0 : index
    %9 = vector.load %arg1[%c0_17, %c1_18, %c1_19, %c0_20] : memref<1x9x9x16xbf16, #tpu.memory_space<vmem>>, vector<1x8x8x16xbf16>
    %10 = vector.shape_cast %9 : vector<1x8x8x16xbf16> to vector<8x8x16xbf16>
    %c0_21 = arith.constant 0 : index
    %c0_22 = arith.constant 0 : index
    %c48 = arith.constant 48 : index
    %11 = vector.load %arg5[%c0_21, %c0_22, %c48] : memref<8x8x64xbf16, #tpu.memory_space<vmem>>, vector<8x8x16xbf16>
    tpu.vector_store %arg5[%c0_21, %c0_22, %c48], %10 {strides = array<i32>} : memref<8x8x64xbf16, #tpu.memory_space<vmem>>, vector<8x8x16xbf16>,
    %c0_23 = arith.constant 0 : index
    %c0_24 = arith.constant 0 : index
    %c0_25 = arith.constant 0 : index
    %12 = vector.load %arg5[%c0_23, %c0_24, %c0_25] : memref<8x8x64xbf16, #tpu.memory_space<vmem>>, vector<8x8x64xbf16>
    %13 = vector.shape_cast %12 : vector<8x8x64xbf16> to vector<64x64xbf16>
    %c0_26 = arith.constant 0 : index
    %c0_27 = arith.constant 0 : index
    %14 = vector.load %arg2[%c0_26, %c0_27] : memref<64x128xbf16, #tpu.memory_space<vmem>>, vector<64x128xbf16>
    %cst = arith.constant dense<0.000000e+00> : vector<64x128xf32>
    %15 = tpu.matmul %13, %14, %cst {dimension_numbers = #tpu.dot_dimension_numbers<[1], [0], [0], [1], [0, 0, 1, 1], [], []>} : vector<64x64xbf16>, vector<64x128xbf16>, vector<64x128xf32> -> vector<64x128xf32>
    %c0_28 = arith.constant 0 : index
    %c0_29 = arith.constant 0 : index
    %16 = vector.load %arg3[%c0_28, %c0_29] : memref<1x128xf32, #tpu.memory_space<vmem>>, vector<1x128xf32>
    %17 = vector.broadcast %16 : vector<1x128xf32> to vector<64x128xf32>
    %18 = arith.addf %15, %17 : vector<64x128xf32>
    %cst_30 = arith.constant 0.000000e+00 : f32
    %19 = vector.broadcast %cst_30 : f32 to vector<64x128xf32>
    %20 = arith.maximumf %18, %19 : vector<64x128xf32>
    %21 = arith.truncf %20 : vector<64x128xf32> to vector<64x128xbf16>
    %c0_31 = arith.constant 0 : index
    %c0_32 = arith.constant 0 : index
    %c0_33 = arith.constant 0 : index
    %22 = vector.load %arg4[%c0_31, %c0_32, %c0_33] : memref<1x64x128xbf16, #tpu.memory_space<vmem>>, vector<1x64x128xbf16>
    %23 = vector.shape_cast %22 : vector<1x64x128xbf16> to vector<64x128xbf16>
    %24 = vector.shape_cast %21 : vector<64x128xbf16> to vector<1x64x128xbf16>
    tpu.vector_store %arg4[%c0_31, %c0_32, %c0_33], %24 {strides = array<i32>} : memref<1x64x128xbf16, #tpu.memory_space<vmem>>, vector<1x64x128xbf16>,
    return
  }
  func.func @transform_0(%arg0: i32) -> (i32, i32, i32, i32) {
    %c0_i32 = arith.constant 0 : i32
    %c0_i32_0 = arith.constant 0 : i32
    %c0_i32_1 = arith.constant 0 : i32
    %c0_i32_2 = arith.constant 0 : i32
    return %arg0, %c0_i32, %c0_i32_0, %c0_i32_1 : i32, i32, i32, i32
  }
  func.func @transform_1(%arg0: i32) -> (i32, i32) {
    %c0_i32 = arith.constant 0 : i32
    %c0_i32_0 = arith.constant 0 : i32
    %c0_i32_1 = arith.constant 0 : i32
    return %c0_i32, %c0_i32_0 : i32, i32
  }
  func.func @transform_2(%arg0: i32) -> (i32, i32) {
    %c0_i32 = arith.constant 0 : i32
    %c0_i32_0 = arith.constant 0 : i32
    %c0_i32_1 = arith.constant 0 : i32
    return %c0_i32, %c0_i32_0 : i32, i32
  }
  func.func @transform_3(%arg0: i32) -> (i32, i32, i32) {
    %c0_i32 = arith.constant 0 : i32
    %c0_i32_0 = arith.constant 0 : i32
    %c0_i32_1 = arith.constant 0 : i32
    return %arg0, %c0_i32, %c0_i32_0 : i32, i32, i32
  }
}

module attributes {stable_mosaic.version = 11 : i64} {
  func.func @_conv_bn_kernel(%arg0: i32, %arg1: memref<1x10x10x128xbf16, #tpu.memory_space<vmem>>, %arg2: memref<1152x128xbf16, #tpu.memory_space<vmem>>, %arg3: memref<1x128xf32, #tpu.memory_space<vmem>>, %arg4: memref<1x64x128xbf16, #tpu.memory_space<vmem>>, %arg5: memref<1x64x128xbf16, #tpu.memory_space<vmem>>, %arg6: memref<8x8x1152xbf16, #tpu.memory_space<vmem>>) attributes {dimension_semantics = [#tpu.dimension_semantics<parallel>], iteration_bounds = array<i64: 2>, scalar_prefetch = 0 : i64, scratch_operands = 1 : i64, tpu.core_type = #tpu.core_type<tc>, window_params = [{transform_indices = @transform_0, window_bounds = array<i64: 1, 10, 10, 128>}, {pipeline_mode = #tpu.pipeline_mode<synchronous>, transform_indices = @transform_1, window_bounds = array<i64: 1152, 128>}, {pipeline_mode = #tpu.pipeline_mode<synchronous>, transform_indices = @transform_2, window_bounds = array<i64: 1, 128>}, {transform_indices = @transform_3, window_bounds = array<i64: 1, 64, 128>}, {transform_indices = @transform_4, window_bounds = array<i64: 1, 64, 128>}]} {
    %c0 = arith.constant 0 : index
    %c0_0 = arith.constant 0 : index
    %c0_1 = arith.constant 0 : index
    %c0_2 = arith.constant 0 : index
    %0 = vector.load %arg1[%c0, %c0_0, %c0_1, %c0_2] : memref<1x10x10x128xbf16, #tpu.memory_space<vmem>>, vector<1x8x8x128xbf16>
    %1 = vector.shape_cast %0 : vector<1x8x8x128xbf16> to vector<8x8x128xbf16>
    %c0_3 = arith.constant 0 : index
    %c0_4 = arith.constant 0 : index
    %c0_5 = arith.constant 0 : index
    %2 = vector.load %arg6[%c0_3, %c0_4, %c0_5] : memref<8x8x1152xbf16, #tpu.memory_space<vmem>>, vector<8x8x128xbf16>
    tpu.vector_store %arg6[%c0_3, %c0_4, %c0_5], %1 {strides = array<i32>} : memref<8x8x1152xbf16, #tpu.memory_space<vmem>>, vector<8x8x128xbf16>,
    %c0_6 = arith.constant 0 : index
    %c0_7 = arith.constant 0 : index
    %c1 = arith.constant 1 : index
    %c0_8 = arith.constant 0 : index
    %3 = vector.load %arg1[%c0_6, %c0_7, %c1, %c0_8] : memref<1x10x10x128xbf16, #tpu.memory_space<vmem>>, vector<1x8x8x128xbf16>
    %4 = vector.shape_cast %3 : vector<1x8x8x128xbf16> to vector<8x8x128xbf16>
    %c0_9 = arith.constant 0 : index
    %c0_10 = arith.constant 0 : index
    %c128 = arith.constant 128 : index
    %5 = vector.load %arg6[%c0_9, %c0_10, %c128] : memref<8x8x1152xbf16, #tpu.memory_space<vmem>>, vector<8x8x128xbf16>
    tpu.vector_store %arg6[%c0_9, %c0_10, %c128], %4 {strides = array<i32>} : memref<8x8x1152xbf16, #tpu.memory_space<vmem>>, vector<8x8x128xbf16>,
    %c0_11 = arith.constant 0 : index
    %c0_12 = arith.constant 0 : index
    %c2 = arith.constant 2 : index
    %c0_13 = arith.constant 0 : index
    %6 = vector.load %arg1[%c0_11, %c0_12, %c2, %c0_13] : memref<1x10x10x128xbf16, #tpu.memory_space<vmem>>, vector<1x8x8x128xbf16>
    %7 = vector.shape_cast %6 : vector<1x8x8x128xbf16> to vector<8x8x128xbf16>
    %c0_14 = arith.constant 0 : index
    %c0_15 = arith.constant 0 : index
    %c256 = arith.constant 256 : index
    %8 = vector.load %arg6[%c0_14, %c0_15, %c256] : memref<8x8x1152xbf16, #tpu.memory_space<vmem>>, vector<8x8x128xbf16>
    tpu.vector_store %arg6[%c0_14, %c0_15, %c256], %7 {strides = array<i32>} : memref<8x8x1152xbf16, #tpu.memory_space<vmem>>, vector<8x8x128xbf16>,
    %c0_16 = arith.constant 0 : index
    %c1_17 = arith.constant 1 : index
    %c0_18 = arith.constant 0 : index
    %c0_19 = arith.constant 0 : index
    %9 = vector.load %arg1[%c0_16, %c1_17, %c0_18, %c0_19] : memref<1x10x10x128xbf16, #tpu.memory_space<vmem>>, vector<1x8x8x128xbf16>
    %10 = vector.shape_cast %9 : vector<1x8x8x128xbf16> to vector<8x8x128xbf16>
    %c0_20 = arith.constant 0 : index
    %c0_21 = arith.constant 0 : index
    %c384 = arith.constant 384 : index
    %11 = vector.load %arg6[%c0_20, %c0_21, %c384] : memref<8x8x1152xbf16, #tpu.memory_space<vmem>>, vector<8x8x128xbf16>
    tpu.vector_store %arg6[%c0_20, %c0_21, %c384], %10 {strides = array<i32>} : memref<8x8x1152xbf16, #tpu.memory_space<vmem>>, vector<8x8x128xbf16>,
    %c0_22 = arith.constant 0 : index
    %c1_23 = arith.constant 1 : index
    %c1_24 = arith.constant 1 : index
    %c0_25 = arith.constant 0 : index
    %12 = vector.load %arg1[%c0_22, %c1_23, %c1_24, %c0_25] : memref<1x10x10x128xbf16, #tpu.memory_space<vmem>>, vector<1x8x8x128xbf16>
    %13 = vector.shape_cast %12 : vector<1x8x8x128xbf16> to vector<8x8x128xbf16>
    %c0_26 = arith.constant 0 : index
    %c0_27 = arith.constant 0 : index
    %c512 = arith.constant 512 : index
    %14 = vector.load %arg6[%c0_26, %c0_27, %c512] : memref<8x8x1152xbf16, #tpu.memory_space<vmem>>, vector<8x8x128xbf16>
    tpu.vector_store %arg6[%c0_26, %c0_27, %c512], %13 {strides = array<i32>} : memref<8x8x1152xbf16, #tpu.memory_space<vmem>>, vector<8x8x128xbf16>,
    %c0_28 = arith.constant 0 : index
    %c1_29 = arith.constant 1 : index
    %c2_30 = arith.constant 2 : index
    %c0_31 = arith.constant 0 : index
    %15 = vector.load %arg1[%c0_28, %c1_29, %c2_30, %c0_31] : memref<1x10x10x128xbf16, #tpu.memory_space<vmem>>, vector<1x8x8x128xbf16>
    %16 = vector.shape_cast %15 : vector<1x8x8x128xbf16> to vector<8x8x128xbf16>
    %c0_32 = arith.constant 0 : index
    %c0_33 = arith.constant 0 : index
    %c640 = arith.constant 640 : index
    %17 = vector.load %arg6[%c0_32, %c0_33, %c640] : memref<8x8x1152xbf16, #tpu.memory_space<vmem>>, vector<8x8x128xbf16>
    tpu.vector_store %arg6[%c0_32, %c0_33, %c640], %16 {strides = array<i32>} : memref<8x8x1152xbf16, #tpu.memory_space<vmem>>, vector<8x8x128xbf16>,
    %c0_34 = arith.constant 0 : index
    %c2_35 = arith.constant 2 : index
    %c0_36 = arith.constant 0 : index
    %c0_37 = arith.constant 0 : index
    %18 = vector.load %arg1[%c0_34, %c2_35, %c0_36, %c0_37] : memref<1x10x10x128xbf16, #tpu.memory_space<vmem>>, vector<1x8x8x128xbf16>
    %19 = vector.shape_cast %18 : vector<1x8x8x128xbf16> to vector<8x8x128xbf16>
    %c0_38 = arith.constant 0 : index
    %c0_39 = arith.constant 0 : index
    %c768 = arith.constant 768 : index
    %20 = vector.load %arg6[%c0_38, %c0_39, %c768] : memref<8x8x1152xbf16, #tpu.memory_space<vmem>>, vector<8x8x128xbf16>
    tpu.vector_store %arg6[%c0_38, %c0_39, %c768], %19 {strides = array<i32>} : memref<8x8x1152xbf16, #tpu.memory_space<vmem>>, vector<8x8x128xbf16>,
    %c0_40 = arith.constant 0 : index
    %c2_41 = arith.constant 2 : index
    %c1_42 = arith.constant 1 : index
    %c0_43 = arith.constant 0 : index
    %21 = vector.load %arg1[%c0_40, %c2_41, %c1_42, %c0_43] : memref<1x10x10x128xbf16, #tpu.memory_space<vmem>>, vector<1x8x8x128xbf16>
    %22 = vector.shape_cast %21 : vector<1x8x8x128xbf16> to vector<8x8x128xbf16>
    %c0_44 = arith.constant 0 : index
    %c0_45 = arith.constant 0 : index
    %c896 = arith.constant 896 : index
    %23 = vector.load %arg6[%c0_44, %c0_45, %c896] : memref<8x8x1152xbf16, #tpu.memory_space<vmem>>, vector<8x8x128xbf16>
    tpu.vector_store %arg6[%c0_44, %c0_45, %c896], %22 {strides = array<i32>} : memref<8x8x1152xbf16, #tpu.memory_space<vmem>>, vector<8x8x128xbf16>,
    %c0_46 = arith.constant 0 : index
    %c2_47 = arith.constant 2 : index
    %c2_48 = arith.constant 2 : index
    %c0_49 = arith.constant 0 : index
    %24 = vector.load %arg1[%c0_46, %c2_47, %c2_48, %c0_49] : memref<1x10x10x128xbf16, #tpu.memory_space<vmem>>, vector<1x8x8x128xbf16>
    %25 = vector.shape_cast %24 : vector<1x8x8x128xbf16> to vector<8x8x128xbf16>
    %c0_50 = arith.constant 0 : index
    %c0_51 = arith.constant 0 : index
    %c1024 = arith.constant 1024 : index
    %26 = vector.load %arg6[%c0_50, %c0_51, %c1024] : memref<8x8x1152xbf16, #tpu.memory_space<vmem>>, vector<8x8x128xbf16>
    tpu.vector_store %arg6[%c0_50, %c0_51, %c1024], %25 {strides = array<i32>} : memref<8x8x1152xbf16, #tpu.memory_space<vmem>>, vector<8x8x128xbf16>,
    %c0_52 = arith.constant 0 : index
    %c0_53 = arith.constant 0 : index
    %c0_54 = arith.constant 0 : index
    %27 = vector.load %arg6[%c0_52, %c0_53, %c0_54] : memref<8x8x1152xbf16, #tpu.memory_space<vmem>>, vector<8x8x1152xbf16>
    %28 = vector.shape_cast %27 : vector<8x8x1152xbf16> to vector<64x1152xbf16>
    %c0_55 = arith.constant 0 : index
    %c0_56 = arith.constant 0 : index
    %29 = vector.load %arg2[%c0_55, %c0_56] : memref<1152x128xbf16, #tpu.memory_space<vmem>>, vector<1152x128xbf16>
    %cst = arith.constant dense<0.000000e+00> : vector<64x128xf32>
    %30 = tpu.matmul %28, %29, %cst {dimension_numbers = #tpu.dot_dimension_numbers<[1], [0], [0], [1], [0, 0, 1, 1], [], []>} : vector<64x1152xbf16>, vector<1152x128xbf16>, vector<64x128xf32> -> vector<64x128xf32>
    %c0_57 = arith.constant 0 : index
    %c0_58 = arith.constant 0 : index
    %31 = vector.load %arg3[%c0_57, %c0_58] : memref<1x128xf32, #tpu.memory_space<vmem>>, vector<1x128xf32>
    %32 = vector.broadcast %31 : vector<1x128xf32> to vector<64x128xf32>
    %33 = arith.addf %30, %32 : vector<64x128xf32>
    %c0_59 = arith.constant 0 : index
    %c0_60 = arith.constant 0 : index
    %c0_61 = arith.constant 0 : index
    %34 = vector.load %arg4[%c0_59, %c0_60, %c0_61] : memref<1x64x128xbf16, #tpu.memory_space<vmem>>, vector<1x64x128xbf16>
    %35 = vector.shape_cast %34 : vector<1x64x128xbf16> to vector<64x128xbf16>
    %36 = arith.extf %35 : vector<64x128xbf16> to vector<64x128xf32>
    %37 = arith.addf %33, %36 : vector<64x128xf32>
    %cst_62 = arith.constant 0.000000e+00 : f32
    %38 = vector.broadcast %cst_62 : f32 to vector<64x128xf32>
    %39 = arith.maximumf %37, %38 : vector<64x128xf32>
    %40 = arith.truncf %39 : vector<64x128xf32> to vector<64x128xbf16>
    %c0_63 = arith.constant 0 : index
    %c0_64 = arith.constant 0 : index
    %c0_65 = arith.constant 0 : index
    %41 = vector.load %arg5[%c0_63, %c0_64, %c0_65] : memref<1x64x128xbf16, #tpu.memory_space<vmem>>, vector<1x64x128xbf16>
    %42 = vector.shape_cast %41 : vector<1x64x128xbf16> to vector<64x128xbf16>
    %43 = vector.shape_cast %40 : vector<64x128xbf16> to vector<1x64x128xbf16>
    tpu.vector_store %arg5[%c0_63, %c0_64, %c0_65], %43 {strides = array<i32>} : memref<1x64x128xbf16, #tpu.memory_space<vmem>>, vector<1x64x128xbf16>,
    return
  }
  func.func @transform_0(%arg0: i32) -> (i32, i32, i32, i32) {
    %c0_i32 = arith.constant 0 : i32
    %c0_i32_0 = arith.constant 0 : i32
    %c0_i32_1 = arith.constant 0 : i32
    %c0_i32_2 = arith.constant 0 : i32
    return %arg0, %c0_i32, %c0_i32_0, %c0_i32_1 : i32, i32, i32, i32
  }
  func.func @transform_1(%arg0: i32) -> (i32, i32) {
    %c0_i32 = arith.constant 0 : i32
    %c0_i32_0 = arith.constant 0 : i32
    %c0_i32_1 = arith.constant 0 : i32
    return %c0_i32, %c0_i32_0 : i32, i32
  }
  func.func @transform_2(%arg0: i32) -> (i32, i32) {
    %c0_i32 = arith.constant 0 : i32
    %c0_i32_0 = arith.constant 0 : i32
    %c0_i32_1 = arith.constant 0 : i32
    return %c0_i32, %c0_i32_0 : i32, i32
  }
  func.func @transform_3(%arg0: i32) -> (i32, i32, i32) {
    %c0_i32 = arith.constant 0 : i32
    %c0_i32_0 = arith.constant 0 : i32
    %c0_i32_1 = arith.constant 0 : i32
    return %arg0, %c0_i32, %c0_i32_0 : i32, i32, i32
  }
  func.func @transform_4(%arg0: i32) -> (i32, i32, i32) {
    %c0_i32 = arith.constant 0 : i32
    %c0_i32_0 = arith.constant 0 : i32
    %c0_i32_1 = arith.constant 0 : i32
    return %arg0, %c0_i32, %c0_i32_0 : i32, i32, i32
  }
}

</mosaic_0001>

<llo_original>
// kernel: _unnamed_function_.4
$region0: #{_unnamed_function_.4}
  #allocation0 [shape = 'u32[]', space=smem, size = 0x4, offset = 0x4, fixed_abs, tag = 'smem constant byte address 0x4 - core index']
  #allocation1 [shape = 'u32[144,128]{1,0:T(1,128)}', space=vmem, size = 0x12000, scoped, tag = 'internal scratch']
  #allocation2 [shape = 'bf16[8,8,16]{2,1,0:T(8,128)(2,1)}', space=vmem, size = 0x4000, scoped, tag = 'scratch operand']
  %s0 = inlined_call_operand.vmem [shape: bf16[2,8,8,16], index: 0, kind: input, shape index: {}]
  %s1 = inlined_call_operand.vmem [shape: bf16[16,128], index: 1, kind: input, shape index: {}]
  %s2 = inlined_call_operand.vmem [shape: f32[1,128], index: 2, kind: input, shape index: {}]
  %s3 = inlined_call_operand.vmem [shape: bf16[2,64,128], index: 3, kind: output, shape index: {}]
  %s4 = sld [smem:[#allocation0]]
  $region45: #{_unnamed_function_.4} parent=0
    _
  %s6 = ssub.s32 1, %s4
  %s7 = scalar_select 0, %s6, %s4
  loop: start=0, step=1, limit=4
  $region2: #{_unnamed_function_.4} parent=0 // loop_pre_header
    _
  $region3: #{_unnamed_function_.4} parent=0 // loop_header
    %s9 = sphi 0, %s13
    %p10 = scmp.ge.s32.totalorder %s9, 4
    %s19 = sphi 0, %s21
    %s22 = sphi 0, %s19
    %s23 = sphi 0, %s22
    %s39 = sphi 0, %s23
    %s43 = sphi 0, %s43
    %s45 = sphi 0, %s43
    %s46 = sphi 0, %s45
    %s60 = sphi 0, %s46
    %s64 = sphi 0, %s64
    %s66 = sphi 0, %s64
    %s67 = sphi 0, %s66
    %s81 = sphi 0, %s67
    %s87 = sphi 0, %s89
    %s90 = sphi 0, %s87
    %s91 = sphi 0, %s90
    %s107 = sphi 0, %s91
  $region4: #{_unnamed_function_.4} parent=0 // loop_header_branch
    %12 = sbr.rel (%p10) target = $region8
  $region5: #{_unnamed_function_.4} parent=0 // loop_body
    %s14 = ssub.s32 %s9, 1
    %s15 = ssub.s32 %s9, 2
    %s16 = sadd.s32 %s9, 1
    %s17 = ssub.s32 %s9, %s16
    %p18 = scmp.eq.s32.totalorder %s17, 0
    %s20 = sadd.s32 %s19, 1
    %s21 = scalar_select %p18, %s19, %s20
    %p24 = pneg %p18
    %p25 = scmp.eq.s32.totalorder %s9, 1
    %p26 = por %p24, %p25
    %p27 = scmp.ne.s32.totalorder %s19, %s22
    %p28 = scmp.eq.s32.totalorder %s9, 0
    %p29 = por %p27, %p28
    %p30 = scmp.ne.s32.totalorder %s19, %s22
    %p31 = scmp.eq.s32.totalorder %s14, 1
    %p32 = por %p30, %p31
    %p33 = scmp.ne.s32.totalorder %s22, %s23
    %p34 = scmp.eq.s32.totalorder %s14, 0
    %p35 = por %p33, %p34
    %p36 = scmp.ne.s32.totalorder %s22, %s23
    %p37 = scmp.eq.s32.totalorder %s15, 1
    %p38 = por %p36, %p37
    %p40 = scmp.ne.s32.totalorder %s23, %s39
    %p41 = scmp.eq.s32.totalorder %s15, 0
    %p42 = por %p40, %p41
    %s44 = sadd.s32 %s43, 1
    %p47 = scmp.eq.s32.totalorder %s9, 1
    %p48 = scmp.ne.s32.totalorder %s43, %s45
    %p49 = scmp.eq.s32.totalorder %s9, 0
    %p50 = por %p48, %p49
    %p51 = scmp.ne.s32.totalorder %s43, %s45
    %p52 = scmp.eq.s32.totalorder %s14, 1
    %p53 = por %p51, %p52
    %p54 = scmp.ne.s32.totalorder %s45, %s46
    %p55 = scmp.eq.s32.totalorder %s14, 0
    %p56 = por %p54, %p55
    %p57 = scmp.ne.s32.totalorder %s45, %s46
    %p58 = scmp.eq.s32.totalorder %s15, 1
    %p59 = por %p57, %p58
    %p61 = scmp.ne.s32.totalorder %s46, %s60
    %p62 = scmp.eq.s32.totalorder %s15, 0
    %p63 = por %p61, %p62
    %s65 = sadd.s32 %s64, 1
    %p68 = scmp.eq.s32.totalorder %s9, 1
    %p69 = scmp.ne.s32.totalorder %s64, %s66
    %p70 = scmp.eq.s32.totalorder %s9, 0
    %p71 = por %p69, %p70
    %p72 = scmp.ne.s32.totalorder %s64, %s66
    %p73 = scmp.eq.s32.totalorder %s14, 1
    %p74 = por %p72, %p73
    %p75 = scmp.ne.s32.totalorder %s66, %s67
    %p76 = scmp.eq.s32.totalorder %s14, 0
    %p77 = por %p75, %p76
    %p78 = scmp.ne.s32.totalorder %s66, %s67
    %p79 = scmp.eq.s32.totalorder %s15, 1
    %p80 = por %p78, %p79
    %p82 = scmp.ne.s32.totalorder %s67, %s81
    %p83 = scmp.eq.s32.totalorder %s15, 0
    %p84 = por %p82, %p83
    %s85 = ssub.s32 %s9, %s16
    %p86 = scmp.eq.s32.totalorder %s85, 0
    %s88 = sadd.s32 %s87, 1
    %s89 = scalar_select %p86, %s87, %s88
    %p92 = pneg %p86
    %p93 = scmp.eq.s32.totalorder %s9, 1
    %p94 = por %p92, %p93
    %p95 = scmp.ne.s32.totalorder %s87, %s90
    %p96 = scmp.eq.s32.totalorder %s9, 0
    %p97 = por %p95, %p96
    %p98 = scmp.ne.s32.totalorder %s87, %s90
    %p99 = scmp.eq.s32.totalorder %s14, 1
    %p100 = por %p98, %p99
    %p101 = scmp.ne.s32.totalorder %s90, %s91
    %p102 = scmp.eq.s32.totalorder %s14, 0
    %p103 = por %p101, %p102
    %p104 = scmp.ne.s32.totalorder %s90, %s91
    %p105 = scmp.eq.s32.totalorder %s15, 1
    %p106 = por %p104, %p105
    %p108 = scmp.ne.s32.totalorder %s91, %s107
    %p109 = scmp.eq.s32.totalorder %s15, 0
    %p110 = por %p108, %p109
    %p111 = scmp.le.s32.totalorder 1, %s9
    %p112 = scmp.lt.s32.totalorder %s9, 3
    %p113 = pnand %p111, %p112
    %p114 = pneg %p113
    // Predicated region
    $region9: #{_unnamed_function_.4} parent=5 // pred_check
      _
    $region10: #{_unnamed_function_.4} parent=5 // pred_check_branch
      %116 = sbr.rel (%p113) target = $region12
    $region11: #{_unnamed_function_.4} parent=5 // pred_region
      %s117 = ssub.s32 %s9, 1
      // Predicated region
      $region13: #{_unnamed_function_.4} parent=11 // pred_check
        %p118 = pneg %p56
      $region14: #{_unnamed_function_.4} parent=11 // pred_check_branch
        %120 = sbr.rel (%p118) target = $region16
      $region15: #{_unnamed_function_.4} parent=11 // pred_region
        _
      $region16: #{_unnamed_function_.4} parent=11 // pred_fallthru
        _
      // Predicated region
      $region17: #{_unnamed_function_.4} parent=11 // pred_check
        %p121 = pneg %p77
      $region18: #{_unnamed_function_.4} parent=11 // pred_check_branch
        %123 = sbr.rel (%p121) target = $region20
      $region19: #{_unnamed_function_.4} parent=11 // pred_region
        _
      $region20: #{_unnamed_function_.4} parent=11 // pred_fallthru
        _
    $region12: #{_unnamed_function_.4} parent=5 // pred_fallthru
      _
    %p124 = scmp.lt.s32.totalorder %s9, 2
    // Predicated region
    $region21: #{_unnamed_function_.4} parent=5 // pred_check
      %p125 = pneg %p124
    $region22: #{_unnamed_function_.4} parent=5 // pred_check_branch
      %127 = sbr.rel (%p125) target = $region24
    $region23: #{_unnamed_function_.4} parent=5 // pred_region
      // Predicated region
      $region25: #{_unnamed_function_.4} parent=23 // pred_check
        %p128 = pneg %p29
      $region26: #{_unnamed_function_.4} parent=23 // pred_check_branch
        %130 = sbr.rel (%p128) target = $region28
      $region27: #{_unnamed_function_.4} parent=23 // pred_region
        %p131 = scmp.lt.s32.totalorder %s9, 1
        %s132 = scalar_select %p131, %s9, 1
        %s133 = smul.addr %s132, 8
        %s134 = smul.addr %s133, 4
        %s135 = scalar_lea.vmem %s0, %s134
      $region28: #{_unnamed_function_.4} parent=23 // pred_fallthru
        _
    $region24: #{_unnamed_function_.4} parent=5 // pred_fallthru
      _
    %p136 = scmp.le.s32.totalorder 1, %s9
    %p137 = scmp.lt.s32.totalorder %s9, 3
    %p138 = pnand %p136, %p137
    %p139 = pneg %p138
    // Predicated region
    $region29: #{_unnamed_function_.4} parent=5 // pred_check
      _
    $region30: #{_unnamed_function_.4} parent=5 // pred_check_branch
      %141 = sbr.rel (%p138) target = $region32
    $region31: #{_unnamed_function_.4} parent=5 // pred_region
      %s142 = ssub.s32 %s9, 1
      %p143 = scmp.lt.s32.totalorder %s14, 1
      %s144 = scalar_select %p143, %s14, 1
      %s145 = smul.addr %s144, 8
      %s146 = smul.addr %s145, 4
      %s147 = scalar_lea.vmem %s0, %s146
      %p148 = pneg %p35
      %p149 = pneg %p32
      %p150 = pneg %p56
      %p151 = pneg %p53
      %p152 = pneg %p77
      %p153 = pneg %p74
      %p154 = pneg %p103
      %p155 = pneg %p100
      %p156 = scmp.lt.s32.totalorder %s14, 1
      %s157 = scalar_select %p156, %s14, 1
      %s158 = smul.addr %s157, 8
      %s159 = smul.addr %s158, 4
      %s160 = scalar_lea.vmem %s3, %s159
      %p161 = scmp.lt.s32.totalorder %s14, 1
      %s162 = scalar_select %p161, %s14, 1
      %s163 = smul.addr %s162, 8
      %s164 = smul.addr %s163, 4
      %s165 = scalar_lea.vmem %s0, %s164
      %p166 = scmp.lt.s32.totalorder %s14, 1
      %s167 = scalar_select %p166, %s14, 1
      %s168 = smul.addr %s167, 8
      %s169 = smul.addr %s168, 4
      %s170 = scalar_lea.vmem %s3, %s169
      %v172 = vld [vmem:[%s165] sm:$0xf]
      %v173 = vld [vmem:[%s165 + $0x4] sm:$0xf]
      %v174 = vld [vmem:[%s165 + $0x8] sm:$0xf]
      %v175 = vld [vmem:[%s165 + $0xc] sm:$0xf]
      %v176 = vld [vmem:[%s165 + $0x10] sm:$0xf]
      %v177 = vld [vmem:[%s165 + $0x14] sm:$0xf]
      %v178 = vld [vmem:[%s165 + $0x18] sm:$0xf]
      %v179 = vld [vmem:[%s165 + $0x1c] sm:$0xf]
      %vm180 = vcmask 125952
      %181 = vst.msk [vmem:[#allocation2] sm:$0xf] %vm180, %v172
      %182 = vst.msk [vmem:[#allocation2 + $0x4] sm:$0xf] %vm180, %v173
      %183 = vst.msk [vmem:[#allocation2 + $0x8] sm:$0xf] %vm180, %v174
      %184 = vst.msk [vmem:[#allocation2 + $0xc] sm:$0xf] %vm180, %v175
      %185 = vst.msk [vmem:[#allocation2 + $0x10] sm:$0xf] %vm180, %v176
      %186 = vst.msk [vmem:[#allocation2 + $0x14] sm:$0xf] %vm180, %v177
      %187 = vst.msk [vmem:[#allocation2 + $0x18] sm:$0xf] %vm180, %v178
      %188 = vst.msk [vmem:[#allocation2 + $0x1c] sm:$0xf] %vm180, %v179
      %v189 = vld [vmem:[#allocation2] sm:$0xf]
      %v190 = vld [vmem:[#allocation2 + $0x4] sm:$0xf]
      %v191 = vld [vmem:[#allocation2 + $0x8] sm:$0xf]
      %v192 = vld [vmem:[#allocation2 + $0xc] sm:$0xf]
      %v193 = vld [vmem:[#allocation2 + $0x10] sm:$0xf]
      %v194 = vld [vmem:[#allocation2 + $0x14] sm:$0xf]
      %v195 = vld [vmem:[#allocation2 + $0x18] sm:$0xf]
      %v196 = vld [vmem:[#allocation2 + $0x1c] sm:$0xf]
      %v197 = vld [vmem:[%s1] sm:$0xf]
      %v198 = vld [vmem:[%s1 + $0x4] sm:$0xf]
      %v199 = vld [vmem:[%s2] sm:$0x1]
      %v201 = vlaneseq
      %v202 = vshrl.u32 %v201, 7
      %v203 = vsub.s32 0, %v202
      %v204 = vrot.slane %v199, %v203
      %v214 = vunpack.c.l.b16 %v189
      %v215 = vunpack.c.l.b16 %v190
      %v216 = vunpack.c.l.b16 %v191
      %v217 = vunpack.c.l.b16 %v192
      %v218 = vunpack.c.l.b16 %v193
      %v219 = vunpack.c.l.b16 %v194
      %v220 = vunpack.c.l.b16 %v195
      %v221 = vunpack.c.l.b16 %v196
      %v222 = vpack.c.b16 %v215, %v214
      %v223 = vpack.c.b16 %v217, %v216
      %v224 = vpack.c.b16 %v219, %v218
      %v225 = vpack.c.b16 %v221, %v220
      %v228 = vunpack.c.l.b16 %v197
      %v229 = vunpack.c.l.b16 %v198
      %v230 = vpack.c.b16 %v229, %v228
      %vm232 = vcmask 130048
      %v234 = vsel %vm232, %v222, 0
      %v237 = vsel %vm232, %v223, 0
      %v240 = vsel %vm232, %v224, 0
      %v243 = vsel %vm232, %v225, 0
      %245 = vmatprep.subr.bf16.mxu0 0
      %246 = vmatpush1.bf16.msra.mxu0 %v230
      %247 = vmatprep.subr.bf16.mxu0 0
      %248 = vmatpush1.bf16.msra.mxu0 0
      %249 = vmatprep.subr.bf16.mxu0 0
      %250 = vmatpush1.bf16.msra.mxu0 0
      %251 = vmatprep.subr.bf16.mxu0 0
      %252 = vmatpush1.bf16.msra.mxu0 0
      %253 = vmatprep.subr.bf16.mxu0 0
      %254 = vmatpush1.bf16.msra.mxu0 0
      %255 = vmatprep.subr.bf16.mxu0 0
      %256 = vmatpush1.bf16.msra.mxu0 0
      %257 = vmatprep.subr.bf16.mxu0 0
      %258 = vmatpush1.bf16.msra.mxu0 0
      %259 = vmatprep.subr.bf16.mxu0 0
      %260 = vmatpush1.bf16.msra.mxu0 0
      %261 = vmatprep.subr.bf16.mxu0 0
      %262 = vmatpush1.bf16.msra.mxu0 0
      %263 = vmatprep.subr.bf16.mxu0 0
      %264 = vmatpush1.bf16.msra.mxu0 0
      %265 = vmatprep.subr.bf16.mxu0 0
      %266 = vmatpush1.bf16.msra.mxu0 0
      %267 = vmatprep.subr.bf16.mxu0 0
      %268 = vmatpush1.bf16.msra.mxu0 0
      %269 = vmatprep.subr.bf16.mxu0 0
      %270 = vmatpush1.bf16.msra.mxu0 0
      %271 = vmatprep.subr.bf16.mxu0 0
      %272 = vmatpush1.bf16.msra.mxu0 0
      %273 = vmatprep.subr.bf16.mxu0 0
      %274 = vmatpush1.bf16.msra.mxu0 0
      %275 = vmatprep.subr.bf16.mxu0 0
      %276 = vmatpush1.bf16.msra.mxu0 0
      %277 = vmatprep.mubr.bf16.mxu0 0
      %278 = vmatmul.mubr.bf16.gmra.mrb[0].mxu0 %v234
      %v279 = vpop.f32.mrb[0].mxu0
      %v280 = vadd.f32 %v204, %v279
      %v281 = vpop.f32.mrb[0].mxu0
      %v282 = vpop.f32.mrb[0].mxu0
      %v283 = vadd.f32 %v204, %v282
      %v284 = vpop.f32.mrb[0].mxu0
      %285 = vmatprep.mubr.bf16.mxu0 0
      %286 = vmatmul.mubr.bf16.gmra.mrb[0].mxu0 %v237
      %v287 = vpop.f32.mrb[0].mxu0
      %v288 = vadd.f32 %v204, %v287
      %v289 = vpop.f32.mrb[0].mxu0
      %v290 = vpop.f32.mrb[0].mxu0
      %v291 = vadd.f32 %v204, %v290
      %v292 = vpop.f32.mrb[0].mxu0
      %293 = vmatprep.mubr.bf16.mxu0 0
      %294 = vmatmul.mubr.bf16.gmra.mrb[0].mxu0 %v240
      %v295 = vpop.f32.mrb[0].mxu0
      %v296 = vadd.f32 %v204, %v295
      %v297 = vpop.f32.mrb[0].mxu0
      %v298 = vpop.f32.mrb[0].mxu0
      %v299 = vadd.f32 %v204, %v298
      %v300 = vpop.f32.mrb[0].mxu0
      %301 = vmatprep.mubr.bf16.mxu0 0
      %302 = vmatmul.mubr.bf16.gmra.mrb[0].mxu0 %v243
      %v303 = vpop.f32.mrb[0].mxu0
      %v304 = vadd.f32 %v204, %v303
      %v305 = vpop.f32.mrb[0].mxu0
      %v306 = vpop.f32.mrb[0].mxu0
      %v307 = vadd.f32 %v204, %v306
      %v308 = vpop.f32.mrb[0].mxu0
      %309 = vdwg.mxu0
      %v310 = vpack.c.bf16 %v283, %v280
      %v311 = vpack.c.bf16 %v291, %v288
      %v312 = vpack.c.bf16 %v299, %v296
      %v313 = vpack.c.bf16 %v307, %v304
      %v318 = vunpack.c.l.b16 %v310
      %v319 = vunpack.c.h.b16 %v310
      %v320 = vunpack.c.l.b16 %v311
      %v321 = vunpack.c.h.b16 %v311
      %v322 = vunpack.c.l.b16 %v312
      %v323 = vunpack.c.h.b16 %v312
      %v324 = vunpack.c.l.b16 %v313
      %v325 = vunpack.c.h.b16 %v313
      %v326 = vpack.c.b16 %v318, %v318
      %v327 = vpack.c.b16 %v319, %v319
      %v328 = vpack.c.b16 %v320, %v320
      %v329 = vpack.c.b16 %v321, %v321
      %v330 = vpack.c.b16 %v322, %v322
      %v331 = vpack.c.b16 %v323, %v323
      %v332 = vpack.c.b16 %v324, %v324
      %v333 = vpack.c.b16 %v325, %v325
      %342 = vst [vmem:[%s170] sm:$0xf] %v326
      %343 = vst [vmem:[%s170 + $0x4] sm:$0xf] %v327
      %344 = vst [vmem:[%s170 + $0x8] sm:$0xf] %v328
      %345 = vst [vmem:[%s170 + $0xc] sm:$0xf] %v329
      %346 = vst [vmem:[%s170 + $0x10] sm:$0xf] %v330
      %347 = vst [vmem:[%s170 + $0x14] sm:$0xf] %v331
      %348 = vst [vmem:[%s170 + $0x18] sm:$0xf] %v332
      %349 = vst [vmem:[%s170 + $0x1c] sm:$0xf] %v333
      %p350 = scmp.lt.s32.totalorder %s14, 1
      %s351 = scalar_select %p350, %s14, 1
      %s352 = smul.addr %s351, 8
      %s353 = smul.addr %s352, 4
      %s354 = scalar_lea.vmem %s3, %s353
      // Predicated region
      $region33: #{_unnamed_function_.4} parent=31 // pred_check
        %p355 = pneg %p100
      $region34: #{_unnamed_function_.4} parent=31 // pred_check_branch
        %357 = sbr.rel (%p355) target = $region36
      $region35: #{_unnamed_function_.4} parent=31 // pred_region
        _
      $region36: #{_unnamed_function_.4} parent=31 // pred_fallthru
        _
    $region32: #{_unnamed_function_.4} parent=5 // pred_fallthru
      _
    %p358 = scmp.le.s32.totalorder 2, %s9
    // Predicated region
    $region37: #{_unnamed_function_.4} parent=5 // pred_check
      %p359 = pneg %p358
    $region38: #{_unnamed_function_.4} parent=5 // pred_check_branch
      %361 = sbr.rel (%p359) target = $region40
    $region39: #{_unnamed_function_.4} parent=5 // pred_region
      %s362 = ssub.s32 %s9, 2
      // Predicated region
      $region41: #{_unnamed_function_.4} parent=39 // pred_check
        %p363 = pneg %p106
      $region42: #{_unnamed_function_.4} parent=39 // pred_check_branch
        %365 = sbr.rel (%p363) target = $region44
      $region43: #{_unnamed_function_.4} parent=39 // pred_region
        %p366 = scmp.lt.s32.totalorder %s15, 1
        %s367 = scalar_select %p366, %s15, 1
        %s368 = smul.addr %s367, 8
        %s369 = smul.addr %s368, 4
        %s370 = scalar_lea.vmem %s3, %s369
      $region44: #{_unnamed_function_.4} parent=39 // pred_fallthru
        _
    $region40: #{_unnamed_function_.4} parent=5 // pred_fallthru
      _
  $region6: #{_unnamed_function_.4} parent=0 // loop_footer
    %s13 = sadd.s32 1, %s9
  $region7: #{_unnamed_function_.4} parent=0 // loop_footer_branch
    %8 = sbr.rel target = $region3
  $region8: #{_unnamed_function_.4} parent=0 // loop_exit
    _

// kernel: _unnamed_function_.3
$region0: #{_unnamed_function_.3}
  #allocation0 [shape = 'u32[]', space=smem, size = 0x4, offset = 0x4, fixed_abs, tag = 'smem constant byte address 0x4 - core index']
  #allocation1 [shape = 'u32[144,128]{1,0:T(1,128)}', space=vmem, size = 0x12000, scoped, tag = 'internal scratch']
  #allocation2 [shape = 'bf16[8,8,64]{2,1,0:T(8,128)(2,1)}', space=vmem, size = 0x4000, scoped, tag = 'scratch operand']
  %s0 = inlined_call_operand.vmem [shape: bf16[2,9,9,16], index: 0, kind: input, shape index: {}]
  %s1 = inlined_call_operand.vmem [shape: bf16[64,128], index: 1, kind: input, shape index: {}]
  %s2 = inlined_call_operand.vmem [shape: f32[1,128], index: 2, kind: input, shape index: {}]
  %s3 = inlined_call_operand.vmem [shape: bf16[2,64,128], index: 3, kind: output, shape index: {}]
  %s4 = sld [smem:[#allocation0]]
  $region45: #{_unnamed_function_.3} parent=0
    _
  %s6 = ssub.s32 1, %s4
  %s7 = scalar_select 0, %s6, %s4
  loop: start=0, step=1, limit=4
  $region2: #{_unnamed_function_.3} parent=0 // loop_pre_header
    _
  $region3: #{_unnamed_function_.3} parent=0 // loop_header
    %s9 = sphi 0, %s13
    %p10 = scmp.ge.s32.totalorder %s9, 4
    %s19 = sphi 0, %s21
    %s22 = sphi 0, %s19
    %s23 = sphi 0, %s22
    %s39 = sphi 0, %s23
    %s43 = sphi 0, %s43
    %s45 = sphi 0, %s43
    %s46 = sphi 0, %s45
    %s60 = sphi 0, %s46
    %s64 = sphi 0, %s64
    %s66 = sphi 0, %s64
    %s67 = sphi 0, %s66
    %s81 = sphi 0, %s67
    %s87 = sphi 0, %s89
    %s90 = sphi 0, %s87
    %s91 = sphi 0, %s90
    %s107 = sphi 0, %s91
  $region4: #{_unnamed_function_.3} parent=0 // loop_header_branch
    %12 = sbr.rel (%p10) target = $region8
  $region5: #{_unnamed_function_.3} parent=0 // loop_body
    %s14 = ssub.s32 %s9, 1
    %s15 = ssub.s32 %s9, 2
    %s16 = sadd.s32 %s9, 1
    %s17 = ssub.s32 %s9, %s16
    %p18 = scmp.eq.s32.totalorder %s17, 0
    %s20 = sadd.s32 %s19, 1
    %s21 = scalar_select %p18, %s19, %s20
    %p24 = pneg %p18
    %p25 = scmp.eq.s32.totalorder %s9, 1
    %p26 = por %p24, %p25
    %p27 = scmp.ne.s32.totalorder %s19, %s22
    %p28 = scmp.eq.s32.totalorder %s9, 0
    %p29 = por %p27, %p28
    %p30 = scmp.ne.s32.totalorder %s19, %s22
    %p31 = scmp.eq.s32.totalorder %s14, 1
    %p32 = por %p30, %p31
    %p33 = scmp.ne.s32.totalorder %s22, %s23
    %p34 = scmp.eq.s32.totalorder %s14, 0
    %p35 = por %p33, %p34
    %p36 = scmp.ne.s32.totalorder %s22, %s23
    %p37 = scmp.eq.s32.totalorder %s15, 1
    %p38 = por %p36, %p37
    %p40 = scmp.ne.s32.totalorder %s23, %s39
    %p41 = scmp.eq.s32.totalorder %s15, 0
    %p42 = por %p40, %p41
    %s44 = sadd.s32 %s43, 1
    %p47 = scmp.eq.s32.totalorder %s9, 1
    %p48 = scmp.ne.s32.totalorder %s43, %s45
    %p49 = scmp.eq.s32.totalorder %s9, 0
    %p50 = por %p48, %p49
    %p51 = scmp.ne.s32.totalorder %s43, %s45
    %p52 = scmp.eq.s32.totalorder %s14, 1
    %p53 = por %p51, %p52
    %p54 = scmp.ne.s32.totalorder %s45, %s46
    %p55 = scmp.eq.s32.totalorder %s14, 0
    %p56 = por %p54, %p55
    %p57 = scmp.ne.s32.totalorder %s45, %s46
    %p58 = scmp.eq.s32.totalorder %s15, 1
    %p59 = por %p57, %p58
    %p61 = scmp.ne.s32.totalorder %s46, %s60
    %p62 = scmp.eq.s32.totalorder %s15, 0
    %p63 = por %p61, %p62
    %s65 = sadd.s32 %s64, 1
    %p68 = scmp.eq.s32.totalorder %s9, 1
    %p69 = scmp.ne.s32.totalorder %s64, %s66
    %p70 = scmp.eq.s32.totalorder %s9, 0
    %p71 = por %p69, %p70
    %p72 = scmp.ne.s32.totalorder %s64, %s66
    %p73 = scmp.eq.s32.totalorder %s14, 1
    %p74 = por %p72, %p73
    %p75 = scmp.ne.s32.totalorder %s66, %s67
    %p76 = scmp.eq.s32.totalorder %s14, 0
    %p77 = por %p75, %p76
    %p78 = scmp.ne.s32.totalorder %s66, %s67
    %p79 = scmp.eq.s32.totalorder %s15, 1
    %p80 = por %p78, %p79
    %p82 = scmp.ne.s32.totalorder %s67, %s81
    %p83 = scmp.eq.s32.totalorder %s15, 0
    %p84 = por %p82, %p83
    %s85 = ssub.s32 %s9, %s16
    %p86 = scmp.eq.s32.totalorder %s85, 0
    %s88 = sadd.s32 %s87, 1
    %s89 = scalar_select %p86, %s87, %s88
    %p92 = pneg %p86
    %p93 = scmp.eq.s32.totalorder %s9, 1
    %p94 = por %p92, %p93
    %p95 = scmp.ne.s32.totalorder %s87, %s90
    %p96 = scmp.eq.s32.totalorder %s9, 0
    %p97 = por %p95, %p96
    %p98 = scmp.ne.s32.totalorder %s87, %s90
    %p99 = scmp.eq.s32.totalorder %s14, 1
    %p100 = por %p98, %p99
    %p101 = scmp.ne.s32.totalorder %s90, %s91
    %p102 = scmp.eq.s32.totalorder %s14, 0
    %p103 = por %p101, %p102
    %p104 = scmp.ne.s32.totalorder %s90, %s91
    %p105 = scmp.eq.s32.totalorder %s15, 1
    %p106 = por %p104, %p105
    %p108 = scmp.ne.s32.totalorder %s91, %s107
    %p109 = scmp.eq.s32.totalorder %s15, 0
    %p110 = por %p108, %p109
    %p111 = scmp.le.s32.totalorder 1, %s9
    %p112 = scmp.lt.s32.totalorder %s9, 3
    %p113 = pnand %p111, %p112
    %p114 = pneg %p113
    // Predicated region
    $region9: #{_unnamed_function_.3} parent=5 // pred_check
      _
    $region10: #{_unnamed_function_.3} parent=5 // pred_check_branch
      %116 = sbr.rel (%p113) target = $region12
    $region11: #{_unnamed_function_.3} parent=5 // pred_region
      %s117 = ssub.s32 %s9, 1
      // Predicated region
      $region13: #{_unnamed_function_.3} parent=11 // pred_check
        %p118 = pneg %p56
      $region14: #{_unnamed_function_.3} parent=11 // pred_check_branch
        %120 = sbr.rel (%p118) target = $region16
      $region15: #{_unnamed_function_.3} parent=11 // pred_region
        _
      $region16: #{_unnamed_function_.3} parent=11 // pred_fallthru
        _
      // Predicated region
      $region17: #{_unnamed_function_.3} parent=11 // pred_check
        %p121 = pneg %p77
      $region18: #{_unnamed_function_.3} parent=11 // pred_check_branch
        %123 = sbr.rel (%p121) target = $region20
      $region19: #{_unnamed_function_.3} parent=11 // pred_region
        _
      $region20: #{_unnamed_function_.3} parent=11 // pred_fallthru
        _
    $region12: #{_unnamed_function_.3} parent=5 // pred_fallthru
      _
    %p124 = scmp.lt.s32.totalorder %s9, 2
    // Predicated region
    $region21: #{_unnamed_function_.3} parent=5 // pred_check
      %p125 = pneg %p124
    $region22: #{_unnamed_function_.3} parent=5 // pred_check_branch
      %127 = sbr.rel (%p125) target = $region24
    $region23: #{_unnamed_function_.3} parent=5 // pred_region
      // Predicated region
      $region25: #{_unnamed_function_.3} parent=23 // pred_check
        %p128 = pneg %p29
      $region26: #{_unnamed_function_.3} parent=23 // pred_check_branch
        %130 = sbr.rel (%p128) target = $region28
      $region27: #{_unnamed_function_.3} parent=23 // pred_region
        %p131 = scmp.lt.s32.totalorder %s9, 1
        %s132 = scalar_select %p131, %s9, 1
        %s133 = smul.addr %s132, 18
        %s134 = smul.addr %s133, 4
        %s135 = scalar_lea.vmem %s0, %s134
      $region28: #{_unnamed_function_.3} parent=23 // pred_fallthru
        _
    $region24: #{_unnamed_function_.3} parent=5 // pred_fallthru
      _
    %p136 = scmp.le.s32.totalorder 1, %s9
    %p137 = scmp.lt.s32.totalorder %s9, 3
    %p138 = pnand %p136, %p137
    %p139 = pneg %p138
    // Predicated region
    $region29: #{_unnamed_function_.3} parent=5 // pred_check
      _
    $region30: #{_unnamed_function_.3} parent=5 // pred_check_branch
      %141 = sbr.rel (%p138) target = $region32
    $region31: #{_unnamed_function_.3} parent=5 // pred_region
      %s142 = ssub.s32 %s9, 1
      %p143 = scmp.lt.s32.totalorder %s14, 1
      %s144 = scalar_select %p143, %s14, 1
      %s145 = smul.addr %s144, 18
      %s146 = smul.addr %s145, 4
      %s147 = scalar_lea.vmem %s0, %s146
      %p148 = pneg %p35
      %p149 = pneg %p32
      %p150 = pneg %p56
      %p151 = pneg %p53
      %p152 = pneg %p77
      %p153 = pneg %p74
      %p154 = pneg %p103
      %p155 = pneg %p100
      %p156 = scmp.lt.s32.totalorder %s14, 1
      %s157 = scalar_select %p156, %s14, 1
      %s158 = smul.addr %s157, 8
      %s159 = smul.addr %s158, 4
      %s160 = scalar_lea.vmem %s3, %s159
      %p161 = scmp.lt.s32.totalorder %s14, 1
      %s162 = scalar_select %p161, %s14, 1
      %s163 = smul.addr %s162, 18
      %s164 = smul.addr %s163, 4
      %s165 = scalar_lea.vmem %s0, %s164
      %p166 = scmp.lt.s32.totalorder %s14, 1
      %s167 = scalar_select %p166, %s14, 1
      %s168 = smul.addr %s167, 8
      %s169 = smul.addr %s168, 4
      %s170 = scalar_lea.vmem %s3, %s169
      %v172 = vld [vmem:[%s165] sm:$0xf]
      %v173 = vld [vmem:[%s165 + $0x8] sm:$0xf]
      %v174 = vld [vmem:[%s165 + $0x10] sm:$0xf]
      %v175 = vld [vmem:[%s165 + $0x18] sm:$0xf]
      %v176 = vld [vmem:[%s165 + $0x20] sm:$0xf]
      %v177 = vld [vmem:[%s165 + $0x28] sm:$0xf]
      %v178 = vld [vmem:[%s165 + $0x30] sm:$0xf]
      %v179 = vld [vmem:[%s165 + $0x38] sm:$0xf]
      %vm180 = vcmask 125952
      %181 = vst.msk [vmem:[#allocation2] sm:$0xf] %vm180, %v172
      %182 = vst.msk [vmem:[#allocation2 + $0x4] sm:$0xf] %vm180, %v173
      %183 = vst.msk [vmem:[#allocation2 + $0x8] sm:$0xf] %vm180, %v174
      %184 = vst.msk [vmem:[#allocation2 + $0xc] sm:$0xf] %vm180, %v175
      %185 = vst.msk [vmem:[#allocation2 + $0x10] sm:$0xf] %vm180, %v176
      %186 = vst.msk [vmem:[#allocation2 + $0x14] sm:$0xf] %vm180, %v177
      %187 = vst.msk [vmem:[#allocation2 + $0x18] sm:$0xf] %vm180, %v178
      %188 = vst.msk [vmem:[#allocation2 + $0x1c] sm:$0xf] %vm180, %v179
      %v189 = vld [vmem:[%s165] sm:$0xf]
      %v190 = vld [vmem:[%s165 + $0x4] sm:$0x1]
      %v191 = vld [vmem:[%s165 + $0x8] sm:$0xf]
      %v192 = vld [vmem:[%s165 + $0xc] sm:$0x1]
      %v193 = vld [vmem:[%s165 + $0x10] sm:$0xf]
      %v194 = vld [vmem:[%s165 + $0x14] sm:$0x1]
      %v195 = vld [vmem:[%s165 + $0x18] sm:$0xf]
      %v196 = vld [vmem:[%s165 + $0x1c] sm:$0x1]
      %v197 = vld [vmem:[%s165 + $0x20] sm:$0xf]
      %v198 = vld [vmem:[%s165 + $0x24] sm:$0x1]
      %v199 = vld [vmem:[%s165 + $0x28] sm:$0xf]
      %v200 = vld [vmem:[%s165 + $0x2c] sm:$0x1]
      %v201 = vld [vmem:[%s165 + $0x30] sm:$0xf]
      %v202 = vld [vmem:[%s165 + $0x34] sm:$0x1]
      %v203 = vld [vmem:[%s165 + $0x38] sm:$0xf]
      %v204 = vld [vmem:[%s165 + $0x3c] sm:$0x1]
      %vm205 = vsmask.f32 3328
      %vm206 = vsmask.f32 7440
      %vm207 = vmor %vm205, %vm206
      %v209 = vshrl.u32 %v189, 16
      %v211 = vrot.slane %v209, 4
      %v212 = vshll.u32 %v189, 16
      %v214 = vrot.slane %v212, 5
      %v215 = vor.u32 %v211, %v214
      %v216 = vrot.slane %v215, 4
      %v218 = vshll.u32 %v190, 16
      %v220 = vrot.slane %v218, 5
      %v221 = vsel %vm207, %v216, %v220
      %v223 = vshrl.u32 %v191, 16
      %v225 = vrot.slane %v223, 4
      %v226 = vshll.u32 %v191, 16
      %v228 = vrot.slane %v226, 5
      %v229 = vor.u32 %v225, %v228
      %v230 = vrot.slane %v229, 4
      %v232 = vshll.u32 %v192, 16
      %v234 = vrot.slane %v232, 5
      %v235 = vsel %vm207, %v230, %v234
      %v237 = vshrl.u32 %v193, 16
      %v239 = vrot.slane %v237, 4
      %v240 = vshll.u32 %v193, 16
      %v242 = vrot.slane %v240, 5
      %v243 = vor.u32 %v239, %v242
      %v244 = vrot.slane %v243, 4
      %v246 = vshll.u32 %v194, 16
      %v248 = vrot.slane %v246, 5
      %v249 = vsel %vm207, %v244, %v248
      %v251 = vshrl.u32 %v195, 16
      %v253 = vrot.slane %v251, 4
      %v254 = vshll.u32 %v195, 16
      %v256 = vrot.slane %v254, 5
      %v257 = vor.u32 %v253, %v256
      %v258 = vrot.slane %v257, 4
      %v260 = vshll.u32 %v196, 16
      %v262 = vrot.slane %v260, 5
      %v263 = vsel %vm207, %v258, %v262
      %v265 = vshrl.u32 %v197, 16
      %v267 = vrot.slane %v265, 4
      %v268 = vshll.u32 %v197, 16
      %v270 = vrot.slane %v268, 5
      %v271 = vor.u32 %v267, %v270
      %v272 = vrot.slane %v271, 4
      %v274 = vshll.u32 %v198, 16
      %v276 = vrot.slane %v274, 5
      %v277 = vsel %vm207, %v272, %v276
      %v279 = vshrl.u32 %v199, 16
      %v281 = vrot.slane %v279, 4
      %v282 = vshll.u32 %v199, 16
      %v284 = vrot.slane %v282, 5
      %v285 = vor.u32 %v281, %v284
      %v286 = vrot.slane %v285, 4
      %v288 = vshll.u32 %v200, 16
      %v290 = vrot.slane %v288, 5
      %v291 = vsel %vm207, %v286, %v290
      %v293 = vshrl.u32 %v201, 16
      %v295 = vrot.slane %v293, 4
      %v296 = vshll.u32 %v201, 16
      %v298 = vrot.slane %v296, 5
      %v299 = vor.u32 %v295, %v298
      %v300 = vrot.slane %v299, 4
      %v302 = vshll.u32 %v202, 16
      %v304 = vrot.slane %v302, 5
      %v305 = vsel %vm207, %v300, %v304
      %v307 = vshrl.u32 %v203, 16
      %v309 = vrot.slane %v307, 4
      %v310 = vshll.u32 %v203, 16
      %v312 = vrot.slane %v310, 5
      %v313 = vor.u32 %v309, %v312
      %v314 = vrot.slane %v313, 4
      %v316 = vshll.u32 %v204, 16
      %v318 = vrot.slane %v316, 5
      %v319 = vsel %vm207, %v314, %v318
      %320 = vrot.lane.b32.xlu0 %v221, 16
      %v321 = vpop.permute.xlu0 %320
      %322 = vrot.lane.b32.xlu0 %v235, 16
      %v323 = vpop.permute.xlu0 %322
      %324 = vrot.lane.b32.xlu0 %v249, 16
      %v325 = vpop.permute.xlu0 %324
      %326 = vrot.lane.b32.xlu0 %v263, 16
      %v327 = vpop.permute.xlu0 %326
      %328 = vrot.lane.b32.xlu0 %v277, 16
      %v329 = vpop.permute.xlu0 %328
      %330 = vrot.lane.b32.xlu0 %v291, 16
      %v331 = vpop.permute.xlu0 %330
      %332 = vrot.lane.b32.xlu0 %v305, 16
      %v333 = vpop.permute.xlu0 %332
      %334 = vrot.lane.b32.xlu0 %v319, 16
      %v335 = vpop.permute.xlu0 %334
      %vm344 = vcmask 257152
      %345 = vst.msk [vmem:[#allocation2] sm:$0xf] %vm344, %v321
      %346 = vst.msk [vmem:[#allocation2 + $0x4] sm:$0xf] %vm344, %v323
      %347 = vst.msk [vmem:[#allocation2 + $0x8] sm:$0xf] %vm344, %v325
      %348 = vst.msk [vmem:[#allocation2 + $0xc] sm:$0xf] %vm344, %v327
      %349 = vst.msk [vmem:[#allocation2 + $0x10] sm:$0xf] %vm344, %v329
      %350 = vst.msk [vmem:[#allocation2 + $0x14] sm:$0xf] %vm344, %v331
      %351 = vst.msk [vmem:[#allocation2 + $0x18] sm:$0xf] %vm344, %v333
      %352 = vst.msk [vmem:[#allocation2 + $0x1c] sm:$0xf] %vm344, %v335
      %s353 = scalar_lea.vmem %s165, 8
      %v354 = vld [vmem:[%s353] sm:$0xf]
      %v355 = vld [vmem:[%s353 + $0x8] sm:$0xf]
      %v356 = vld [vmem:[%s353 + $0x10] sm:$0xf]
      %v357 = vld [vmem:[%s353 + $0x18] sm:$0xf]
      %v358 = vld [vmem:[%s353 + $0x20] sm:$0xf]
      %v359 = vld [vmem:[%s353 + $0x28] sm:$0xf]
      %v360 = vld [vmem:[%s353 + $0x30] sm:$0xf]
      %v361 = vld [vmem:[%s353 + $0x38] sm:$0xf]
      %370 = vrot.lane.b32.xlu0 %v354, 32
      %v371 = vpop.permute.xlu0 %370
      %372 = vrot.lane.b32.xlu0 %v355, 32
      %v373 = vpop.permute.xlu0 %372
      %374 = vrot.lane.b32.xlu0 %v356, 32
      %v375 = vpop.permute.xlu0 %374
      %376 = vrot.lane.b32.xlu0 %v357, 32
      %v377 = vpop.permute.xlu0 %376
      %378 = vrot.lane.b32.xlu0 %v358, 32
      %v379 = vpop.permute.xlu0 %378
      %380 = vrot.lane.b32.xlu0 %v359, 32
      %v381 = vpop.permute.xlu0 %380
      %382 = vrot.lane.b32.xlu0 %v360, 32
      %v383 = vpop.permute.xlu0 %382
      %384 = vrot.lane.b32.xlu0 %v361, 32
      %v385 = vpop.permute.xlu0 %384
      %vm394 = vcmask 388352
      %395 = vst.msk [vmem:[#allocation2] sm:$0xf] %vm394, %v371
      %396 = vst.msk [vmem:[#allocation2 + $0x4] sm:$0xf] %vm394, %v373
      %397 = vst.msk [vmem:[#allocation2 + $0x8] sm:$0xf] %vm394, %v375
      %398 = vst.msk [vmem:[#allocation2 + $0xc] sm:$0xf] %vm394, %v377
      %399 = vst.msk [vmem:[#allocation2 + $0x10] sm:$0xf] %vm394, %v379
      %400 = vst.msk [vmem:[#allocation2 + $0x14] sm:$0xf] %vm394, %v381
      %401 = vst.msk [vmem:[#allocation2 + $0x18] sm:$0xf] %vm394, %v383
      %402 = vst.msk [vmem:[#allocation2 + $0x1c] sm:$0xf] %vm394, %v385
      %v403 = vld [vmem:[%s353] sm:$0xf]
      %v404 = vld [vmem:[%s353 + $0x4] sm:$0x1]
      %v405 = vld [vmem:[%s353 + $0x8] sm:$0xf]
      %v406 = vld [vmem:[%s353 + $0xc] sm:$0x1]
      %v407 = vld [vmem:[%s353 + $0x10] sm:$0xf]
      %v408 = vld [vmem:[%s353 + $0x14] sm:$0x1]
      %v409 = vld [vmem:[%s353 + $0x18] sm:$0xf]
      %v410 = vld [vmem:[%s353 + $0x1c] sm:$0x1]
      %v411 = vld [vmem:[%s353 + $0x20] sm:$0xf]
      %v412 = vld [vmem:[%s353 + $0x24] sm:$0x1]
      %v413 = vld [vmem:[%s353 + $0x28] sm:$0xf]
      %v414 = vld [vmem:[%s353 + $0x2c] sm:$0x1]
      %v415 = vld [vmem:[%s353 + $0x30] sm:$0xf]
      %v416 = vld [vmem:[%s353 + $0x34] sm:$0x1]
      %v417 = vld [vmem:[%s353 + $0x38] sm:$0xf]
      %v418 = vld [vmem:[%s353 + $0x3c] sm:$0x1]
      %v420 = vshrl.u32 %v403, 16
      %v422 = vrot.slane %v420, 4
      %v423 = vshll.u32 %v403, 16
      %v425 = vrot.slane %v423, 5
      %v426 = vor.u32 %v422, %v425
      %v427 = vrot.slane %v426, 4
      %v429 = vshll.u32 %v404, 16
      %v431 = vrot.slane %v429, 5
      %v432 = vsel %vm207, %v427, %v431
      %v434 = vshrl.u32 %v405, 16
      %v436 = vrot.slane %v434, 4
      %v437 = vshll.u32 %v405, 16
      %v439 = vrot.slane %v437, 5
      %v440 = vor.u32 %v436, %v439
      %v441 = vrot.slane %v440, 4
      %v443 = vshll.u32 %v406, 16
      %v445 = vrot.slane %v443, 5
      %v446 = vsel %vm207, %v441, %v445
      %v448 = vshrl.u32 %v407, 16
      %v450 = vrot.slane %v448, 4
      %v451 = vshll.u32 %v407, 16
      %v453 = vrot.slane %v451, 5
      %v454 = vor.u32 %v450, %v453
      %v455 = vrot.slane %v454, 4
      %v457 = vshll.u32 %v408, 16
      %v459 = vrot.slane %v457, 5
      %v460 = vsel %vm207, %v455, %v459
      %v462 = vshrl.u32 %v409, 16
      %v464 = vrot.slane %v462, 4
      %v465 = vshll.u32 %v409, 16
      %v467 = vrot.slane %v465, 5
      %v468 = vor.u32 %v464, %v467
      %v469 = vrot.slane %v468, 4
      %v471 = vshll.u32 %v410, 16
      %v473 = vrot.slane %v471, 5
      %v474 = vsel %vm207, %v469, %v473
      %v476 = vshrl.u32 %v411, 16
      %v478 = vrot.slane %v476, 4
      %v479 = vshll.u32 %v411, 16
      %v481 = vrot.slane %v479, 5
      %v482 = vor.u32 %v478, %v481
      %v483 = vrot.slane %v482, 4
      %v485 = vshll.u32 %v412, 16
      %v487 = vrot.slane %v485, 5
      %v488 = vsel %vm207, %v483, %v487
      %v490 = vshrl.u32 %v413, 16
      %v492 = vrot.slane %v490, 4
      %v493 = vshll.u32 %v413, 16
      %v495 = vrot.slane %v493, 5
      %v496 = vor.u32 %v492, %v495
      %v497 = vrot.slane %v496, 4
      %v499 = vshll.u32 %v414, 16
      %v501 = vrot.slane %v499, 5
      %v502 = vsel %vm207, %v497, %v501
      %v504 = vshrl.u32 %v415, 16
      %v506 = vrot.slane %v504, 4
      %v507 = vshll.u32 %v415, 16
      %v509 = vrot.slane %v507, 5
      %v510 = vor.u32 %v506, %v509
      %v511 = vrot.slane %v510, 4
      %v513 = vshll.u32 %v416, 16
      %v515 = vrot.slane %v513, 5
      %v516 = vsel %vm207, %v511, %v515
      %v518 = vshrl.u32 %v417, 16
      %v520 = vrot.slane %v518, 4
      %v521 = vshll.u32 %v417, 16
      %v523 = vrot.slane %v521, 5
      %v524 = vor.u32 %v520, %v523
      %v525 = vrot.slane %v524, 4
      %v527 = vshll.u32 %v418, 16
      %v529 = vrot.slane %v527, 5
      %v530 = vsel %vm207, %v525, %v529
      %531 = vrot.lane.b32.xlu0 %v432, 48
      %v532 = vpop.permute.xlu0 %531
      %533 = vrot.lane.b32.xlu0 %v446, 48
      %v534 = vpop.permute.xlu0 %533
      %535 = vrot.lane.b32.xlu0 %v460, 48
      %v536 = vpop.permute.xlu0 %535
      %537 = vrot.lane.b32.xlu0 %v474, 48
      %v538 = vpop.permute.xlu0 %537
      %539 = vrot.lane.b32.xlu0 %v488, 48
      %v540 = vpop.permute.xlu0 %539
      %541 = vrot.lane.b32.xlu0 %v502, 48
      %v542 = vpop.permute.xlu0 %541
      %543 = vrot.lane.b32.xlu0 %v516, 48
      %v544 = vpop.permute.xlu0 %543
      %545 = vrot.lane.b32.xlu0 %v530, 48
      %v546 = vpop.permute.xlu0 %545
      %vm555 = vcmask 519552
      %556 = vst.msk [vmem:[#allocation2] sm:$0xf] %vm555, %v532
      %557 = vst.msk [vmem:[#allocation2 + $0x4] sm:$0xf] %vm555, %v534
      %558 = vst.msk [vmem:[#allocation2 + $0x8] sm:$0xf] %vm555, %v536
      %559 = vst.msk [vmem:[#allocation2 + $0xc] sm:$0xf] %vm555, %v538
      %560 = vst.msk [vmem:[#allocation2 + $0x10] sm:$0xf] %vm555, %v540
      %561 = vst.msk [vmem:[#allocation2 + $0x14] sm:$0xf] %vm555, %v542
      %562 = vst.msk [vmem:[#allocation2 + $0x18] sm:$0xf] %vm555, %v544
      %563 = vst.msk [vmem:[#allocation2 + $0x1c] sm:$0xf] %vm555, %v546
      %v564 = vld [vmem:[#allocation2] sm:$0xf]
      %v565 = vld [vmem:[#allocation2 + $0x4] sm:$0xf]
      %v566 = vld [vmem:[#allocation2 + $0x8] sm:$0xf]
      %v567 = vld [vmem:[#allocation2 + $0xc] sm:$0xf]
      %v568 = vld [vmem:[#allocation2 + $0x10] sm:$0xf]
      %v569 = vld [vmem:[#allocation2 + $0x14] sm:$0xf]
      %v570 = vld [vmem:[#allocation2 + $0x18] sm:$0xf]
      %v571 = vld [vmem:[#allocation2 + $0x1c] sm:$0xf]
      %v572 = vld [vmem:[%s1] sm:$0xf]
      %v573 = vld [vmem:[%s1 + $0x4] sm:$0xf]
      %v574 = vld [vmem:[%s1 + $0x8] sm:$0xf]
      %v575 = vld [vmem:[%s1 + $0xc] sm:$0xf]
      %v576 = vld [vmem:[%s1 + $0x10] sm:$0xf]
      %v577 = vld [vmem:[%s1 + $0x14] sm:$0xf]
      %v578 = vld [vmem:[%s1 + $0x18] sm:$0xf]
      %v579 = vld [vmem:[%s1 + $0x1c] sm:$0xf]
      %v580 = vld [vmem:[%s2] sm:$0x1]
      %v582 = vlaneseq
      %v583 = vshrl.u32 %v582, 7
      %v584 = vsub.s32 0, %v583
      %v585 = vrot.slane %v580, %v584
      %v595 = vunpack.c.l.b16 %v564
      %v596 = vunpack.c.l.b16 %v565
      %v597 = vunpack.c.l.b16 %v566
      %v598 = vunpack.c.l.b16 %v567
      %v599 = vunpack.c.l.b16 %v568
      %v600 = vunpack.c.l.b16 %v569
      %v601 = vunpack.c.l.b16 %v570
      %v602 = vunpack.c.l.b16 %v571
      %v603 = vpack.c.b16 %v596, %v595
      %v604 = vpack.c.b16 %v598, %v597
      %v605 = vpack.c.b16 %v600, %v599
      %v606 = vpack.c.b16 %v602, %v601
      %v615 = vunpack.c.l.b16 %v572
      %v616 = vunpack.c.l.b16 %v573
      %v617 = vunpack.c.l.b16 %v574
      %v618 = vunpack.c.l.b16 %v575
      %v619 = vunpack.c.l.b16 %v576
      %v620 = vunpack.c.l.b16 %v577
      %v621 = vunpack.c.l.b16 %v578
      %v622 = vunpack.c.l.b16 %v579
      %v623 = vpack.c.b16 %v616, %v615
      %v624 = vpack.c.b16 %v618, %v617
      %v625 = vpack.c.b16 %v620, %v619
      %v626 = vpack.c.b16 %v622, %v621
      %vm631 = vcmask 523264
      %v633 = vsel %vm631, %v603, 0
      %v636 = vsel %vm631, %v604, 0
      %v639 = vsel %vm631, %v605, 0
      %v642 = vsel %vm631, %v606, 0
      %644 = vmatprep.subr.bf16.mxu0 0
      %645 = vmatpush1.bf16.msra.mxu0 %v623
      %646 = vmatprep.subr.bf16.mxu0 0
      %647 = vmatpush1.bf16.msra.mxu0 %v624
      %648 = vmatprep.subr.bf16.mxu0 0
      %649 = vmatpush1.bf16.msra.mxu0 %v625
      %650 = vmatprep.subr.bf16.mxu0 0
      %651 = vmatpush1.bf16.msra.mxu0 %v626
      %652 = vmatprep.subr.bf16.mxu0 0
      %653 = vmatpush1.bf16.msra.mxu0 0
      %654 = vmatprep.subr.bf16.mxu0 0
      %655 = vmatpush1.bf16.msra.mxu0 0
      %656 = vmatprep.subr.bf16.mxu0 0
      %657 = vmatpush1.bf16.msra.mxu0 0
      %658 = vmatprep.subr.bf16.mxu0 0
      %659 = vmatpush1.bf16.msra.mxu0 0
      %660 = vmatprep.subr.bf16.mxu0 0
      %661 = vmatpush1.bf16.msra.mxu0 0
      %662 = vmatprep.subr.bf16.mxu0 0
      %663 = vmatpush1.bf16.msra.mxu0 0
      %664 = vmatprep.subr.bf16.mxu0 0
      %665 = vmatpush1.bf16.msra.mxu0 0
      %666 = vmatprep.subr.bf16.mxu0 0
      %667 = vmatpush1.bf16.msra.mxu0 0
      %668 = vmatprep.subr.bf16.mxu0 0
      %669 = vmatpush1.bf16.msra.mxu0 0
      %670 = vmatprep.subr.bf16.mxu0 0
      %671 = vmatpush1.bf16.msra.mxu0 0
      %672 = vmatprep.subr.bf16.mxu0 0
      %673 = vmatpush1.bf16.msra.mxu0 0
      %674 = vmatprep.subr.bf16.mxu0 0
      %675 = vmatpush1.bf16.msra.mxu0 0
      %676 = vmatprep.mubr.bf16.mxu0 0
      %677 = vmatmul.mubr.bf16.gmra.mrb[0].mxu0 %v633
      %v678 = vpop.f32.mrb[0].mxu0
      %v679 = vadd.f32 %v585, %v678
      %v680 = vpop.f32.mrb[0].mxu0
      %v681 = vpop.f32.mrb[0].mxu0
      %v682 = vadd.f32 %v585, %v681
      %v683 = vpop.f32.mrb[0].mxu0
      %684 = vmatprep.mubr.bf16.mxu0 0
      %685 = vmatmul.mubr.bf16.gmra.mrb[0].mxu0 %v636
      %v686 = vpop.f32.mrb[0].mxu0
      %v687 = vadd.f32 %v585, %v686
      %v688 = vpop.f32.mrb[0].mxu0
      %v689 = vpop.f32.mrb[0].mxu0
      %v690 = vadd.f32 %v585, %v689
      %v691 = vpop.f32.mrb[0].mxu0
      %692 = vmatprep.mubr.bf16.mxu0 0
      %693 = vmatmul.mubr.bf16.gmra.mrb[0].mxu0 %v639
      %v694 = vpop.f32.mrb[0].mxu0
      %v695 = vadd.f32 %v585, %v694
      %v696 = vpop.f32.mrb[0].mxu0
      %v697 = vpop.f32.mrb[0].mxu0
      %v698 = vadd.f32 %v585, %v697
      %v699 = vpop.f32.mrb[0].mxu0
      %700 = vmatprep.mubr.bf16.mxu0 0
      %701 = vmatmul.mubr.bf16.gmra.mrb[0].mxu0 %v642
      %v702 = vpop.f32.mrb[0].mxu0
      %v703 = vadd.f32 %v585, %v702
      %v704 = vpop.f32.mrb[0].mxu0
      %v705 = vpop.f32.mrb[0].mxu0
      %v706 = vadd.f32 %v585, %v705
      %v707 = vpop.f32.mrb[0].mxu0
      %708 = vdwg.mxu0
      %v709 = vmax.f32 %v679, 0.0
      %v710 = vmax.f32 %v682, 0.0
      %v711 = vmax.f32 %v687, 0.0
      %v712 = vmax.f32 %v690, 0.0
      %v713 = vmax.f32 %v695, 0.0
      %v714 = vmax.f32 %v698, 0.0
      %v715 = vmax.f32 %v703, 0.0
      %v716 = vmax.f32 %v706, 0.0
      %v717 = vpack.c.bf16 %v710, %v709
      %v718 = vpack.c.bf16 %v712, %v711
      %v719 = vpack.c.bf16 %v714, %v713
      %v720 = vpack.c.bf16 %v716, %v715
      %v725 = vunpack.c.l.b16 %v717
      %v726 = vunpack.c.h.b16 %v717
      %v727 = vunpack.c.l.b16 %v718
      %v728 = vunpack.c.h.b16 %v718
      %v729 = vunpack.c.l.b16 %v719
      %v730 = vunpack.c.h.b16 %v719
      %v731 = vunpack.c.l.b16 %v720
      %v732 = vunpack.c.h.b16 %v720
      %v733 = vpack.c.b16 %v725, %v725
      %v734 = vpack.c.b16 %v726, %v726
      %v735 = vpack.c.b16 %v727, %v727
      %v736 = vpack.c.b16 %v728, %v728
      %v737 = vpack.c.b16 %v729, %v729
      %v738 = vpack.c.b16 %v730, %v730
      %v739 = vpack.c.b16 %v731, %v731
      %v740 = vpack.c.b16 %v732, %v732
      %749 = vst [vmem:[%s170] sm:$0xf] %v733
      %750 = vst [vmem:[%s170 + $0x4] sm:$0xf] %v734
      %751 = vst [vmem:[%s170 + $0x8] sm:$0xf] %v735
      %752 = vst [vmem:[%s170 + $0xc] sm:$0xf] %v736
      %753 = vst [vmem:[%s170 + $0x10] sm:$0xf] %v737
      %754 = vst [vmem:[%s170 + $0x14] sm:$0xf] %v738
      %755 = vst [vmem:[%s170 + $0x18] sm:$0xf] %v739
      %756 = vst [vmem:[%s170 + $0x1c] sm:$0xf] %v740
      %p757 = scmp.lt.s32.totalorder %s14, 1
      %s758 = scalar_select %p757, %s14, 1
      %s759 = smul.addr %s758, 8
      %s760 = smul.addr %s759, 4
      %s761 = scalar_lea.vmem %s3, %s760
      // Predicated region
      $region33: #{_unnamed_function_.3} parent=31 // pred_check
        %p762 = pneg %p100
      $region34: #{_unnamed_function_.3} parent=31 // pred_check_branch
        %764 = sbr.rel (%p762) target = $region36
      $region35: #{_unnamed_function_.3} parent=31 // pred_region
        _
      $region36: #{_unnamed_function_.3} parent=31 // pred_fallthru
        _
    $region32: #{_unnamed_function_.3} parent=5 // pred_fallthru
      _
    %p765 = scmp.le.s32.totalorder 2, %s9
    // Predicated region
    $region37: #{_unnamed_function_.3} parent=5 // pred_check
      %p766 = pneg %p765
    $region38: #{_unnamed_function_.3} parent=5 // pred_check_branch
      %768 = sbr.rel (%p766) target = $region40
    $region39: #{_unnamed_function_.3} parent=5 // pred_region
      %s769 = ssub.s32 %s9, 2
      // Predicated region
      $region41: #{_unnamed_function_.3} parent=39 // pred_check
        %p770 = pneg %p106
      $region42: #{_unnamed_function_.3} parent=39 // pred_check_branch
        %772 = sbr.rel (%p770) target = $region44
      $region43: #{_unnamed_function_.3} parent=39 // pred_region
        %p773 = scmp.lt.s32.totalorder %s15, 1
        %s774 = scalar_select %p773, %s15, 1
        %s775 = smul.addr %s774, 8
        %s776 = smul.addr %s775, 4
        %s777 = scalar_lea.vmem %s3, %s776
      $region44: #{_unnamed_function_.3} parent=39 // pred_fallthru
        _
    $region40: #{_unnamed_function_.3} parent=5 // pred_fallthru
      _
  $region6: #{_unnamed_function_.3} parent=0 // loop_footer
    %s13 = sadd.s32 1, %s9
  $region7: #{_unnamed_function_.3} parent=0 // loop_footer_branch
    %8 = sbr.rel target = $region3
  $region8: #{_unnamed_function_.3} parent=0 // loop_exit
    _

// kernel: _unnamed_function_.5
$region0: #{_unnamed_function_.5}
  #allocation0 [shape = 'u32[]', space=smem, size = 0x4, offset = 0x4, fixed_abs, tag = 'smem constant byte address 0x4 - core index']
  #allocation1 [shape = 'u32[144,128]{1,0:T(1,128)}', space=vmem, size = 0x12000, scoped, tag = 'internal scratch']
  #allocation2 [shape = 'bf16[8,8,1152]{2,1,0:T(8,128)(2,1)}', space=vmem, size = 0x24000, scoped, tag = 'scratch operand']
  %s0 = inlined_call_operand.vmem [shape: bf16[2,10,10,128], index: 0, kind: input, shape index: {}]
  %s1 = inlined_call_operand.vmem [shape: bf16[1152,128], index: 1, kind: input, shape index: {}]
  %s2 = inlined_call_operand.vmem [shape: f32[1,128], index: 2, kind: input, shape index: {}]
  %s3 = inlined_call_operand.vmem [shape: bf16[2,64,128], index: 3, kind: input, shape index: {}]
  %s4 = inlined_call_operand.vmem [shape: bf16[2,64,128], index: 4, kind: output, shape index: {}]
  %s5 = sld [smem:[#allocation0]]
  $region49: #{_unnamed_function_.5} parent=0
    _
  %s7 = ssub.s32 1, %s5
  %s8 = scalar_select 0, %s7, %s5
  loop: start=0, step=1, limit=4
  $region2: #{_unnamed_function_.5} parent=0 // loop_pre_header
    _
  $region3: #{_unnamed_function_.5} parent=0 // loop_header
    %s10 = sphi 0, %s14
    %p11 = scmp.ge.s32.totalorder %s10, 4
    %s20 = sphi 0, %s22
    %s23 = sphi 0, %s20
    %s24 = sphi 0, %s23
    %s40 = sphi 0, %s24
    %s44 = sphi 0, %s44
    %s46 = sphi 0, %s44
    %s47 = sphi 0, %s46
    %s61 = sphi 0, %s47
    %s65 = sphi 0, %s65
    %s67 = sphi 0, %s65
    %s68 = sphi 0, %s67
    %s82 = sphi 0, %s68
    %s88 = sphi 0, %s90
    %s91 = sphi 0, %s88
    %s92 = sphi 0, %s91
    %s108 = sphi 0, %s92
    %s114 = sphi 0, %s116
    %s117 = sphi 0, %s114
    %s118 = sphi 0, %s117
    %s134 = sphi 0, %s118
  $region4: #{_unnamed_function_.5} parent=0 // loop_header_branch
    %13 = sbr.rel (%p11) target = $region8
  $region5: #{_unnamed_function_.5} parent=0 // loop_body
    %s15 = ssub.s32 %s10, 1
    %s16 = ssub.s32 %s10, 2
    %s17 = sadd.s32 %s10, 1
    %s18 = ssub.s32 %s10, %s17
    %p19 = scmp.eq.s32.totalorder %s18, 0
    %s21 = sadd.s32 %s20, 1
    %s22 = scalar_select %p19, %s20, %s21
    %p25 = pneg %p19
    %p26 = scmp.eq.s32.totalorder %s10, 1
    %p27 = por %p25, %p26
    %p28 = scmp.ne.s32.totalorder %s20, %s23
    %p29 = scmp.eq.s32.totalorder %s10, 0
    %p30 = por %p28, %p29
    %p31 = scmp.ne.s32.totalorder %s20, %s23
    %p32 = scmp.eq.s32.totalorder %s15, 1
    %p33 = por %p31, %p32
    %p34 = scmp.ne.s32.totalorder %s23, %s24
    %p35 = scmp.eq.s32.totalorder %s15, 0
    %p36 = por %p34, %p35
    %p37 = scmp.ne.s32.totalorder %s23, %s24
    %p38 = scmp.eq.s32.totalorder %s16, 1
    %p39 = por %p37, %p38
    %p41 = scmp.ne.s32.totalorder %s24, %s40
    %p42 = scmp.eq.s32.totalorder %s16, 0
    %p43 = por %p41, %p42
    %s45 = sadd.s32 %s44, 1
    %p48 = scmp.eq.s32.totalorder %s10, 1
    %p49 = scmp.ne.s32.totalorder %s44, %s46
    %p50 = scmp.eq.s32.totalorder %s10, 0
    %p51 = por %p49, %p50
    %p52 = scmp.ne.s32.totalorder %s44, %s46
    %p53 = scmp.eq.s32.totalorder %s15, 1
    %p54 = por %p52, %p53
    %p55 = scmp.ne.s32.totalorder %s46, %s47
    %p56 = scmp.eq.s32.totalorder %s15, 0
    %p57 = por %p55, %p56
    %p58 = scmp.ne.s32.totalorder %s46, %s47
    %p59 = scmp.eq.s32.totalorder %s16, 1
    %p60 = por %p58, %p59
    %p62 = scmp.ne.s32.totalorder %s47, %s61
    %p63 = scmp.eq.s32.totalorder %s16, 0
    %p64 = por %p62, %p63
    %s66 = sadd.s32 %s65, 1
    %p69 = scmp.eq.s32.totalorder %s10, 1
    %p70 = scmp.ne.s32.totalorder %s65, %s67
    %p71 = scmp.eq.s32.totalorder %s10, 0
    %p72 = por %p70, %p71
    %p73 = scmp.ne.s32.totalorder %s65, %s67
    %p74 = scmp.eq.s32.totalorder %s15, 1
    %p75 = por %p73, %p74
    %p76 = scmp.ne.s32.totalorder %s67, %s68
    %p77 = scmp.eq.s32.totalorder %s15, 0
    %p78 = por %p76, %p77
    %p79 = scmp.ne.s32.totalorder %s67, %s68
    %p80 = scmp.eq.s32.totalorder %s16, 1
    %p81 = por %p79, %p80
    %p83 = scmp.ne.s32.totalorder %s68, %s82
    %p84 = scmp.eq.s32.totalorder %s16, 0
    %p85 = por %p83, %p84
    %s86 = ssub.s32 %s10, %s17
    %p87 = scmp.eq.s32.totalorder %s86, 0
    %s89 = sadd.s32 %s88, 1
    %s90 = scalar_select %p87, %s88, %s89
    %p93 = pneg %p87
    %p94 = scmp.eq.s32.totalorder %s10, 1
    %p95 = por %p93, %p94
    %p96 = scmp.ne.s32.totalorder %s88, %s91
    %p97 = scmp.eq.s32.totalorder %s10, 0
    %p98 = por %p96, %p97
    %p99 = scmp.ne.s32.totalorder %s88, %s91
    %p100 = scmp.eq.s32.totalorder %s15, 1
    %p101 = por %p99, %p100
    %p102 = scmp.ne.s32.totalorder %s91, %s92
    %p103 = scmp.eq.s32.totalorder %s15, 0
    %p104 = por %p102, %p103
    %p105 = scmp.ne.s32.totalorder %s91, %s92
    %p106 = scmp.eq.s32.totalorder %s16, 1
    %p107 = por %p105, %p106
    %p109 = scmp.ne.s32.totalorder %s92, %s108
    %p110 = scmp.eq.s32.totalorder %s16, 0
    %p111 = por %p109, %p110
    %s112 = ssub.s32 %s10, %s17
    %p113 = scmp.eq.s32.totalorder %s112, 0
    %s115 = sadd.s32 %s114, 1
    %s116 = scalar_select %p113, %s114, %s115
    %p119 = pneg %p113
    %p120 = scmp.eq.s32.totalorder %s10, 1
    %p121 = por %p119, %p120
    %p122 = scmp.ne.s32.totalorder %s114, %s117
    %p123 = scmp.eq.s32.totalorder %s10, 0
    %p124 = por %p122, %p123
    %p125 = scmp.ne.s32.totalorder %s114, %s117
    %p126 = scmp.eq.s32.totalorder %s15, 1
    %p127 = por %p125, %p126
    %p128 = scmp.ne.s32.totalorder %s117, %s118
    %p129 = scmp.eq.s32.totalorder %s15, 0
    %p130 = por %p128, %p129
    %p131 = scmp.ne.s32.totalorder %s117, %s118
    %p132 = scmp.eq.s32.totalorder %s16, 1
    %p133 = por %p131, %p132
    %p135 = scmp.ne.s32.totalorder %s118, %s134
    %p136 = scmp.eq.s32.totalorder %s16, 0
    %p137 = por %p135, %p136
    %p138 = scmp.le.s32.totalorder 1, %s10
    %p139 = scmp.lt.s32.totalorder %s10, 3
    %p140 = pnand %p138, %p139
    %p141 = pneg %p140
    // Predicated region
    $region9: #{_unnamed_function_.5} parent=5 // pred_check
      _
    $region10: #{_unnamed_function_.5} parent=5 // pred_check_branch
      %143 = sbr.rel (%p140) target = $region12
    $region11: #{_unnamed_function_.5} parent=5 // pred_region
      %s144 = ssub.s32 %s10, 1
      // Predicated region
      $region13: #{_unnamed_function_.5} parent=11 // pred_check
        %p145 = pneg %p57
      $region14: #{_unnamed_function_.5} parent=11 // pred_check_branch
        %147 = sbr.rel (%p145) target = $region16
      $region15: #{_unnamed_function_.5} parent=11 // pred_region
        _
      $region16: #{_unnamed_function_.5} parent=11 // pred_fallthru
        _
      // Predicated region
      $region17: #{_unnamed_function_.5} parent=11 // pred_check
        %p148 = pneg %p78
      $region18: #{_unnamed_function_.5} parent=11 // pred_check_branch
        %150 = sbr.rel (%p148) target = $region20
      $region19: #{_unnamed_function_.5} parent=11 // pred_region
        _
      $region20: #{_unnamed_function_.5} parent=11 // pred_fallthru
        _
    $region12: #{_unnamed_function_.5} parent=5 // pred_fallthru
      _
    %p151 = scmp.lt.s32.totalorder %s10, 2
    // Predicated region
    $region21: #{_unnamed_function_.5} parent=5 // pred_check
      %p152 = pneg %p151
    $region22: #{_unnamed_function_.5} parent=5 // pred_check_branch
      %154 = sbr.rel (%p152) target = $region24
    $region23: #{_unnamed_function_.5} parent=5 // pred_region
      // Predicated region
      $region25: #{_unnamed_function_.5} parent=23 // pred_check
        %p155 = pneg %p30
      $region26: #{_unnamed_function_.5} parent=23 // pred_check_branch
        %157 = sbr.rel (%p155) target = $region28
      $region27: #{_unnamed_function_.5} parent=23 // pred_region
        %p158 = scmp.lt.s32.totalorder %s10, 1
        %s159 = scalar_select %p158, %s10, 1
        %s160 = smul.addr %s159, 20
        %s161 = smul.addr %s160, 4
        %s162 = scalar_lea.vmem %s0, %s161
      $region28: #{_unnamed_function_.5} parent=23 // pred_fallthru
        _
      // Predicated region
      $region29: #{_unnamed_function_.5} parent=23 // pred_check
        %p163 = pneg %p98
      $region30: #{_unnamed_function_.5} parent=23 // pred_check_branch
        %165 = sbr.rel (%p163) target = $region32
      $region31: #{_unnamed_function_.5} parent=23 // pred_region
        %p166 = scmp.lt.s32.totalorder %s10, 1
        %s167 = scalar_select %p166, %s10, 1
        %s168 = smul.addr %s167, 8
        %s169 = smul.addr %s168, 4
        %s170 = scalar_lea.vmem %s3, %s169
      $region32: #{_unnamed_function_.5} parent=23 // pred_fallthru
        _
    $region24: #{_unnamed_function_.5} parent=5 // pred_fallthru
      _
    %p171 = scmp.le.s32.totalorder 1, %s10
    %p172 = scmp.lt.s32.totalorder %s10, 3
    %p173 = pnand %p171, %p172
    %p174 = pneg %p173
    // Predicated region
    $region33: #{_unnamed_function_.5} parent=5 // pred_check
      _
    $region34: #{_unnamed_function_.5} parent=5 // pred_check_branch
      %176 = sbr.rel (%p173) target = $region36
    $region35: #{_unnamed_function_.5} parent=5 // pred_region
      %s177 = ssub.s32 %s10, 1
      %p178 = scmp.lt.s32.totalorder %s15, 1
      %s179 = scalar_select %p178, %s15, 1
      %s180 = smul.addr %s179, 20
      %s181 = smul.addr %s180, 4
      %s182 = scalar_lea.vmem %s0, %s181
      %p183 = pneg %p36
      %p184 = pneg %p33
      %p185 = pneg %p57
      %p186 = pneg %p54
      %p187 = pneg %p78
      %p188 = pneg %p75
      %p189 = scmp.lt.s32.totalorder %s15, 1
      %s190 = scalar_select %p189, %s15, 1
      %s191 = smul.addr %s190, 8
      %s192 = smul.addr %s191, 4
      %s193 = scalar_lea.vmem %s3, %s192
      %p194 = pneg %p104
      %p195 = pneg %p101
      %p196 = pneg %p130
      %p197 = pneg %p127
      %p198 = scmp.lt.s32.totalorder %s15, 1
      %s199 = scalar_select %p198, %s15, 1
      %s200 = smul.addr %s199, 8
      %s201 = smul.addr %s200, 4
      %s202 = scalar_lea.vmem %s4, %s201
      %p203 = scmp.lt.s32.totalorder %s15, 1
      %s204 = scalar_select %p203, %s15, 1
      %s205 = smul.addr %s204, 20
      %s206 = smul.addr %s205, 4
      %s207 = scalar_lea.vmem %s0, %s206
      %p208 = scmp.lt.s32.totalorder %s15, 1
      %s209 = scalar_select %p208, %s15, 1
      %s210 = smul.addr %s209, 8
      %s211 = smul.addr %s210, 4
      %s212 = scalar_lea.vmem %s3, %s211
      %p213 = scmp.lt.s32.totalorder %s15, 1
      %s214 = scalar_select %p213, %s15, 1
      %s215 = smul.addr %s214, 8
      %s216 = smul.addr %s215, 4
      %s217 = scalar_lea.vmem %s4, %s216
      %v219 = vld [vmem:[%s207] sm:$0xf]
      %v220 = vld [vmem:[%s207 + $0x8] sm:$0xf]
      %v221 = vld [vmem:[%s207 + $0x10] sm:$0xf]
      %v222 = vld [vmem:[%s207 + $0x18] sm:$0xf]
      %v223 = vld [vmem:[%s207 + $0x20] sm:$0xf]
      %v224 = vld [vmem:[%s207 + $0x28] sm:$0xf]
      %v225 = vld [vmem:[%s207 + $0x30] sm:$0xf]
      %v226 = vld [vmem:[%s207 + $0x38] sm:$0xf]
      %227 = vst [vmem:[#allocation2] sm:$0xf] %v219
      %228 = vst [vmem:[#allocation2 + $0x24] sm:$0xf] %v220
      %229 = vst [vmem:[#allocation2 + $0x48] sm:$0xf] %v221
      %230 = vst [vmem:[#allocation2 + $0x6c] sm:$0xf] %v222
      %231 = vst [vmem:[#allocation2 + $0x90] sm:$0xf] %v223
      %232 = vst [vmem:[#allocation2 + $0xb4] sm:$0xf] %v224
      %233 = vst [vmem:[#allocation2 + $0xd8] sm:$0xf] %v225
      %234 = vst [vmem:[#allocation2 + $0xfc] sm:$0xf] %v226
      %v235 = vld [vmem:[%s207] sm:$0xf]
      %v236 = vld [vmem:[%s207 + $0x4] sm:$0x1]
      %v237 = vld [vmem:[%s207 + $0x8] sm:$0xf]
      %v238 = vld [vmem:[%s207 + $0xc] sm:$0x1]
      %v239 = vld [vmem:[%s207 + $0x10] sm:$0xf]
      %v240 = vld [vmem:[%s207 + $0x14] sm:$0x1]
      %v241 = vld [vmem:[%s207 + $0x18] sm:$0xf]
      %v242 = vld [vmem:[%s207 + $0x1c] sm:$0x1]
      %v243 = vld [vmem:[%s207 + $0x20] sm:$0xf]
      %v244 = vld [vmem:[%s207 + $0x24] sm:$0x1]
      %v245 = vld [vmem:[%s207 + $0x28] sm:$0xf]
      %v246 = vld [vmem:[%s207 + $0x2c] sm:$0x1]
      %v247 = vld [vmem:[%s207 + $0x30] sm:$0xf]
      %v248 = vld [vmem:[%s207 + $0x34] sm:$0x1]
      %v249 = vld [vmem:[%s207 + $0x38] sm:$0xf]
      %v250 = vld [vmem:[%s207 + $0x3c] sm:$0x1]
      %vm251 = vsmask.f32 3328
      %vm252 = vsmask.f32 7440
      %vm253 = vmor %vm251, %vm252
      %v255 = vshrl.u32 %v235, 16
      %v257 = vrot.slane %v255, 4
      %v258 = vshll.u32 %v235, 16
      %v260 = vrot.slane %v258, 5
      %v261 = vor.u32 %v257, %v260
      %v262 = vrot.slane %v261, 4
      %v264 = vshll.u32 %v236, 16
      %v266 = vrot.slane %v264, 5
      %v267 = vsel %vm253, %v262, %v266
      %v269 = vshrl.u32 %v237, 16
      %v271 = vrot.slane %v269, 4
      %v272 = vshll.u32 %v237, 16
      %v274 = vrot.slane %v272, 5
      %v275 = vor.u32 %v271, %v274
      %v276 = vrot.slane %v275, 4
      %v278 = vshll.u32 %v238, 16
      %v280 = vrot.slane %v278, 5
      %v281 = vsel %vm253, %v276, %v280
      %v283 = vshrl.u32 %v239, 16
      %v285 = vrot.slane %v283, 4
      %v286 = vshll.u32 %v239, 16
      %v288 = vrot.slane %v286, 5
      %v289 = vor.u32 %v285, %v288
      %v290 = vrot.slane %v289, 4
      %v292 = vshll.u32 %v240, 16
      %v294 = vrot.slane %v292, 5
      %v295 = vsel %vm253, %v290, %v294
      %v297 = vshrl.u32 %v241, 16
      %v299 = vrot.slane %v297, 4
      %v300 = vshll.u32 %v241, 16
      %v302 = vrot.slane %v300, 5
      %v303 = vor.u32 %v299, %v302
      %v304 = vrot.slane %v303, 4
      %v306 = vshll.u32 %v242, 16
      %v308 = vrot.slane %v306, 5
      %v309 = vsel %vm253, %v304, %v308
      %v311 = vshrl.u32 %v243, 16
      %v313 = vrot.slane %v311, 4
      %v314 = vshll.u32 %v243, 16
      %v316 = vrot.slane %v314, 5
      %v317 = vor.u32 %v313, %v316
      %v318 = vrot.slane %v317, 4
      %v320 = vshll.u32 %v244, 16
      %v322 = vrot.slane %v320, 5
      %v323 = vsel %vm253, %v318, %v322
      %v325 = vshrl.u32 %v245, 16
      %v327 = vrot.slane %v325, 4
      %v328 = vshll.u32 %v245, 16
      %v330 = vrot.slane %v328, 5
      %v331 = vor.u32 %v327, %v330
      %v332 = vrot.slane %v331, 4
      %v334 = vshll.u32 %v246, 16
      %v336 = vrot.slane %v334, 5
      %v337 = vsel %vm253, %v332, %v336
      %v339 = vshrl.u32 %v247, 16
      %v341 = vrot.slane %v339, 4
      %v342 = vshll.u32 %v247, 16
      %v344 = vrot.slane %v342, 5
      %v345 = vor.u32 %v341, %v344
      %v346 = vrot.slane %v345, 4
      %v348 = vshll.u32 %v248, 16
      %v350 = vrot.slane %v348, 5
      %v351 = vsel %vm253, %v346, %v350
      %v353 = vshrl.u32 %v249, 16
      %v355 = vrot.slane %v353, 4
      %v356 = vshll.u32 %v249, 16
      %v358 = vrot.slane %v356, 5
      %v359 = vor.u32 %v355, %v358
      %v360 = vrot.slane %v359, 4
      %v362 = vshll.u32 %v250, 16
      %v364 = vrot.slane %v362, 5
      %v365 = vsel %vm253, %v360, %v364
      %374 = vst [vmem:[#allocation2 + $0x4] sm:$0xf] %v267
      %375 = vst [vmem:[#allocation2 + $0x28] sm:$0xf] %v281
      %376 = vst [vmem:[#allocation2 + $0x4c] sm:$0xf] %v295
      %377 = vst [vmem:[#allocation2 + $0x70] sm:$0xf] %v309
      %378 = vst [vmem:[#allocation2 + $0x94] sm:$0xf] %v323
      %379 = vst [vmem:[#allocation2 + $0xb8] sm:$0xf] %v337
      %380 = vst [vmem:[#allocation2 + $0xdc] sm:$0xf] %v351
      %381 = vst [vmem:[#allocation2 + $0x100] sm:$0xf] %v365
      %v382 = vld [vmem:[%s207] sm:$0xe]
      %v383 = vld [vmem:[%s207 + $0x4] sm:$0x1]
      %v384 = vld [vmem:[%s207 + $0x8] sm:$0xe]
      %v385 = vld [vmem:[%s207 + $0xc] sm:$0x1]
      %v386 = vld [vmem:[%s207 + $0x10] sm:$0xe]
      %v387 = vld [vmem:[%s207 + $0x14] sm:$0x1]
      %v388 = vld [vmem:[%s207 + $0x18] sm:$0xe]
      %v389 = vld [vmem:[%s207 + $0x1c] sm:$0x1]
      %v390 = vld [vmem:[%s207 + $0x20] sm:$0xe]
      %v391 = vld [vmem:[%s207 + $0x24] sm:$0x1]
      %v392 = vld [vmem:[%s207 + $0x28] sm:$0xe]
      %v393 = vld [vmem:[%s207 + $0x2c] sm:$0x1]
      %v394 = vld [vmem:[%s207 + $0x30] sm:$0xe]
      %v395 = vld [vmem:[%s207 + $0x34] sm:$0x1]
      %v396 = vld [vmem:[%s207 + $0x38] sm:$0xe]
      %v397 = vld [vmem:[%s207 + $0x3c] sm:$0x1]
      %vm414 = vcmask 1042432
      %vm415 = vcmask 1046532
      %vm416 = vmor %vm414, %vm415
      %v417 = vrot.slane %v382, 5
      %v418 = vrot.slane %v417, 4
      %v419 = vrot.slane %v383, 5
      %v420 = vsel %vm416, %v418, %v419
      %v421 = vrot.slane %v384, 5
      %v422 = vrot.slane %v421, 4
      %v423 = vrot.slane %v385, 5
      %v424 = vsel %vm416, %v422, %v423
      %v425 = vrot.slane %v386, 5
      %v426 = vrot.slane %v425, 4
      %v427 = vrot.slane %v387, 5
      %v428 = vsel %vm416, %v426, %v427
      %v429 = vrot.slane %v388, 5
      %v430 = vrot.slane %v429, 4
      %v431 = vrot.slane %v389, 5
      %v432 = vsel %vm416, %v430, %v431
      %v433 = vrot.slane %v390, 5
      %v434 = vrot.slane %v433, 4
      %v435 = vrot.slane %v391, 5
      %v436 = vsel %vm416, %v434, %v435
      %v437 = vrot.slane %v392, 5
      %v438 = vrot.slane %v437, 4
      %v439 = vrot.slane %v393, 5
      %v440 = vsel %vm416, %v438, %v439
      %v441 = vrot.slane %v394, 5
      %v442 = vrot.slane %v441, 4
      %v443 = vrot.slane %v395, 5
      %v444 = vsel %vm416, %v442, %v443
      %v445 = vrot.slane %v396, 5
      %v446 = vrot.slane %v445, 4
      %v447 = vrot.slane %v397, 5
      %v448 = vsel %vm416, %v446, %v447
      %457 = vst [vmem:[#allocation2 + $0x8] sm:$0xf] %v420
      %458 = vst [vmem:[#allocation2 + $0x2c] sm:$0xf] %v424
      %459 = vst [vmem:[#allocation2 + $0x50] sm:$0xf] %v428
      %460 = vst [vmem:[#allocation2 + $0x74] sm:$0xf] %v432
      %461 = vst [vmem:[#allocation2 + $0x98] sm:$0xf] %v436
      %462 = vst [vmem:[#allocation2 + $0xbc] sm:$0xf] %v440
      %463 = vst [vmem:[#allocation2 + $0xe0] sm:$0xf] %v444
      %464 = vst [vmem:[#allocation2 + $0x104] sm:$0xf] %v448
      %s465 = scalar_lea.vmem %s207, 8
      %v466 = vld [vmem:[%s465] sm:$0xf]
      %v467 = vld [vmem:[%s465 + $0x8] sm:$0xf]
      %v468 = vld [vmem:[%s465 + $0x10] sm:$0xf]
      %v469 = vld [vmem:[%s465 + $0x18] sm:$0xf]
      %v470 = vld [vmem:[%s465 + $0x20] sm:$0xf]
      %v471 = vld [vmem:[%s465 + $0x28] sm:$0xf]
      %v472 = vld [vmem:[%s465 + $0x30] sm:$0xf]
      %v473 = vld [vmem:[%s465 + $0x38] sm:$0xf]
      %474 = vst [vmem:[#allocation2 + $0xc] sm:$0xf] %v466
      %475 = vst [vmem:[#allocation2 + $0x30] sm:$0xf] %v467
      %476 = vst [vmem:[#allocation2 + $0x54] sm:$0xf] %v468
      %477 = vst [vmem:[#allocation2 + $0x78] sm:$0xf] %v469
      %478 = vst [vmem:[#allocation2 + $0x9c] sm:$0xf] %v470
      %479 = vst [vmem:[#allocation2 + $0xc0] sm:$0xf] %v471
      %480 = vst [vmem:[#allocation2 + $0xe4] sm:$0xf] %v472
      %481 = vst [vmem:[#allocation2 + $0x108] sm:$0xf] %v473
      %v482 = vld [vmem:[%s465] sm:$0xf]
      %v483 = vld [vmem:[%s465 + $0x4] sm:$0x1]
      %v484 = vld [vmem:[%s465 + $0x8] sm:$0xf]
      %v485 = vld [vmem:[%s465 + $0xc] sm:$0x1]
      %v486 = vld [vmem:[%s465 + $0x10] sm:$0xf]
      %v487 = vld [vmem:[%s465 + $0x14] sm:$0x1]
      %v488 = vld [vmem:[%s465 + $0x18] sm:$0xf]
      %v489 = vld [vmem:[%s465 + $0x1c] sm:$0x1]
      %v490 = vld [vmem:[%s465 + $0x20] sm:$0xf]
      %v491 = vld [vmem:[%s465 + $0x24] sm:$0x1]
      %v492 = vld [vmem:[%s465 + $0x28] sm:$0xf]
      %v493 = vld [vmem:[%s465 + $0x2c] sm:$0x1]
      %v494 = vld [vmem:[%s465 + $0x30] sm:$0xf]
      %v495 = vld [vmem:[%s465 + $0x34] sm:$0x1]
      %v496 = vld [vmem:[%s465 + $0x38] sm:$0xf]
      %v497 = vld [vmem:[%s465 + $0x3c] sm:$0x1]
      %v499 = vshrl.u32 %v482, 16
      %v501 = vrot.slane %v499, 4
      %v502 = vshll.u32 %v482, 16
      %v504 = vrot.slane %v502, 5
      %v505 = vor.u32 %v501, %v504
      %v506 = vrot.slane %v505, 4
      %v508 = vshll.u32 %v483, 16
      %v510 = vrot.slane %v508, 5
      %v511 = vsel %vm253, %v506, %v510
      %v513 = vshrl.u32 %v484, 16
      %v515 = vrot.slane %v513, 4
      %v516 = vshll.u32 %v484, 16
      %v518 = vrot.slane %v516, 5
      %v519 = vor.u32 %v515, %v518
      %v520 = vrot.slane %v519, 4
      %v522 = vshll.u32 %v485, 16
      %v524 = vrot.slane %v522, 5
      %v525 = vsel %vm253, %v520, %v524
      %v527 = vshrl.u32 %v486, 16
      %v529 = vrot.slane %v527, 4
      %v530 = vshll.u32 %v486, 16
      %v532 = vrot.slane %v530, 5
      %v533 = vor.u32 %v529, %v532
      %v534 = vrot.slane %v533, 4
      %v536 = vshll.u32 %v487, 16
      %v538 = vrot.slane %v536, 5
      %v539 = vsel %vm253, %v534, %v538
      %v541 = vshrl.u32 %v488, 16
      %v543 = vrot.slane %v541, 4
      %v544 = vshll.u32 %v488, 16
      %v546 = vrot.slane %v544, 5
      %v547 = vor.u32 %v543, %v546
      %v548 = vrot.slane %v547, 4
      %v550 = vshll.u32 %v489, 16
      %v552 = vrot.slane %v550, 5
      %v553 = vsel %vm253, %v548, %v552
      %v555 = vshrl.u32 %v490, 16
      %v557 = vrot.slane %v555, 4
      %v558 = vshll.u32 %v490, 16
      %v560 = vrot.slane %v558, 5
      %v561 = vor.u32 %v557, %v560
      %v562 = vrot.slane %v561, 4
      %v564 = vshll.u32 %v491, 16
      %v566 = vrot.slane %v564, 5
      %v567 = vsel %vm253, %v562, %v566
      %v569 = vshrl.u32 %v492, 16
      %v571 = vrot.slane %v569, 4
      %v572 = vshll.u32 %v492, 16
      %v574 = vrot.slane %v572, 5
      %v575 = vor.u32 %v571, %v574
      %v576 = vrot.slane %v575, 4
      %v578 = vshll.u32 %v493, 16
      %v580 = vrot.slane %v578, 5
      %v581 = vsel %vm253, %v576, %v580
      %v583 = vshrl.u32 %v494, 16
      %v585 = vrot.slane %v583, 4
      %v586 = vshll.u32 %v494, 16
      %v588 = vrot.slane %v586, 5
      %v589 = vor.u32 %v585, %v588
      %v590 = vrot.slane %v589, 4
      %v592 = vshll.u32 %v495, 16
      %v594 = vrot.slane %v592, 5
      %v595 = vsel %vm253, %v590, %v594
      %v597 = vshrl.u32 %v496, 16
      %v599 = vrot.slane %v597, 4
      %v600 = vshll.u32 %v496, 16
      %v602 = vrot.slane %v600, 5
      %v603 = vor.u32 %v599, %v602
      %v604 = vrot.slane %v603, 4
      %v606 = vshll.u32 %v497, 16
      %v608 = vrot.slane %v606, 5
      %v609 = vsel %vm253, %v604, %v608
      %618 = vst [vmem:[#allocation2 + $0x10] sm:$0xf] %v511
      %619 = vst [vmem:[#allocation2 + $0x34] sm:$0xf] %v525
      %620 = vst [vmem:[#allocation2 + $0x58] sm:$0xf] %v539
      %621 = vst [vmem:[#allocation2 + $0x7c] sm:$0xf] %v553
      %622 = vst [vmem:[#allocation2 + $0xa0] sm:$0xf] %v567
      %623 = vst [vmem:[#allocation2 + $0xc4] sm:$0xf] %v581
      %624 = vst [vmem:[#allocation2 + $0xe8] sm:$0xf] %v595
      %625 = vst [vmem:[#allocation2 + $0x10c] sm:$0xf] %v609
      %v626 = vld [vmem:[%s465] sm:$0xe]
      %v627 = vld [vmem:[%s465 + $0x4] sm:$0x1]
      %v628 = vld [vmem:[%s465 + $0x8] sm:$0xe]
      %v629 = vld [vmem:[%s465 + $0xc] sm:$0x1]
      %v630 = vld [vmem:[%s465 + $0x10] sm:$0xe]
      %v631 = vld [vmem:[%s465 + $0x14] sm:$0x1]
      %v632 = vld [vmem:[%s465 + $0x18] sm:$0xe]
      %v633 = vld [vmem:[%s465 + $0x1c] sm:$0x1]
      %v634 = vld [vmem:[%s465 + $0x20] sm:$0xe]
      %v635 = vld [vmem:[%s465 + $0x24] sm:$0x1]
      %v636 = vld [vmem:[%s465 + $0x28] sm:$0xe]
      %v637 = vld [vmem:[%s465 + $0x2c] sm:$0x1]
      %v638 = vld [vmem:[%s465 + $0x30] sm:$0xe]
      %v639 = vld [vmem:[%s465 + $0x34] sm:$0x1]
      %v640 = vld [vmem:[%s465 + $0x38] sm:$0xe]
      %v641 = vld [vmem:[%s465 + $0x3c] sm:$0x1]
      %v658 = vrot.slane %v626, 5
      %v659 = vrot.slane %v658, 4
      %v660 = vrot.slane %v627, 5
      %v661 = vsel %vm416, %v659, %v660
      %v662 = vrot.slane %v628, 5
      %v663 = vrot.slane %v662, 4
      %v664 = vrot.slane %v629, 5
      %v665 = vsel %vm416, %v663, %v664
      %v666 = vrot.slane %v630, 5
      %v667 = vrot.slane %v666, 4
      %v668 = vrot.slane %v631, 5
      %v669 = vsel %vm416, %v667, %v668
      %v670 = vrot.slane %v632, 5
      %v671 = vrot.slane %v670, 4
      %v672 = vrot.slane %v633, 5
      %v673 = vsel %vm416, %v671, %v672
      %v674 = vrot.slane %v634, 5
      %v675 = vrot.slane %v674, 4
      %v676 = vrot.slane %v635, 5
      %v677 = vsel %vm416, %v675, %v676
      %v678 = vrot.slane %v636, 5
      %v679 = vrot.slane %v678, 4
      %v680 = vrot.slane %v637, 5
      %v681 = vsel %vm416, %v679, %v680
      %v682 = vrot.slane %v638, 5
      %v683 = vrot.slane %v682, 4
      %v684 = vrot.slane %v639, 5
      %v685 = vsel %vm416, %v683, %v684
      %v686 = vrot.slane %v640, 5
      %v687 = vrot.slane %v686, 4
      %v688 = vrot.slane %v641, 5
      %v689 = vsel %vm416, %v687, %v688
      %698 = vst [vmem:[#allocation2 + $0x14] sm:$0xf] %v661
      %699 = vst [vmem:[#allocation2 + $0x38] sm:$0xf] %v665
      %700 = vst [vmem:[#allocation2 + $0x5c] sm:$0xf] %v669
      %701 = vst [vmem:[#allocation2 + $0x80] sm:$0xf] %v673
      %702 = vst [vmem:[#allocation2 + $0xa4] sm:$0xf] %v677
      %703 = vst [vmem:[#allocation2 + $0xc8] sm:$0xf] %v681
      %704 = vst [vmem:[#allocation2 + $0xec] sm:$0xf] %v685
      %705 = vst [vmem:[#allocation2 + $0x110] sm:$0xf] %v689
      %s706 = scalar_lea.vmem %s207, 16
      %v707 = vld [vmem:[%s706] sm:$0xf]
      %v708 = vld [vmem:[%s706 + $0x8] sm:$0xf]
      %v709 = vld [vmem:[%s706 + $0x10] sm:$0xf]
      %v710 = vld [vmem:[%s706 + $0x18] sm:$0xf]
      %v711 = vld [vmem:[%s706 + $0x20] sm:$0xf]
      %v712 = vld [vmem:[%s706 + $0x28] sm:$0xf]
      %v713 = vld [vmem:[%s706 + $0x30] sm:$0xf]
      %v714 = vld [vmem:[%s706 + $0x38] sm:$0xf]
      %715 = vst [vmem:[#allocation2 + $0x18] sm:$0xf] %v707
      %716 = vst [vmem:[#allocation2 + $0x3c] sm:$0xf] %v708
      %717 = vst [vmem:[#allocation2 + $0x60] sm:$0xf] %v709
      %718 = vst [vmem:[#allocation2 + $0x84] sm:$0xf] %v710
      %719 = vst [vmem:[#allocation2 + $0xa8] sm:$0xf] %v711
      %720 = vst [vmem:[#allocation2 + $0xcc] sm:$0xf] %v712
      %721 = vst [vmem:[#allocation2 + $0xf0] sm:$0xf] %v713
      %722 = vst [vmem:[#allocation2 + $0x114] sm:$0xf] %v714
      %v723 = vld [vmem:[%s706] sm:$0xf]
      %v724 = vld [vmem:[%s706 + $0x4] sm:$0x1]
      %v725 = vld [vmem:[%s706 + $0x8] sm:$0xf]
      %v726 = vld [vmem:[%s706 + $0xc] sm:$0x1]
      %v727 = vld [vmem:[%s706 + $0x10] sm:$0xf]
      %v728 = vld [vmem:[%s706 + $0x14] sm:$0x1]
      %v729 = vld [vmem:[%s706 + $0x18] sm:$0xf]
      %v730 = vld [vmem:[%s706 + $0x1c] sm:$0x1]
      %v731 = vld [vmem:[%s706 + $0x20] sm:$0xf]
      %v732 = vld [vmem:[%s706 + $0x24] sm:$0x1]
      %v733 = vld [vmem:[%s706 + $0x28] sm:$0xf]
      %v734 = vld [vmem:[%s706 + $0x2c] sm:$0x1]
      %v735 = vld [vmem:[%s706 + $0x30] sm:$0xf]
      %v736 = vld [vmem:[%s706 + $0x34] sm:$0x1]
      %v737 = vld [vmem:[%s706 + $0x38] sm:$0xf]
      %v738 = vld [vmem:[%s706 + $0x3c] sm:$0x1]
      %v740 = vshrl.u32 %v723, 16
      %v742 = vrot.slane %v740, 4
      %v743 = vshll.u32 %v723, 16
      %v745 = vrot.slane %v743, 5
      %v746 = vor.u32 %v742, %v745
      %v747 = vrot.slane %v746, 4
      %v749 = vshll.u32 %v724, 16
      %v751 = vrot.slane %v749, 5
      %v752 = vsel %vm253, %v747, %v751
      %v754 = vshrl.u32 %v725, 16
      %v756 = vrot.slane %v754, 4
      %v757 = vshll.u32 %v725, 16
      %v759 = vrot.slane %v757, 5
      %v760 = vor.u32 %v756, %v759
      %v761 = vrot.slane %v760, 4
      %v763 = vshll.u32 %v726, 16
      %v765 = vrot.slane %v763, 5
      %v766 = vsel %vm253, %v761, %v765
      %v768 = vshrl.u32 %v727, 16
      %v770 = vrot.slane %v768, 4
      %v771 = vshll.u32 %v727, 16
      %v773 = vrot.slane %v771, 5
      %v774 = vor.u32 %v770, %v773
      %v775 = vrot.slane %v774, 4
      %v777 = vshll.u32 %v728, 16
      %v779 = vrot.slane %v777, 5
      %v780 = vsel %vm253, %v775, %v779
      %v782 = vshrl.u32 %v729, 16
      %v784 = vrot.slane %v782, 4
      %v785 = vshll.u32 %v729, 16
      %v787 = vrot.slane %v785, 5
      %v788 = vor.u32 %v784, %v787
      %v789 = vrot.slane %v788, 4
      %v791 = vshll.u32 %v730, 16
      %v793 = vrot.slane %v791, 5
      %v794 = vsel %vm253, %v789, %v793
      %v796 = vshrl.u32 %v731, 16
      %v798 = vrot.slane %v796, 4
      %v799 = vshll.u32 %v731, 16
      %v801 = vrot.slane %v799, 5
      %v802 = vor.u32 %v798, %v801
      %v803 = vrot.slane %v802, 4
      %v805 = vshll.u32 %v732, 16
      %v807 = vrot.slane %v805, 5
      %v808 = vsel %vm253, %v803, %v807
      %v810 = vshrl.u32 %v733, 16
      %v812 = vrot.slane %v810, 4
      %v813 = vshll.u32 %v733, 16
      %v815 = vrot.slane %v813, 5
      %v816 = vor.u32 %v812, %v815
      %v817 = vrot.slane %v816, 4
      %v819 = vshll.u32 %v734, 16
      %v821 = vrot.slane %v819, 5
      %v822 = vsel %vm253, %v817, %v821
      %v824 = vshrl.u32 %v735, 16
      %v826 = vrot.slane %v824, 4
      %v827 = vshll.u32 %v735, 16
      %v829 = vrot.slane %v827, 5
      %v830 = vor.u32 %v826, %v829
      %v831 = vrot.slane %v830, 4
      %v833 = vshll.u32 %v736, 16
      %v835 = vrot.slane %v833, 5
      %v836 = vsel %vm253, %v831, %v835
      %v838 = vshrl.u32 %v737, 16
      %v840 = vrot.slane %v838, 4
      %v841 = vshll.u32 %v737, 16
      %v843 = vrot.slane %v841, 5
      %v844 = vor.u32 %v840, %v843
      %v845 = vrot.slane %v844, 4
      %v847 = vshll.u32 %v738, 16
      %v849 = vrot.slane %v847, 5
      %v850 = vsel %vm253, %v845, %v849
      %859 = vst [vmem:[#allocation2 + $0x1c] sm:$0xf] %v752
      %860 = vst [vmem:[#allocation2 + $0x40] sm:$0xf] %v766
      %861 = vst [vmem:[#allocation2 + $0x64] sm:$0xf] %v780
      %862 = vst [vmem:[#allocation2 + $0x88] sm:$0xf] %v794
      %863 = vst [vmem:[#allocation2 + $0xac] sm:$0xf] %v808
      %864 = vst [vmem:[#allocation2 + $0xd0] sm:$0xf] %v822
      %865 = vst [vmem:[#allocation2 + $0xf4] sm:$0xf] %v836
      %866 = vst [vmem:[#allocation2 + $0x118] sm:$0xf] %v850
      %v867 = vld [vmem:[%s706] sm:$0xe]
      %v868 = vld [vmem:[%s706 + $0x4] sm:$0x1]
      %v869 = vld [vmem:[%s706 + $0x8] sm:$0xe]
      %v870 = vld [vmem:[%s706 + $0xc] sm:$0x1]
      %v871 = vld [vmem:[%s706 + $0x10] sm:$0xe]
      %v872 = vld [vmem:[%s706 + $0x14] sm:$0x1]
      %v873 = vld [vmem:[%s706 + $0x18] sm:$0xe]
      %v874 = vld [vmem:[%s706 + $0x1c] sm:$0x1]
      %v875 = vld [vmem:[%s706 + $0x20] sm:$0xe]
      %v876 = vld [vmem:[%s706 + $0x24] sm:$0x1]
      %v877 = vld [vmem:[%s706 + $0x28] sm:$0xe]
      %v878 = vld [vmem:[%s706 + $0x2c] sm:$0x1]
      %v879 = vld [vmem:[%s706 + $0x30] sm:$0xe]
      %v880 = vld [vmem:[%s706 + $0x34] sm:$0x1]
      %v881 = vld [vmem:[%s706 + $0x38] sm:$0xe]
      %v882 = vld [vmem:[%s706 + $0x3c] sm:$0x1]
      %v899 = vrot.slane %v867, 5
      %v900 = vrot.slane %v899, 4
      %v901 = vrot.slane %v868, 5
      %v902 = vsel %vm416, %v900, %v901
      %v903 = vrot.slane %v869, 5
      %v904 = vrot.slane %v903, 4
      %v905 = vrot.slane %v870, 5
      %v906 = vsel %vm416, %v904, %v905
      %v907 = vrot.slane %v871, 5
      %v908 = vrot.slane %v907, 4
      %v909 = vrot.slane %v872, 5
      %v910 = vsel %vm416, %v908, %v909
      %v911 = vrot.slane %v873, 5
      %v912 = vrot.slane %v911, 4
      %v913 = vrot.slane %v874, 5
      %v914 = vsel %vm416, %v912, %v913
      %v915 = vrot.slane %v875, 5
      %v916 = vrot.slane %v915, 4
      %v917 = vrot.slane %v876, 5
      %v918 = vsel %vm416, %v916, %v917
      %v919 = vrot.slane %v877, 5
      %v920 = vrot.slane %v919, 4
      %v921 = vrot.slane %v878, 5
      %v922 = vsel %vm416, %v920, %v921
      %v923 = vrot.slane %v879, 5
      %v924 = vrot.slane %v923, 4
      %v925 = vrot.slane %v880, 5
      %v926 = vsel %vm416, %v924, %v925
      %v927 = vrot.slane %v881, 5
      %v928 = vrot.slane %v927, 4
      %v929 = vrot.slane %v882, 5
      %v930 = vsel %vm416, %v928, %v929
      %939 = vst [vmem:[#allocation2 + $0x20] sm:$0xf] %v902
      %940 = vst [vmem:[#allocation2 + $0x44] sm:$0xf] %v906
      %941 = vst [vmem:[#allocation2 + $0x68] sm:$0xf] %v910
      %942 = vst [vmem:[#allocation2 + $0x8c] sm:$0xf] %v914
      %943 = vst [vmem:[#allocation2 + $0xb0] sm:$0xf] %v918
      %944 = vst [vmem:[#allocation2 + $0xd4] sm:$0xf] %v922
      %945 = vst [vmem:[#allocation2 + $0xf8] sm:$0xf] %v926
      %946 = vst [vmem:[#allocation2 + $0x11c] sm:$0xf] %v930
      %v947 = vld [vmem:[#allocation2] sm:$0xff]
      %v948 = vld [vmem:[#allocation2 + $0x8] sm:$0xff]
      %v949 = vld [vmem:[#allocation2 + $0x10] sm:$0xff]
      %v950 = vld [vmem:[#allocation2 + $0x18] sm:$0xff]
      %v951 = vld [vmem:[#allocation2 + $0x20] sm:$0xf]
      %v952 = vld [vmem:[#allocation2 + $0x24] sm:$0xff]
      %v953 = vld [vmem:[#allocation2 + $0x2c] sm:$0xff]
      %v954 = vld [vmem:[#allocation2 + $0x34] sm:$0xff]
      %v955 = vld [vmem:[#allocation2 + $0x3c] sm:$0xff]
      %v956 = vld [vmem:[#allocation2 + $0x44] sm:$0xf]
      %v957 = vld [vmem:[#allocation2 + $0x48] sm:$0xff]
      %v958 = vld [vmem:[#allocation2 + $0x50] sm:$0xff]
      %v959 = vld [vmem:[#allocation2 + $0x58] sm:$0xff]
      %v960 = vld [vmem:[#allocation2 + $0x60] sm:$0xff]
      %v961 = vld [vmem:[#allocation2 + $0x68] sm:$0xf]
      %v962 = vld [vmem:[#allocation2 + $0x6c] sm:$0xff]
      %v963 = vld [vmem:[#allocation2 + $0x74] sm:$0xff]
      %v964 = vld [vmem:[#allocation2 + $0x7c] sm:$0xff]
      %v965 = vld [vmem:[#allocation2 + $0x84] sm:$0xff]
      %v966 = vld [vmem:[#allocation2 + $0x8c] sm:$0xf]
      %v967 = vld [vmem:[#allocation2 + $0x90] sm:$0xff]
      %v968 = vld [vmem:[#allocation2 + $0x98] sm:$0xff]
      %v969 = vld [vmem:[#allocation2 + $0xa0] sm:$0xff]
      %v970 = vld [vmem:[#allocation2 + $0xa8] sm:$0xff]
      %v971 = vld [vmem:[#allocation2 + $0xb0] sm:$0xf]
      %v972 = vld [vmem:[#allocation2 + $0xb4] sm:$0xff]
      %v973 = vld [vmem:[#allocation2 + $0xbc] sm:$0xff]
      %v974 = vld [vmem:[#allocation2 + $0xc4] sm:$0xff]
      %v975 = vld [vmem:[#allocation2 + $0xcc] sm:$0xff]
      %v976 = vld [vmem:[#allocation2 + $0xd4] sm:$0xf]
      %v977 = vld [vmem:[#allocation2 + $0xd8] sm:$0xff]
      %v978 = vld [vmem:[#allocation2 + $0xe0] sm:$0xff]
      %v979 = vld [vmem:[#allocation2 + $0xe8] sm:$0xff]
      %v980 = vld [vmem:[#allocation2 + $0xf0] sm:$0xff]
      %v981 = vld [vmem:[#allocation2 + $0xf8] sm:$0xf]
      %v982 = vld [vmem:[#allocation2 + $0xfc] sm:$0xff]
      %v983 = vld [vmem:[#allocation2 + $0x104] sm:$0xff]
      %v984 = vld [vmem:[#allocation2 + $0x10c] sm:$0xff]
      %v985 = vld [vmem:[#allocation2 + $0x114] sm:$0xff]
      %v986 = vld [vmem:[#allocation2 + $0x11c] sm:$0xf]
      %v987 = vld [vmem:[%s1] sm:$0xf]
      %v988 = vld [vmem:[%s1 + $0x4] sm:$0xf]
      %v989 = vld [vmem:[%s1 + $0x8] sm:$0xf]
      %v990 = vld [vmem:[%s1 + $0xc] sm:$0xf]
      %v991 = vld [vmem:[%s1 + $0x10] sm:$0xf]
      %v992 = vld [vmem:[%s1 + $0x14] sm:$0xf]
      %v993 = vld [vmem:[%s1 + $0x18] sm:$0xf]
      %v994 = vld [vmem:[%s1 + $0x1c] sm:$0xf]
      %v995 = vld [vmem:[%s1 + $0x20] sm:$0xf]
      %v996 = vld [vmem:[%s1 + $0x24] sm:$0xf]
      %v997 = vld [vmem:[%s1 + $0x28] sm:$0xf]
      %v998 = vld [vmem:[%s1 + $0x2c] sm:$0xf]
      %v999 = vld [vmem:[%s1 + $0x30] sm:$0xf]
      %v1000 = vld [vmem:[%s1 + $0x34] sm:$0xf]
      %v1001 = vld [vmem:[%s1 + $0x38] sm:$0xf]
      %v1002 = vld [vmem:[%s1 + $0x3c] sm:$0xf]
      %v1003 = vld [vmem:[%s1 + $0x40] sm:$0xf]
      %v1004 = vld [vmem:[%s1 + $0x44] sm:$0xf]
      %v1005 = vld [vmem:[%s1 + $0x48] sm:$0xf]
      %v1006 = vld [vmem:[%s1 + $0x4c] sm:$0xf]
      %v1007 = vld [vmem:[%s1 + $0x50] sm:$0xf]
      %v1008 = vld [vmem:[%s1 + $0x54] sm:$0xf]
      %v1009 = vld [vmem:[%s1 + $0x58] sm:$0xf]
      %v1010 = vld [vmem:[%s1 + $0x5c] sm:$0xf]
      %v1011 = vld [vmem:[%s1 + $0x60] sm:$0xf]
      %v1012 = vld [vmem:[%s1 + $0x64] sm:$0xf]
      %v1013 = vld [vmem:[%s1 + $0x68] sm:$0xf]
      %v1014 = vld [vmem:[%s1 + $0x6c] sm:$0xf]
      %v1015 = vld [vmem:[%s1 + $0x70] sm:$0xf]
      %v1016 = vld [vmem:[%s1 + $0x74] sm:$0xf]
      %v1017 = vld [vmem:[%s1 + $0x78] sm:$0xf]
      %v1018 = vld [vmem:[%s1 + $0x7c] sm:$0xf]
      %v1019 = vld [vmem:[%s1 + $0x80] sm:$0xf]
      %v1020 = vld [vmem:[%s1 + $0x84] sm:$0xf]
      %v1021 = vld [vmem:[%s1 + $0x88] sm:$0xf]
      %v1022 = vld [vmem:[%s1 + $0x8c] sm:$0xf]
      %v1023 = vld [vmem:[%s1 + $0x90] sm:$0xf]
      %v1024 = vld [vmem:[%s1 + $0x94] sm:$0xf]
      %v1025 = vld [vmem:[%s1 + $0x98] sm:$0xf]
      %v1026 = vld [vmem:[%s1 + $0x9c] sm:$0xf]
      %v1027 = vld [vmem:[%s1 + $0xa0] sm:$0xf]
      %v1028 = vld [vmem:[%s1 + $0xa4] sm:$0xf]
      %v1029 = vld [vmem:[%s1 + $0xa8] sm:$0xf]
      %v1030 = vld [vmem:[%s1 + $0xac] sm:$0xf]
      %v1031 = vld [vmem:[%s1 + $0xb0] sm:$0xf]
      %v1032 = vld [vmem:[%s1 + $0xb4] sm:$0xf]
      %v1033 = vld [vmem:[%s1 + $0xb8] sm:$0xf]
      %v1034 = vld [vmem:[%s1 + $0xbc] sm:$0xf]
      %v1035 = vld [vmem:[%s1 + $0xc0] sm:$0xf]
      %v1036 = vld [vmem:[%s1 + $0xc4] sm:$0xf]
      %v1037 = vld [vmem:[%s1 + $0xc8] sm:$0xf]
      %v1038 = vld [vmem:[%s1 + $0xcc] sm:$0xf]
      %v1039 = vld [vmem:[%s1 + $0xd0] sm:$0xf]
      %v1040 = vld [vmem:[%s1 + $0xd4] sm:$0xf]
      %v1041 = vld [vmem:[%s1 + $0xd8] sm:$0xf]
      %v1042 = vld [vmem:[%s1 + $0xdc] sm:$0xf]
      %v1043 = vld [vmem:[%s1 + $0xe0] sm:$0xf]
      %v1044 = vld [vmem:[%s1 + $0xe4] sm:$0xf]
      %v1045 = vld [vmem:[%s1 + $0xe8] sm:$0xf]
      %v1046 = vld [vmem:[%s1 + $0xec] sm:$0xf]
      %v1047 = vld [vmem:[%s1 + $0xf0] sm:$0xf]
      %v1048 = vld [vmem:[%s1 + $0xf4] sm:$0xf]
      %v1049 = vld [vmem:[%s1 + $0xf8] sm:$0xf]
      %v1050 = vld [vmem:[%s1 + $0xfc] sm:$0xf]
      %v1051 = vld [vmem:[%s1 + $0x100] sm:$0xf]
      %v1052 = vld [vmem:[%s1 + $0x104] sm:$0xf]
      %v1053 = vld [vmem:[%s1 + $0x108] sm:$0xf]
      %v1054 = vld [vmem:[%s1 + $0x10c] sm:$0xf]
      %v1055 = vld [vmem:[%s1 + $0x110] sm:$0xf]
      %v1056 = vld [vmem:[%s1 + $0x114] sm:$0xf]
      %v1057 = vld [vmem:[%s1 + $0x118] sm:$0xf]
      %v1058 = vld [vmem:[%s1 + $0x11c] sm:$0xf]
      %v1059 = vld [vmem:[%s1 + $0x120] sm:$0xf]
      %v1060 = vld [vmem:[%s1 + $0x124] sm:$0xf]
      %v1061 = vld [vmem:[%s1 + $0x128] sm:$0xf]
      %v1062 = vld [vmem:[%s1 + $0x12c] sm:$0xf]
      %v1063 = vld [vmem:[%s1 + $0x130] sm:$0xf]
      %v1064 = vld [vmem:[%s1 + $0x134] sm:$0xf]
      %v1065 = vld [vmem:[%s1 + $0x138] sm:$0xf]
      %v1066 = vld [vmem:[%s1 + $0x13c] sm:$0xf]
      %v1067 = vld [vmem:[%s1 + $0x140] sm:$0xf]
      %v1068 = vld [vmem:[%s1 + $0x144] sm:$0xf]
      %v1069 = vld [vmem:[%s1 + $0x148] sm:$0xf]
      %v1070 = vld [vmem:[%s1 + $0x14c] sm:$0xf]
      %v1071 = vld [vmem:[%s1 + $0x150] sm:$0xf]
      %v1072 = vld [vmem:[%s1 + $0x154] sm:$0xf]
      %v1073 = vld [vmem:[%s1 + $0x158] sm:$0xf]
      %v1074 = vld [vmem:[%s1 + $0x15c] sm:$0xf]
      %v1075 = vld [vmem:[%s1 + $0x160] sm:$0xf]
      %v1076 = vld [vmem:[%s1 + $0x164] sm:$0xf]
      %v1077 = vld [vmem:[%s1 + $0x168] sm:$0xf]
      %v1078 = vld [vmem:[%s1 + $0x16c] sm:$0xf]
      %v1079 = vld [vmem:[%s1 + $0x170] sm:$0xf]
      %v1080 = vld [vmem:[%s1 + $0x174] sm:$0xf]
      %v1081 = vld [vmem:[%s1 + $0x178] sm:$0xf]
      %v1082 = vld [vmem:[%s1 + $0x17c] sm:$0xf]
      %v1083 = vld [vmem:[%s1 + $0x180] sm:$0xf]
      %v1084 = vld [vmem:[%s1 + $0x184] sm:$0xf]
      %v1085 = vld [vmem:[%s1 + $0x188] sm:$0xf]
      %v1086 = vld [vmem:[%s1 + $0x18c] sm:$0xf]
      %v1087 = vld [vmem:[%s1 + $0x190] sm:$0xf]
      %v1088 = vld [vmem:[%s1 + $0x194] sm:$0xf]
      %v1089 = vld [vmem:[%s1 + $0x198] sm:$0xf]
      %v1090 = vld [vmem:[%s1 + $0x19c] sm:$0xf]
      %v1091 = vld [vmem:[%s1 + $0x1a0] sm:$0xf]
      %v1092 = vld [vmem:[%s1 + $0x1a4] sm:$0xf]
      %v1093 = vld [vmem:[%s1 + $0x1a8] sm:$0xf]
      %v1094 = vld [vmem:[%s1 + $0x1ac] sm:$0xf]
      %v1095 = vld [vmem:[%s1 + $0x1b0] sm:$0xf]
      %v1096 = vld [vmem:[%s1 + $0x1b4] sm:$0xf]
      %v1097 = vld [vmem:[%s1 + $0x1b8] sm:$0xf]
      %v1098 = vld [vmem:[%s1 + $0x1bc] sm:$0xf]
      %v1099 = vld [vmem:[%s1 + $0x1c0] sm:$0xf]
      %v1100 = vld [vmem:[%s1 + $0x1c4] sm:$0xf]
      %v1101 = vld [vmem:[%s1 + $0x1c8] sm:$0xf]
      %v1102 = vld [vmem:[%s1 + $0x1cc] sm:$0xf]
      %v1103 = vld [vmem:[%s1 + $0x1d0] sm:$0xf]
      %v1104 = vld [vmem:[%s1 + $0x1d4] sm:$0xf]
      %v1105 = vld [vmem:[%s1 + $0x1d8] sm:$0xf]
      %v1106 = vld [vmem:[%s1 + $0x1dc] sm:$0xf]
      %v1107 = vld [vmem:[%s1 + $0x1e0] sm:$0xf]
      %v1108 = vld [vmem:[%s1 + $0x1e4] sm:$0xf]
      %v1109 = vld [vmem:[%s1 + $0x1e8] sm:$0xf]
      %v1110 = vld [vmem:[%s1 + $0x1ec] sm:$0xf]
      %v1111 = vld [vmem:[%s1 + $0x1f0] sm:$0xf]
      %v1112 = vld [vmem:[%s1 + $0x1f4] sm:$0xf]
      %v1113 = vld [vmem:[%s1 + $0x1f8] sm:$0xf]
      %v1114 = vld [vmem:[%s1 + $0x1fc] sm:$0xf]
      %v1115 = vld [vmem:[%s1 + $0x200] sm:$0xf]
      %v1116 = vld [vmem:[%s1 + $0x204] sm:$0xf]
      %v1117 = vld [vmem:[%s1 + $0x208] sm:$0xf]
      %v1118 = vld [vmem:[%s1 + $0x20c] sm:$0xf]
      %v1119 = vld [vmem:[%s1 + $0x210] sm:$0xf]
      %v1120 = vld [vmem:[%s1 + $0x214] sm:$0xf]
      %v1121 = vld [vmem:[%s1 + $0x218] sm:$0xf]
      %v1122 = vld [vmem:[%s1 + $0x21c] sm:$0xf]
      %v1123 = vld [vmem:[%s1 + $0x220] sm:$0xf]
      %v1124 = vld [vmem:[%s1 + $0x224] sm:$0xf]
      %v1125 = vld [vmem:[%s1 + $0x228] sm:$0xf]
      %v1126 = vld [vmem:[%s1 + $0x22c] sm:$0xf]
      %v1127 = vld [vmem:[%s1 + $0x230] sm:$0xf]
      %v1128 = vld [vmem:[%s1 + $0x234] sm:$0xf]
      %v1129 = vld [vmem:[%s1 + $0x238] sm:$0xf]
      %v1130 = vld [vmem:[%s1 + $0x23c] sm:$0xf]
      %v1131 = vld [vmem:[%s2] sm:$0x1]
      %v1133 = vlaneseq
      %v1134 = vshrl.u32 %v1133, 7
      %v1135 = vsub.s32 0, %v1134
      %v1136 = vrot.slane %v1131, %v1135
      %v1178 = vunpack.c.l.b16 %v947
      %v1179 = vunpack.c.h.b16 %v947
      %v1180 = vunpack.c.l.b16 %v948
      %v1181 = vunpack.c.h.b16 %v948
      %v1182 = vunpack.c.l.b16 %v949
      %v1183 = vunpack.c.h.b16 %v949
      %v1184 = vunpack.c.l.b16 %v950
      %v1185 = vunpack.c.h.b16 %v950
      %v1186 = vunpack.c.l.b16 %v951
      %v1187 = vunpack.c.l.b16 %v952
      %v1188 = vunpack.c.h.b16 %v952
      %v1189 = vunpack.c.l.b16 %v953
      %v1190 = vunpack.c.h.b16 %v953
      %v1191 = vunpack.c.l.b16 %v954
      %v1192 = vunpack.c.h.b16 %v954
      %v1193 = vunpack.c.l.b16 %v955
      %v1194 = vunpack.c.h.b16 %v955
      %v1195 = vunpack.c.l.b16 %v956
      %v1196 = vunpack.c.l.b16 %v957
      %v1197 = vunpack.c.h.b16 %v957
      %v1198 = vunpack.c.l.b16 %v958
      %v1199 = vunpack.c.h.b16 %v958
      %v1200 = vunpack.c.l.b16 %v959
      %v1201 = vunpack.c.h.b16 %v959
      %v1202 = vunpack.c.l.b16 %v960
      %v1203 = vunpack.c.h.b16 %v960
      %v1204 = vunpack.c.l.b16 %v961
      %v1205 = vunpack.c.l.b16 %v962
      %v1206 = vunpack.c.h.b16 %v962
      %v1207 = vunpack.c.l.b16 %v963
      %v1208 = vunpack.c.h.b16 %v963
      %v1209 = vunpack.c.l.b16 %v964
      %v1210 = vunpack.c.h.b16 %v964
      %v1211 = vunpack.c.l.b16 %v965
      %v1212 = vunpack.c.h.b16 %v965
      %v1213 = vunpack.c.l.b16 %v966
      %v1214 = vunpack.c.l.b16 %v967
      %v1215 = vunpack.c.h.b16 %v967
      %v1216 = vunpack.c.l.b16 %v968
      %v1217 = vunpack.c.h.b16 %v968
      %v1218 = vunpack.c.l.b16 %v969
      %v1219 = vunpack.c.h.b16 %v969
      %v1220 = vunpack.c.l.b16 %v970
      %v1221 = vunpack.c.h.b16 %v970
      %v1222 = vunpack.c.l.b16 %v971
      %v1223 = vunpack.c.l.b16 %v972
      %v1224 = vunpack.c.h.b16 %v972
      %v1225 = vunpack.c.l.b16 %v973
      %v1226 = vunpack.c.h.b16 %v973
      %v1227 = vunpack.c.l.b16 %v974
      %v1228 = vunpack.c.h.b16 %v974
      %v1229 = vunpack.c.l.b16 %v975
      %v1230 = vunpack.c.h.b16 %v975
      %v1231 = vunpack.c.l.b16 %v976
      %v1232 = vunpack.c.l.b16 %v977
      %v1233 = vunpack.c.h.b16 %v977
      %v1234 = vunpack.c.l.b16 %v978
      %v1235 = vunpack.c.h.b16 %v978
      %v1236 = vunpack.c.l.b16 %v979
      %v1237 = vunpack.c.h.b16 %v979
      %v1238 = vunpack.c.l.b16 %v980
      %v1239 = vunpack.c.h.b16 %v980
      %v1240 = vunpack.c.l.b16 %v981
      %v1241 = vunpack.c.l.b16 %v982
      %v1242 = vunpack.c.h.b16 %v982
      %v1243 = vunpack.c.l.b16 %v983
      %v1244 = vunpack.c.h.b16 %v983
      %v1245 = vunpack.c.l.b16 %v984
      %v1246 = vunpack.c.h.b16 %v984
      %v1247 = vunpack.c.l.b16 %v985
      %v1248 = vunpack.c.h.b16 %v985
      %v1249 = vunpack.c.l.b16 %v986
      %v1250 = vpack.c.b16 %v1187, %v1178
      %v1251 = vpack.c.b16 %v1188, %v1179
      %v1252 = vpack.c.b16 %v1189, %v1180
      %v1253 = vpack.c.b16 %v1190, %v1181
      %v1254 = vpack.c.b16 %v1191, %v1182
      %v1255 = vpack.c.b16 %v1192, %v1183
      %v1256 = vpack.c.b16 %v1193, %v1184
      %v1257 = vpack.c.b16 %v1194, %v1185
      %v1258 = vpack.c.b16 %v1195, %v1186
      %v1259 = vpack.c.b16 %v1205, %v1196
      %v1260 = vpack.c.b16 %v1206, %v1197
      %v1261 = vpack.c.b16 %v1207, %v1198
      %v1262 = vpack.c.b16 %v1208, %v1199
      %v1263 = vpack.c.b16 %v1209, %v1200
      %v1264 = vpack.c.b16 %v1210, %v1201
      %v1265 = vpack.c.b16 %v1211, %v1202
      %v1266 = vpack.c.b16 %v1212, %v1203
      %v1267 = vpack.c.b16 %v1213, %v1204
      %v1268 = vpack.c.b16 %v1223, %v1214
      %v1269 = vpack.c.b16 %v1224, %v1215
      %v1270 = vpack.c.b16 %v1225, %v1216
      %v1271 = vpack.c.b16 %v1226, %v1217
      %v1272 = vpack.c.b16 %v1227, %v1218
      %v1273 = vpack.c.b16 %v1228, %v1219
      %v1274 = vpack.c.b16 %v1229, %v1220
      %v1275 = vpack.c.b16 %v1230, %v1221
      %v1276 = vpack.c.b16 %v1231, %v1222
      %v1277 = vpack.c.b16 %v1241, %v1232
      %v1278 = vpack.c.b16 %v1242, %v1233
      %v1279 = vpack.c.b16 %v1243, %v1234
      %v1280 = vpack.c.b16 %v1244, %v1235
      %v1281 = vpack.c.b16 %v1245, %v1236
      %v1282 = vpack.c.b16 %v1246, %v1237
      %v1283 = vpack.c.b16 %v1247, %v1238
      %v1284 = vpack.c.b16 %v1248, %v1239
      %v1285 = vpack.c.b16 %v1249, %v1240
      %v1466 = vunpack.c.l.b16 %v987
      %v1467 = vunpack.c.l.b16 %v988
      %v1468 = vunpack.c.l.b16 %v989
      %v1469 = vunpack.c.l.b16 %v990
      %v1470 = vunpack.c.l.b16 %v991
      %v1471 = vunpack.c.l.b16 %v992
      %v1472 = vunpack.c.l.b16 %v993
      %v1473 = vunpack.c.l.b16 %v994
      %v1474 = vunpack.c.l.b16 %v995
      %v1475 = vunpack.c.l.b16 %v996
      %v1476 = vunpack.c.l.b16 %v997
      %v1477 = vunpack.c.l.b16 %v998
      %v1478 = vunpack.c.l.b16 %v999
      %v1479 = vunpack.c.l.b16 %v1000
      %v1480 = vunpack.c.l.b16 %v1001
      %v1481 = vunpack.c.l.b16 %v1002
      %v1482 = vunpack.c.l.b16 %v1003
      %v1483 = vunpack.c.l.b16 %v1004
      %v1484 = vunpack.c.l.b16 %v1005
      %v1485 = vunpack.c.l.b16 %v1006
      %v1486 = vunpack.c.l.b16 %v1007
      %v1487 = vunpack.c.l.b16 %v1008
      %v1488 = vunpack.c.l.b16 %v1009
      %v1489 = vunpack.c.l.b16 %v1010
      %v1490 = vunpack.c.l.b16 %v1011
      %v1491 = vunpack.c.l.b16 %v1012
      %v1492 = vunpack.c.l.b16 %v1013
      %v1493 = vunpack.c.l.b16 %v1014
      %v1494 = vunpack.c.l.b16 %v1015
      %v1495 = vunpack.c.l.b16 %v1016
      %v1496 = vunpack.c.l.b16 %v1017
      %v1497 = vunpack.c.l.b16 %v1018
      %v1498 = vunpack.c.l.b16 %v1019
      %v1499 = vunpack.c.l.b16 %v1020
      %v1500 = vunpack.c.l.b16 %v1021
      %v1501 = vunpack.c.l.b16 %v1022
      %v1502 = vunpack.c.l.b16 %v1023
      %v1503 = vunpack.c.l.b16 %v1024
      %v1504 = vunpack.c.l.b16 %v1025
      %v1505 = vunpack.c.l.b16 %v1026
      %v1506 = vunpack.c.l.b16 %v1027
      %v1507 = vunpack.c.l.b16 %v1028
      %v1508 = vunpack.c.l.b16 %v1029
      %v1509 = vunpack.c.l.b16 %v1030
      %v1510 = vunpack.c.l.b16 %v1031
      %v1511 = vunpack.c.l.b16 %v1032
      %v1512 = vunpack.c.l.b16 %v1033
      %v1513 = vunpack.c.l.b16 %v1034
      %v1514 = vunpack.c.l.b16 %v1035
      %v1515 = vunpack.c.l.b16 %v1036
      %v1516 = vunpack.c.l.b16 %v1037
      %v1517 = vunpack.c.l.b16 %v1038
      %v1518 = vunpack.c.l.b16 %v1039
      %v1519 = vunpack.c.l.b16 %v1040
      %v1520 = vunpack.c.l.b16 %v1041
      %v1521 = vunpack.c.l.b16 %v1042
      %v1522 = vunpack.c.l.b16 %v1043
      %v1523 = vunpack.c.l.b16 %v1044
      %v1524 = vunpack.c.l.b16 %v1045
      %v1525 = vunpack.c.l.b16 %v1046
      %v1526 = vunpack.c.l.b16 %v1047
      %v1527 = vunpack.c.l.b16 %v1048
      %v1528 = vunpack.c.l.b16 %v1049
      %v1529 = vunpack.c.l.b16 %v1050
      %v1530 = vunpack.c.l.b16 %v1051
      %v1531 = vunpack.c.l.b16 %v1052
      %v1532 = vunpack.c.l.b16 %v1053
      %v1533 = vunpack.c.l.b16 %v1054
      %v1534 = vunpack.c.l.b16 %v1055
      %v1535 = vunpack.c.l.b16 %v1056
      %v1536 = vunpack.c.l.b16 %v1057
      %v1537 = vunpack.c.l.b16 %v1058
      %v1538 = vunpack.c.l.b16 %v1059
      %v1539 = vunpack.c.l.b16 %v1060
      %v1540 = vunpack.c.l.b16 %v1061
      %v1541 = vunpack.c.l.b16 %v1062
      %v1542 = vunpack.c.l.b16 %v1063
      %v1543 = vunpack.c.l.b16 %v1064
      %v1544 = vunpack.c.l.b16 %v1065
      %v1545 = vunpack.c.l.b16 %v1066
      %v1546 = vunpack.c.l.b16 %v1067
      %v1547 = vunpack.c.l.b16 %v1068
      %v1548 = vunpack.c.l.b16 %v1069
      %v1549 = vunpack.c.l.b16 %v1070
      %v1550 = vunpack.c.l.b16 %v1071
      %v1551 = vunpack.c.l.b16 %v1072
      %v1552 = vunpack.c.l.b16 %v1073
      %v1553 = vunpack.c.l.b16 %v1074
      %v1554 = vunpack.c.l.b16 %v1075
      %v1555 = vunpack.c.l.b16 %v1076
      %v1556 = vunpack.c.l.b16 %v1077
      %v1557 = vunpack.c.l.b16 %v1078
      %v1558 = vunpack.c.l.b16 %v1079
      %v1559 = vunpack.c.l.b16 %v1080
      %v1560 = vunpack.c.l.b16 %v1081
      %v1561 = vunpack.c.l.b16 %v1082
      %v1562 = vunpack.c.l.b16 %v1083
      %v1563 = vunpack.c.l.b16 %v1084
      %v1564 = vunpack.c.l.b16 %v1085
      %v1565 = vunpack.c.l.b16 %v1086
      %v1566 = vunpack.c.l.b16 %v1087
      %v1567 = vunpack.c.l.b16 %v1088
      %v1568 = vunpack.c.l.b16 %v1089
      %v1569 = vunpack.c.l.b16 %v1090
      %v1570 = vunpack.c.l.b16 %v1091
      %v1571 = vunpack.c.l.b16 %v1092
      %v1572 = vunpack.c.l.b16 %v1093
      %v1573 = vunpack.c.l.b16 %v1094
      %v1574 = vunpack.c.l.b16 %v1095
      %v1575 = vunpack.c.l.b16 %v1096
      %v1576 = vunpack.c.l.b16 %v1097
      %v1577 = vunpack.c.l.b16 %v1098
      %v1578 = vunpack.c.l.b16 %v1099
      %v1579 = vunpack.c.l.b16 %v1100
      %v1580 = vunpack.c.l.b16 %v1101
      %v1581 = vunpack.c.l.b16 %v1102
      %v1582 = vunpack.c.l.b16 %v1103
      %v1583 = vunpack.c.l.b16 %v1104
      %v1584 = vunpack.c.l.b16 %v1105
      %v1585 = vunpack.c.l.b16 %v1106
      %v1586 = vunpack.c.l.b16 %v1107
      %v1587 = vunpack.c.l.b16 %v1108
      %v1588 = vunpack.c.l.b16 %v1109
      %v1589 = vunpack.c.l.b16 %v1110
      %v1590 = vunpack.c.l.b16 %v1111
      %v1591 = vunpack.c.l.b16 %v1112
      %v1592 = vunpack.c.l.b16 %v1113
      %v1593 = vunpack.c.l.b16 %v1114
      %v1594 = vunpack.c.l.b16 %v1115
      %v1595 = vunpack.c.l.b16 %v1116
      %v1596 = vunpack.c.l.b16 %v1117
      %v1597 = vunpack.c.l.b16 %v1118
      %v1598 = vunpack.c.l.b16 %v1119
      %v1599 = vunpack.c.l.b16 %v1120
      %v1600 = vunpack.c.l.b16 %v1121
      %v1601 = vunpack.c.l.b16 %v1122
      %v1602 = vunpack.c.l.b16 %v1123
      %v1603 = vunpack.c.l.b16 %v1124
      %v1604 = vunpack.c.l.b16 %v1125
      %v1605 = vunpack.c.l.b16 %v1126
      %v1606 = vunpack.c.l.b16 %v1127
      %v1607 = vunpack.c.l.b16 %v1128
      %v1608 = vunpack.c.l.b16 %v1129
      %v1609 = vunpack.c.l.b16 %v1130
      %v1610 = vpack.c.b16 %v1467, %v1466
      %v1611 = vpack.c.b16 %v1469, %v1468
      %v1612 = vpack.c.b16 %v1471, %v1470
      %v1613 = vpack.c.b16 %v1473, %v1472
      %v1614 = vpack.c.b16 %v1475, %v1474
      %v1615 = vpack.c.b16 %v1477, %v1476
      %v1616 = vpack.c.b16 %v1479, %v1478
      %v1617 = vpack.c.b16 %v1481, %v1480
      %v1618 = vpack.c.b16 %v1483, %v1482
      %v1619 = vpack.c.b16 %v1485, %v1484
      %v1620 = vpack.c.b16 %v1487, %v1486
      %v1621 = vpack.c.b16 %v1489, %v1488
      %v1622 = vpack.c.b16 %v1491, %v1490
      %v1623 = vpack.c.b16 %v1493, %v1492
      %v1624 = vpack.c.b16 %v1495, %v1494
      %v1625 = vpack.c.b16 %v1497, %v1496
      %v1626 = vpack.c.b16 %v1499, %v1498
      %v1627 = vpack.c.b16 %v1501, %v1500
      %v1628 = vpack.c.b16 %v1503, %v1502
      %v1629 = vpack.c.b16 %v1505, %v1504
      %v1630 = vpack.c.b16 %v1507, %v1506
      %v1631 = vpack.c.b16 %v1509, %v1508
      %v1632 = vpack.c.b16 %v1511, %v1510
      %v1633 = vpack.c.b16 %v1513, %v1512
      %v1634 = vpack.c.b16 %v1515, %v1514
      %v1635 = vpack.c.b16 %v1517, %v1516
      %v1636 = vpack.c.b16 %v1519, %v1518
      %v1637 = vpack.c.b16 %v1521, %v1520
      %v1638 = vpack.c.b16 %v1523, %v1522
      %v1639 = vpack.c.b16 %v1525, %v1524
      %v1640 = vpack.c.b16 %v1527, %v1526
      %v1641 = vpack.c.b16 %v1529, %v1528
      %v1642 = vpack.c.b16 %v1531, %v1530
      %v1643 = vpack.c.b16 %v1533, %v1532
      %v1644 = vpack.c.b16 %v1535, %v1534
      %v1645 = vpack.c.b16 %v1537, %v1536
      %v1646 = vpack.c.b16 %v1539, %v1538
      %v1647 = vpack.c.b16 %v1541, %v1540
      %v1648 = vpack.c.b16 %v1543, %v1542
      %v1649 = vpack.c.b16 %v1545, %v1544
      %v1650 = vpack.c.b16 %v1547, %v1546
      %v1651 = vpack.c.b16 %v1549, %v1548
      %v1652 = vpack.c.b16 %v1551, %v1550
      %v1653 = vpack.c.b16 %v1553, %v1552
      %v1654 = vpack.c.b16 %v1555, %v1554
      %v1655 = vpack.c.b16 %v1557, %v1556
      %v1656 = vpack.c.b16 %v1559, %v1558
      %v1657 = vpack.c.b16 %v1561, %v1560
      %v1658 = vpack.c.b16 %v1563, %v1562
      %v1659 = vpack.c.b16 %v1565, %v1564
      %v1660 = vpack.c.b16 %v1567, %v1566
      %v1661 = vpack.c.b16 %v1569, %v1568
      %v1662 = vpack.c.b16 %v1571, %v1570
      %v1663 = vpack.c.b16 %v1573, %v1572
      %v1664 = vpack.c.b16 %v1575, %v1574
      %v1665 = vpack.c.b16 %v1577, %v1576
      %v1666 = vpack.c.b16 %v1579, %v1578
      %v1667 = vpack.c.b16 %v1581, %v1580
      %v1668 = vpack.c.b16 %v1583, %v1582
      %v1669 = vpack.c.b16 %v1585, %v1584
      %v1670 = vpack.c.b16 %v1587, %v1586
      %v1671 = vpack.c.b16 %v1589, %v1588
      %v1672 = vpack.c.b16 %v1591, %v1590
      %v1673 = vpack.c.b16 %v1593, %v1592
      %v1674 = vpack.c.b16 %v1595, %v1594
      %v1675 = vpack.c.b16 %v1597, %v1596
      %v1676 = vpack.c.b16 %v1599, %v1598
      %v1677 = vpack.c.b16 %v1601, %v1600
      %v1678 = vpack.c.b16 %v1603, %v1602
      %v1679 = vpack.c.b16 %v1605, %v1604
      %v1680 = vpack.c.b16 %v1607, %v1606
      %v1681 = vpack.c.b16 %v1609, %v1608
      %1754 = vmatprep.subr.bf16.mxu0 0
      %1755 = vmatpush1.bf16.msra.mxu0 %v1610
      %1756 = vmatprep.subr.bf16.mxu0 0
      %1757 = vmatpush1.bf16.msra.mxu0 %v1611
      %1758 = vmatprep.subr.bf16.mxu0 0
      %1759 = vmatpush1.bf16.msra.mxu0 %v1612
      %1760 = vmatprep.subr.bf16.mxu0 0
      %1761 = vmatpush1.bf16.msra.mxu0 %v1613
      %1762 = vmatprep.subr.bf16.mxu0 0
      %1763 = vmatpush1.bf16.msra.mxu0 %v1614
      %1764 = vmatprep.subr.bf16.mxu0 0
      %1765 = vmatpush1.bf16.msra.mxu0 %v1615
      %1766 = vmatprep.subr.bf16.mxu0 0
      %1767 = vmatpush1.bf16.msra.mxu0 %v1616
      %1768 = vmatprep.subr.bf16.mxu0 0
      %1769 = vmatpush1.bf16.msra.mxu0 %v1617
      %1770 = vmatprep.subr.bf16.mxu0 0
      %1771 = vmatpush1.bf16.msra.mxu0 %v1618
      %1772 = vmatprep.subr.bf16.mxu0 0
      %1773 = vmatpush1.bf16.msra.mxu0 %v1619
      %1774 = vmatprep.subr.bf16.mxu0 0
      %1775 = vmatpush1.bf16.msra.mxu0 %v1620
      %1776 = vmatprep.subr.bf16.mxu0 0
      %1777 = vmatpush1.bf16.msra.mxu0 %v1621
      %1778 = vmatprep.subr.bf16.mxu0 0
      %1779 = vmatpush1.bf16.msra.mxu0 %v1622
      %1780 = vmatprep.subr.bf16.mxu0 0
      %1781 = vmatpush1.bf16.msra.mxu0 %v1623
      %1782 = vmatprep.subr.bf16.mxu0 0
      %1783 = vmatpush1.bf16.msra.mxu0 %v1624
      %1784 = vmatprep.subr.bf16.mxu0 0
      %1785 = vmatpush1.bf16.msra.mxu0 %v1625
      %1786 = vmatprep.mubr.bf16.mxu0 %v1251
      %1787 = vmatmul.mubr.bf16.gmra.mrb[0].mxu0 %v1250
      %v1788 = vpop.f32.mrb[0].mxu0
      %v1789 = vadd.f32 %v1136, %v1788
      %v1790 = vpop.f32.mrb[0].mxu0
      %v1791 = vpop.f32.mrb[0].mxu0
      %v1792 = vadd.f32 %v1136, %v1791
      %v1793 = vpop.f32.mrb[0].mxu0
      %1794 = vmatprep.mubr.bf16.mxu0 %v1260
      %1795 = vmatmul.mubr.bf16.gmra.mrb[0].mxu0 %v1259
      %v1796 = vpop.f32.mrb[0].mxu0
      %v1797 = vadd.f32 %v1136, %v1796
      %v1798 = vpop.f32.mrb[0].mxu0
      %v1799 = vpop.f32.mrb[0].mxu0
      %v1800 = vadd.f32 %v1136, %v1799
      %v1801 = vpop.f32.mrb[0].mxu0
      %1802 = vmatprep.mubr.bf16.mxu0 %v1269
      %1803 = vmatmul.mubr.bf16.gmra.mrb[0].mxu0 %v1268
      %v1804 = vpop.f32.mrb[0].mxu0
      %v1805 = vadd.f32 %v1136, %v1804
      %v1806 = vpop.f32.mrb[0].mxu0
      %v1807 = vpop.f32.mrb[0].mxu0
      %v1808 = vadd.f32 %v1136, %v1807
      %v1809 = vpop.f32.mrb[0].mxu0
      %1810 = vmatprep.mubr.bf16.mxu0 %v1278
      %1811 = vmatmul.mubr.bf16.gmra.mrb[0].mxu0 %v1277
      %v1812 = vpop.f32.mrb[0].mxu0
      %v1813 = vadd.f32 %v1136, %v1812
      %v1814 = vpop.f32.mrb[0].mxu0
      %v1815 = vpop.f32.mrb[0].mxu0
      %v1816 = vadd.f32 %v1136, %v1815
      %v1817 = vpop.f32.mrb[0].mxu0
      %1818 = vdwg.mxu0
      %1819 = vmatprep.subr.bf16.mxu0 0
      %1820 = vmatpush1.bf16.msra.mxu0 %v1626
      %1821 = vmatprep.subr.bf16.mxu0 0
      %1822 = vmatpush1.bf16.msra.mxu0 %v1627
      %1823 = vmatprep.subr.bf16.mxu0 0
      %1824 = vmatpush1.bf16.msra.mxu0 %v1628
      %1825 = vmatprep.subr.bf16.mxu0 0
      %1826 = vmatpush1.bf16.msra.mxu0 %v1629
      %1827 = vmatprep.subr.bf16.mxu0 0
      %1828 = vmatpush1.bf16.msra.mxu0 %v1630
      %1829 = vmatprep.subr.bf16.mxu0 0
      %1830 = vmatpush1.bf16.msra.mxu0 %v1631
      %1831 = vmatprep.subr.bf16.mxu0 0
      %1832 = vmatpush1.bf16.msra.mxu0 %v1632
      %1833 = vmatprep.subr.bf16.mxu0 0
      %1834 = vmatpush1.bf16.msra.mxu0 %v1633
      %1835 = vmatprep.subr.bf16.mxu0 0
      %1836 = vmatpush1.bf16.msra.mxu0 %v1634
      %1837 = vmatprep.subr.bf16.mxu0 0
      %1838 = vmatpush1.bf16.msra.mxu0 %v1635
      %1839 = vmatprep.subr.bf16.mxu0 0
      %1840 = vmatpush1.bf16.msra.mxu0 %v1636
      %1841 = vmatprep.subr.bf16.mxu0 0
      %1842 = vmatpush1.bf16.msra.mxu0 %v1637
      %1843 = vmatprep.subr.bf16.mxu0 0
      %1844 = vmatpush1.bf16.msra.mxu0 %v1638
      %1845 = vmatprep.subr.bf16.mxu0 0
      %1846 = vmatpush1.bf16.msra.mxu0 %v1639
      %1847 = vmatprep.subr.bf16.mxu0 0
      %1848 = vmatpush1.bf16.msra.mxu0 %v1640
      %1849 = vmatprep.subr.bf16.mxu0 0
      %1850 = vmatpush1.bf16.msra.mxu0 %v1641
      %1851 = vmatprep.mubr.bf16.mxu0 %v1253
      %1852 = vmatmul.mubr.bf16.gmra.mrb[0].mxu0 %v1252
      %v1853 = vpop.f32.mrb[0].mxu0
      %v1854 = vadd.f32 %v1789, %v1853
      %v1855 = vpop.f32.mrb[0].mxu0
      %v1856 = vpop.f32.mrb[0].mxu0
      %v1857 = vadd.f32 %v1792, %v1856
      %v1858 = vpop.f32.mrb[0].mxu0
      %1859 = vmatprep.mubr.bf16.mxu0 %v1262
      %1860 = vmatmul.mubr.bf16.gmra.mrb[0].mxu0 %v1261
      %v1861 = vpop.f32.mrb[0].mxu0
      %v1862 = vadd.f32 %v1797, %v1861
      %v1863 = vpop.f32.mrb[0].mxu0
      %v1864 = vpop.f32.mrb[0].mxu0
      %v1865 = vadd.f32 %v1800, %v1864
      %v1866 = vpop.f32.mrb[0].mxu0
      %1867 = vmatprep.mubr.bf16.mxu0 %v1271
      %1868 = vmatmul.mubr.bf16.gmra.mrb[0].mxu0 %v1270
      %v1869 = vpop.f32.mrb[0].mxu0
      %v1870 = vadd.f32 %v1805, %v1869
      %v1871 = vpop.f32.mrb[0].mxu0
      %v1872 = vpop.f32.mrb[0].mxu0
      %v1873 = vadd.f32 %v1808, %v1872
      %v1874 = vpop.f32.mrb[0].mxu0
      %1875 = vmatprep.mubr.bf16.mxu0 %v1280
      %1876 = vmatmul.mubr.bf16.gmra.mrb[0].mxu0 %v1279
      %v1877 = vpop.f32.mrb[0].mxu0
      %v1878 = vadd.f32 %v1813, %v1877
      %v1879 = vpop.f32.mrb[0].mxu0
      %v1880 = vpop.f32.mrb[0].mxu0
      %v1881 = vadd.f32 %v1816, %v1880
      %v1882 = vpop.f32.mrb[0].mxu0
      %1883 = vdwg.mxu0
      %1884 = vmatprep.subr.bf16.mxu0 0
      %1885 = vmatpush1.bf16.msra.mxu0 %v1642
      %1886 = vmatprep.subr.bf16.mxu0 0
      %1887 = vmatpush1.bf16.msra.mxu0 %v1643
      %1888 = vmatprep.subr.bf16.mxu0 0
      %1889 = vmatpush1.bf16.msra.mxu0 %v1644
      %1890 = vmatprep.subr.bf16.mxu0 0
      %1891 = vmatpush1.bf16.msra.mxu0 %v1645
      %1892 = vmatprep.subr.bf16.mxu0 0
      %1893 = vmatpush1.bf16.msra.mxu0 %v1646
      %1894 = vmatprep.subr.bf16.mxu0 0
      %1895 = vmatpush1.bf16.msra.mxu0 %v1647
      %1896 = vmatprep.subr.bf16.mxu0 0
      %1897 = vmatpush1.bf16.msra.mxu0 %v1648
      %1898 = vmatprep.subr.bf16.mxu0 0
      %1899 = vmatpush1.bf16.msra.mxu0 %v1649
      %1900 = vmatprep.subr.bf16.mxu0 0
      %1901 = vmatpush1.bf16.msra.mxu0 %v1650
      %1902 = vmatprep.subr.bf16.mxu0 0
      %1903 = vmatpush1.bf16.msra.mxu0 %v1651
      %1904 = vmatprep.subr.bf16.mxu0 0
      %1905 = vmatpush1.bf16.msra.mxu0 %v1652
      %1906 = vmatprep.subr.bf16.mxu0 0
      %1907 = vmatpush1.bf16.msra.mxu0 %v1653
      %1908 = vmatprep.subr.bf16.mxu0 0
      %1909 = vmatpush1.bf16.msra.mxu0 %v1654
      %1910 = vmatprep.subr.bf16.mxu0 0
      %1911 = vmatpush1.bf16.msra.mxu0 %v1655
      %1912 = vmatprep.subr.bf16.mxu0 0
      %1913 = vmatpush1.bf16.msra.mxu0 %v1656
      %1914 = vmatprep.subr.bf16.mxu0 0
      %1915 = vmatpush1.bf16.msra.mxu0 %v1657
      %1916 = vmatprep.mubr.bf16.mxu0 %v1255
      %1917 = vmatmul.mubr.bf16.gmra.mrb[0].mxu0 %v1254
      %v1918 = vpop.f32.mrb[0].mxu0
      %v1919 = vadd.f32 %v1854, %v1918
      %v1920 = vpop.f32.mrb[0].mxu0
      %v1921 = vpop.f32.mrb[0].mxu0
      %v1922 = vadd.f32 %v1857, %v1921
      %v1923 = vpop.f32.mrb[0].mxu0
      %1924 = vmatprep.mubr.bf16.mxu0 %v1264
      %1925 = vmatmul.mubr.bf16.gmra.mrb[0].mxu0 %v1263
      %v1926 = vpop.f32.mrb[0].mxu0
      %v1927 = vadd.f32 %v1862, %v1926
      %v1928 = vpop.f32.mrb[0].mxu0
      %v1929 = vpop.f32.mrb[0].mxu0
      %v1930 = vadd.f32 %v1865, %v1929
      %v1931 = vpop.f32.mrb[0].mxu0
      %1932 = vmatprep.mubr.bf16.mxu0 %v1273
      %1933 = vmatmul.mubr.bf16.gmra.mrb[0].mxu0 %v1272
      %v1934 = vpop.f32.mrb[0].mxu0
      %v1935 = vadd.f32 %v1870, %v1934
      %v1936 = vpop.f32.mrb[0].mxu0
      %v1937 = vpop.f32.mrb[0].mxu0
      %v1938 = vadd.f32 %v1873, %v1937
      %v1939 = vpop.f32.mrb[0].mxu0
      %1940 = vmatprep.mubr.bf16.mxu0 %v1282
      %1941 = vmatmul.mubr.bf16.gmra.mrb[0].mxu0 %v1281
      %v1942 = vpop.f32.mrb[0].mxu0
      %v1943 = vadd.f32 %v1878, %v1942
      %v1944 = vpop.f32.mrb[0].mxu0
      %v1945 = vpop.f32.mrb[0].mxu0
      %v1946 = vadd.f32 %v1881, %v1945
      %v1947 = vpop.f32.mrb[0].mxu0
      %1948 = vdwg.mxu0
      %1949 = vmatprep.subr.bf16.mxu0 0
      %1950 = vmatpush1.bf16.msra.mxu0 %v1658
      %1951 = vmatprep.subr.bf16.mxu0 0
      %1952 = vmatpush1.bf16.msra.mxu0 %v1659
      %1953 = vmatprep.subr.bf16.mxu0 0
      %1954 = vmatpush1.bf16.msra.mxu0 %v1660
      %1955 = vmatprep.subr.bf16.mxu0 0
      %1956 = vmatpush1.bf16.msra.mxu0 %v1661
      %1957 = vmatprep.subr.bf16.mxu0 0
      %1958 = vmatpush1.bf16.msra.mxu0 %v1662
      %1959 = vmatprep.subr.bf16.mxu0 0
      %1960 = vmatpush1.bf16.msra.mxu0 %v1663
      %1961 = vmatprep.subr.bf16.mxu0 0
      %1962 = vmatpush1.bf16.msra.mxu0 %v1664
      %1963 = vmatprep.subr.bf16.mxu0 0
      %1964 = vmatpush1.bf16.msra.mxu0 %v1665
      %1965 = vmatprep.subr.bf16.mxu0 0
      %1966 = vmatpush1.bf16.msra.mxu0 %v1666
      %1967 = vmatprep.subr.bf16.mxu0 0
      %1968 = vmatpush1.bf16.msra.mxu0 %v1667
      %1969 = vmatprep.subr.bf16.mxu0 0
      %1970 = vmatpush1.bf16.msra.mxu0 %v1668
      %1971 = vmatprep.subr.bf16.mxu0 0
      %1972 = vmatpush1.bf16.msra.mxu0 %v1669
      %1973 = vmatprep.subr.bf16.mxu0 0
      %1974 = vmatpush1.bf16.msra.mxu0 %v1670
      %1975 = vmatprep.subr.bf16.mxu0 0
      %1976 = vmatpush1.bf16.msra.mxu0 %v1671
      %1977 = vmatprep.subr.bf16.mxu0 0
      %1978 = vmatpush1.bf16.msra.mxu0 %v1672
      %1979 = vmatprep.subr.bf16.mxu0 0
      %1980 = vmatpush1.bf16.msra.mxu0 %v1673
      %1981 = vmatprep.mubr.bf16.mxu0 %v1257
      %1982 = vmatmul.mubr.bf16.gmra.mrb[0].mxu0 %v1256
      %v1983 = vpop.f32.mrb[0].mxu0
      %v1984 = vadd.f32 %v1919, %v1983
      %v1985 = vpop.f32.mrb[0].mxu0
      %v1986 = vpop.f32.mrb[0].mxu0
      %v1987 = vadd.f32 %v1922, %v1986
      %v1988 = vpop.f32.mrb[0].mxu0
      %1989 = vmatprep.mubr.bf16.mxu0 %v1266
      %1990 = vmatmul.mubr.bf16.gmra.mrb[0].mxu0 %v1265
      %v1991 = vpop.f32.mrb[0].mxu0
      %v1992 = vadd.f32 %v1927, %v1991
      %v1993 = vpop.f32.mrb[0].mxu0
      %v1994 = vpop.f32.mrb[0].mxu0
      %v1995 = vadd.f32 %v1930, %v1994
      %v1996 = vpop.f32.mrb[0].mxu0
      %1997 = vmatprep.mubr.bf16.mxu0 %v1275
      %1998 = vmatmul.mubr.bf16.gmra.mrb[0].mxu0 %v1274
      %v1999 = vpop.f32.mrb[0].mxu0
      %v2000 = vadd.f32 %v1935, %v1999
      %v2001 = vpop.f32.mrb[0].mxu0
      %v2002 = vpop.f32.mrb[0].mxu0
      %v2003 = vadd.f32 %v1938, %v2002
      %v2004 = vpop.f32.mrb[0].mxu0
      %2005 = vmatprep.mubr.bf16.mxu0 %v1284
      %2006 = vmatmul.mubr.bf16.gmra.mrb[0].mxu0 %v1283
      %v2007 = vpop.f32.mrb[0].mxu0
      %v2008 = vadd.f32 %v1943, %v2007
      %v2009 = vpop.f32.mrb[0].mxu0
      %v2010 = vpop.f32.mrb[0].mxu0
      %v2011 = vadd.f32 %v1946, %v2010
      %v2012 = vpop.f32.mrb[0].mxu0
      %2013 = vdwg.mxu0
      %2014 = vmatprep.subr.bf16.mxu0 0
      %2015 = vmatpush1.bf16.msra.mxu0 %v1674
      %2016 = vmatprep.subr.bf16.mxu0 0
      %2017 = vmatpush1.bf16.msra.mxu0 %v1675
      %2018 = vmatprep.subr.bf16.mxu0 0
      %2019 = vmatpush1.bf16.msra.mxu0 %v1676
      %2020 = vmatprep.subr.bf16.mxu0 0
      %2021 = vmatpush1.bf16.msra.mxu0 %v1677
      %2022 = vmatprep.subr.bf16.mxu0 0
      %2023 = vmatpush1.bf16.msra.mxu0 %v1678
      %2024 = vmatprep.subr.bf16.mxu0 0
      %2025 = vmatpush1.bf16.msra.mxu0 %v1679
      %2026 = vmatprep.subr.bf16.mxu0 0
      %2027 = vmatpush1.bf16.msra.mxu0 %v1680
      %2028 = vmatprep.subr.bf16.mxu0 0
      %2029 = vmatpush1.bf16.msra.mxu0 %v1681
      %2030 = vmatprep.subr.bf16.mxu0 0
      %2031 = vmatpush1.bf16.msra.mxu0 0
      %2032 = vmatprep.subr.bf16.mxu0 0
      %2033 = vmatpush1.bf16.msra.mxu0 0
      %2034 = vmatprep.subr.bf16.mxu0 0
      %2035 = vmatpush1.bf16.msra.mxu0 0
      %2036 = vmatprep.subr.bf16.mxu0 0
      %2037 = vmatpush1.bf16.msra.mxu0 0
      %2038 = vmatprep.subr.bf16.mxu0 0
      %2039 = vmatpush1.bf16.msra.mxu0 0
      %2040 = vmatprep.subr.bf16.mxu0 0
      %2041 = vmatpush1.bf16.msra.mxu0 0
      %2042 = vmatprep.subr.bf16.mxu0 0
      %2043 = vmatpush1.bf16.msra.mxu0 0
      %2044 = vmatprep.subr.bf16.mxu0 0
      %2045 = vmatpush1.bf16.msra.mxu0 0
      %2046 = vmatprep.mubr.bf16.mxu0 0
      %2047 = vmatmul.mubr.bf16.gmra.mrb[0].mxu0 %v1258
      %v2048 = vpop.f32.mrb[0].mxu0
      %v2049 = vadd.f32 %v1984, %v2048
      %v2050 = vpop.f32.mrb[0].mxu0
      %v2051 = vpop.f32.mrb[0].mxu0
      %v2052 = vadd.f32 %v1987, %v2051
      %v2053 = vpop.f32.mrb[0].mxu0
      %2054 = vmatprep.mubr.bf16.mxu0 0
      %2055 = vmatmul.mubr.bf16.gmra.mrb[0].mxu0 %v1267
      %v2056 = vpop.f32.mrb[0].mxu0
      %v2057 = vadd.f32 %v1992, %v2056
      %v2058 = vpop.f32.mrb[0].mxu0
      %v2059 = vpop.f32.mrb[0].mxu0
      %v2060 = vadd.f32 %v1995, %v2059
      %v2061 = vpop.f32.mrb[0].mxu0
      %2062 = vmatprep.mubr.bf16.mxu0 0
      %2063 = vmatmul.mubr.bf16.gmra.mrb[0].mxu0 %v1276
      %v2064 = vpop.f32.mrb[0].mxu0
      %v2065 = vadd.f32 %v2000, %v2064
      %v2066 = vpop.f32.mrb[0].mxu0
      %v2067 = vpop.f32.mrb[0].mxu0
      %v2068 = vadd.f32 %v2003, %v2067
      %v2069 = vpop.f32.mrb[0].mxu0
      %2070 = vmatprep.mubr.bf16.mxu0 0
      %2071 = vmatmul.mubr.bf16.gmra.mrb[0].mxu0 %v1285
      %v2072 = vpop.f32.mrb[0].mxu0
      %v2073 = vadd.f32 %v2008, %v2072
      %v2074 = vpop.f32.mrb[0].mxu0
      %v2075 = vpop.f32.mrb[0].mxu0
      %v2076 = vadd.f32 %v2011, %v2075
      %v2077 = vpop.f32.mrb[0].mxu0
      %2078 = vdwg.mxu0
      %v2079 = vld [vmem:[%s212] sm:$0xf]
      %v2080 = vld [vmem:[%s212 + $0x4] sm:$0xf]
      %v2081 = vld [vmem:[%s212 + $0x8] sm:$0xf]
      %v2082 = vld [vmem:[%s212 + $0xc] sm:$0xf]
      %v2083 = vld [vmem:[%s212 + $0x10] sm:$0xf]
      %v2084 = vld [vmem:[%s212 + $0x14] sm:$0xf]
      %v2085 = vld [vmem:[%s212 + $0x18] sm:$0xf]
      %v2086 = vld [vmem:[%s212 + $0x1c] sm:$0xf]
      %v2087 = vunpack.c.l.bf16 %v2079
      %v2088 = vunpack.c.l.bf16 %v2080
      %v2089 = vunpack.c.l.bf16 %v2081
      %v2090 = vunpack.c.l.bf16 %v2082
      %v2091 = vunpack.c.l.bf16 %v2083
      %v2092 = vunpack.c.l.bf16 %v2084
      %v2093 = vunpack.c.l.bf16 %v2085
      %v2094 = vunpack.c.l.bf16 %v2086
      %v2095 = vadd.f32 %v2049, %v2087
      %v2096 = vadd.f32 %v2052, %v2088
      %v2097 = vadd.f32 %v2057, %v2089
      %v2098 = vadd.f32 %v2060, %v2090
      %v2099 = vadd.f32 %v2065, %v2091
      %v2100 = vadd.f32 %v2068, %v2092
      %v2101 = vadd.f32 %v2073, %v2093
      %v2102 = vadd.f32 %v2076, %v2094
      %v2103 = vmax.f32 %v2095, 0.0
      %v2104 = vmax.f32 %v2096, 0.0
      %v2105 = vmax.f32 %v2097, 0.0
      %v2106 = vmax.f32 %v2098, 0.0
      %v2107 = vmax.f32 %v2099, 0.0
      %v2108 = vmax.f32 %v2100, 0.0
      %v2109 = vmax.f32 %v2101, 0.0
      %v2110 = vmax.f32 %v2102, 0.0
      %v2111 = vpack.c.bf16 %v2104, %v2103
      %v2112 = vpack.c.bf16 %v2106, %v2105
      %v2113 = vpack.c.bf16 %v2108, %v2107
      %v2114 = vpack.c.bf16 %v2110, %v2109
      %v2119 = vunpack.c.l.b16 %v2111
      %v2120 = vunpack.c.h.b16 %v2111
      %v2121 = vunpack.c.l.b16 %v2112
      %v2122 = vunpack.c.h.b16 %v2112
      %v2123 = vunpack.c.l.b16 %v2113
      %v2124 = vunpack.c.h.b16 %v2113
      %v2125 = vunpack.c.l.b16 %v2114
      %v2126 = vunpack.c.h.b16 %v2114
      %v2127 = vpack.c.b16 %v2119, %v2119
      %v2128 = vpack.c.b16 %v2120, %v2120
      %v2129 = vpack.c.b16 %v2121, %v2121
      %v2130 = vpack.c.b16 %v2122, %v2122
      %v2131 = vpack.c.b16 %v2123, %v2123
      %v2132 = vpack.c.b16 %v2124, %v2124
      %v2133 = vpack.c.b16 %v2125, %v2125
      %v2134 = vpack.c.b16 %v2126, %v2126
      %2143 = vst [vmem:[%s217] sm:$0xf] %v2127
      %2144 = vst [vmem:[%s217 + $0x4] sm:$0xf] %v2128
      %2145 = vst [vmem:[%s217 + $0x8] sm:$0xf] %v2129
      %2146 = vst [vmem:[%s217 + $0xc] sm:$0xf] %v2130
      %2147 = vst [vmem:[%s217 + $0x10] sm:$0xf] %v2131
      %2148 = vst [vmem:[%s217 + $0x14] sm:$0xf] %v2132
      %2149 = vst [vmem:[%s217 + $0x18] sm:$0xf] %v2133
      %2150 = vst [vmem:[%s217 + $0x1c] sm:$0xf] %v2134
      %p2151 = scmp.lt.s32.totalorder %s15, 1
      %s2152 = scalar_select %p2151, %s15, 1
      %s2153 = smul.addr %s2152, 8
      %s2154 = smul.addr %s2153, 4
      %s2155 = scalar_lea.vmem %s4, %s2154
      // Predicated region
      $region37: #{_unnamed_function_.5} parent=35 // pred_check
        %p2156 = pneg %p127
      $region38: #{_unnamed_function_.5} parent=35 // pred_check_branch
        %2158 = sbr.rel (%p2156) target = $region40
      $region39: #{_unnamed_function_.5} parent=35 // pred_region
        _
      $region40: #{_unnamed_function_.5} parent=35 // pred_fallthru
        _
    $region36: #{_unnamed_function_.5} parent=5 // pred_fallthru
      _
    %p2159 = scmp.le.s32.totalorder 2, %s10
    // Predicated region
    $region41: #{_unnamed_function_.5} parent=5 // pred_check
      %p2160 = pneg %p2159
    $region42: #{_unnamed_function_.5} parent=5 // pred_check_branch
      %2162 = sbr.rel (%p2160) target = $region44
    $region43: #{_unnamed_function_.5} parent=5 // pred_region
      %s2163 = ssub.s32 %s10, 2
      // Predicated region
      $region45: #{_unnamed_function_.5} parent=43 // pred_check
        %p2164 = pneg %p133
      $region46: #{_unnamed_function_.5} parent=43 // pred_check_branch
        %2166 = sbr.rel (%p2164) target = $region48
      $region47: #{_unnamed_function_.5} parent=43 // pred_region
        %p2167 = scmp.lt.s32.totalorder %s16, 1
        %s2168 = scalar_select %p2167, %s16, 1
        %s2169 = smul.addr %s2168, 8
        %s2170 = smul.addr %s2169, 4
        %s2171 = scalar_lea.vmem %s4, %s2170
      $region48: #{_unnamed_function_.5} parent=43 // pred_fallthru
        _
    $region44: #{_unnamed_function_.5} parent=5 // pred_fallthru
      _
  $region6: #{_unnamed_function_.5} parent=0 // loop_footer
    %s14 = sadd.s32 1, %s10
  $region7: #{_unnamed_function_.5} parent=0 // loop_footer_branch
    %9 = sbr.rel target = $region3
  $region8: #{_unnamed_function_.5} parent=0 // loop_exit
    _

</llo_original>
